<compile_context>
chip_gen: v5e
topology: v5e:2x2
jax: 0.10.0
libtpu: 0.0.40
codegen_flags: <defaults>
</compile_context>

<pallas_src>
import math

import jax
import jax.numpy as jnp
import numpy as np
from jax.experimental import pallas as pl
from jax.experimental.pallas import tpu as pltpu

EPS = 1e-5
F32 = jnp.float32

# ----- KAN spline constants (efficient-KAN defaults) -----
GRID_SIZE = 5
SPLINE_ORDER = 3
GRID_RANGE = (-1.0, 1.0)
_H = (GRID_RANGE[1] - GRID_RANGE[0]) / GRID_SIZE
KNOTS = tuple(GRID_RANGE[0] + (j - SPLINE_ORDER) * _H
              for j in range(GRID_SIZE + 2 * SPLINE_ORDER + 1))      # 12 uniform knots
N_COEF = GRID_SIZE + SPLINE_ORDER                                     # 8 B-spline coefficients


def _pad8(n):
    return ((n + 7) // 8) * 8


# --------------------------- static TCN structure ---------------------------

def tcn_structure(seq_len, pred_len):
    n_filters, ksize, dbase = 3, 3, 2
    num_layers = math.ceil(math.log(
        (seq_len - 1) * (dbase - 1) / (ksize - 1) / 2 + 1, dbase))
    target = pred_len // 2
    blocks = []
    for i in range(num_layers):
        input_dim = seq_len if i == 0 else n_filters
        output_dim = target if i == num_layers - 1 else n_filters
        blocks.append(dict(
            dilation=dbase ** i,
            ksize=ksize,
            input_dim=input_dim,
            output_dim=output_dim,
            cin_pad=seq_len if i == 0 else _pad8(n_filters),
            mid_pad=_pad8(n_filters),
            cout_pad=_pad8(output_dim),
            has_conv3=input_dim != output_dim,
            is_last=i == num_layers - 1,
        ))
    return blocks, n_filters, ksize


# ------------------------------ parameters ---------------------------------

def init_params(key, seq_len, pred_len, enc_in):
    blocks, n_filters, ksize = tcn_structure(seq_len, pred_len)
    keys = iter(jax.random.split(key, 8 * len(blocks) + 16))

    def nrm(shape, scale=0.1):
        return scale * jax.random.normal(next(keys), shape, dtype=F32)

    block_params = []
    for blk in blocks:
        p = {
            'w1': nrm((n_filters, blk['input_dim'], ksize)),
            'b1': nrm((n_filters,)),
            'w2': nrm((blk['output_dim'], n_filters, ksize)),
            'b2': nrm((blk['output_dim'],)),
        }
        if blk['has_conv3']:
            p['w3'] = nrm((blk['output_dim'], blk['input_dim'], 1))
            p['b3'] = nrm((blk['output_dim'],))
        block_params.append(p)

    target = pred_len // 2
    layers_hidden = [target, 10, pred_len]
    kan_params = []
    for in_f, out_f in zip(layers_hidden[:-1], layers_hidden[1:]):
        kan_params.append({
            'base_weight': nrm((out_f, in_f), 0.3),
            'spline_weight': nrm((out_f, in_f, N_COEF), 0.3),
            'spline_scaler': 1.0 + nrm((out_f, in_f), 0.1),
        })

    return {
        'rev_w': jnp.ones((enc_in,), F32),
        'rev_b': jnp.zeros((enc_in,), F32),
        'blocks': block_params,
        'kan': kan_params,
    }


# --------------------- one-time host-side weight packing --------------------

def _pack_conv(w, b, cin_pad, cout_pad):
    """torch Conv1d weight (Cout, Cin, K) -> (Cout_pad, K*Cin_pad) so one dot with the
    (K*Cin_pad, L) stacked-causal-tap tile evaluates the whole dilated conv."""
    w = np.asarray(w, np.float32)
    b = np.asarray(b, np.float32)
    Cout, Cin, K = w.shape
    wp = np.zeros((cout_pad, K, cin_pad), np.float32)
    wp[:Cout, :, :Cin] = np.transpose(w, (0, 2, 1))          # [co, k, ci] = w[co, ci, k]
    bp = np.zeros((cout_pad, 1), np.float32)
    bp[:Cout, 0] = b
    return jnp.asarray(wp.reshape(cout_pad, K * cin_pad)), jnp.asarray(bp)


def _pack_kan(base_w, spline_w, spline_scaler, in_pad, out_pad):
    """Concatenate [base | spline_0 .. spline_7] over input features into one
    (out_pad, (1+N_COEF)*in_pad) matrix -> a single MXU matmul per KAN layer."""
    base_w = np.asarray(base_w, np.float32)
    sw = np.asarray(spline_w, np.float32) * np.asarray(spline_scaler, np.float32)[:, :, None]
    out_f, in_f = base_w.shape
    W = np.zeros((out_pad, (1 + N_COEF) * in_pad), np.float32)
    W[:out_f, :in_f] = base_w
    for j in range(N_COEF):
        c0 = (1 + j) * in_pad
        W[:out_f, c0:c0 + in_f] = sw[:, :, j]
    return jnp.asarray(W)


def prepare_params(params, seq_len, pred_len, enc_in):
    blocks, _, _ = tcn_structure(seq_len, pred_len)
    weights = []
    for blk, p in zip(blocks, params['blocks']):
        w1, b1 = _pack_conv(p['w1'], p['b1'], blk['cin_pad'], blk['mid_pad'])
        w2, b2 = _pack_conv(p['w2'], p['b2'], blk['mid_pad'], blk['cout_pad'])
        weights += [w1, b1, w2, b2]
        if blk['has_conv3']:
            w3, b3 = _pack_conv(p['w3'], p['b3'], blk['cin_pad'], blk['cout_pad'])
            weights += [w3, b3]

    in1_pad = blocks[-1]['cout_pad']          # rows of the TCN output tile
    out1_pad = _pad8(10)
    out2_pad = _pad8(pred_len)
    k1, k2 = params['kan']
    weights.append(_pack_kan(k1['base_weight'], k1['spline_weight'], k1['spline_scaler'],
                             in1_pad, out1_pad))
    weights.append(_pack_kan(k2['base_weight'], k2['spline_weight'], k2['spline_scaler'],
                             out1_pad, out2_pad))

    return {
        'rev_w': jnp.asarray(params['rev_w'], F32).reshape(1, enc_in),
        'rev_b': jnp.asarray(params['rev_b'], F32).reshape(1, enc_in),
        'weights': weights,
        'blocks': blocks,
        'pred_len': pred_len,
        'enc_in': enc_in,
    }


# ------------------------------ fused kernel --------------------------------

def _kan_apply(z, w):
    """z: (in_pad, n_lanes) transposed KAN input. Returns w @ [SiLU(z); B_0(z); ...]."""
    feats = [z * jax.nn.sigmoid(z)]                                    # SiLU base path
    bases = [jnp.where((z >= KNOTS[j]) & (z < KNOTS[j + 1]), 1.0, 0.0).astype(F32)
             for j in range(len(KNOTS) - 1)]
    for k in range(1, SPLINE_ORDER + 1):                               # Cox-de-Boor
        nxt = []
        for j in range(len(bases) - 1):
            left = (z - KNOTS[j]) / (KNOTS[j + k] - KNOTS[j]) * bases[j]
            right = (KNOTS[j + k + 1] - z) / (KNOTS[j + k + 1] - KNOTS[j + 1]) * bases[j + 1]
            nxt.append(left + right)
        bases = nxt
    f = jnp.concatenate(feats + bases, axis=0)                         # ((1+N_COEF)*in_pad, n_lanes)
    return jnp.dot(w, f, preferred_element_type=F32)


def _make_fused_kernel(blocks, pred_len, enc_in):

    def kernel(x_ref, rw_ref, rb_ref, pos_ref, *rest):
        o_ref = rest[-1]
        wrefs = rest[:-1]

        # ---- RevIN 'norm' (stats over the seq axis; one lane = one (batch, feature)) ----
        x = x_ref[...]                                     # (seq_len, batch_tile*enc_in)
        mean = jnp.mean(x, axis=0, keepdims=True)          # (1, n_lanes)
        var = jnp.mean((x - mean) ** 2, axis=0, keepdims=True)
        std = jnp.sqrt(var + EPS)
        rw = rw_ref[...]
        rb = rb_ref[...]
        h = (x - mean) / std * rw + rb                     # conv input: channels x lanes

        pos = pos_ref[...]                                 # (1, n_lanes) within-batch position
        mask_cache = {}

        def causal_mask(s):                                # cached float mask per shift
            if s not in mask_cache:
                mask_cache[s] = (pos >= s).astype(F32)
            return mask_cache[s]

        def shifted(v, s):
            # tap[:, t] = v[:, t-s] within the same batch element; zero where pos < s.
            if s == 0:
                return v
            if s >= enc_in:
                return jnp.zeros_like(v)
            return pltpu.roll(v, s, 1) * causal_mask(s)

        def conv(v, w_ref, b_ref, K, d, relu):
            # single MXU matmul: (Cout_pad, K*Cin_pad) @ (K*Cin_pad, n_lanes)
            if K == 1:
                taps = v
            else:
                taps = jnp.concatenate(
                    [shifted(v, (K - 1 - k) * d) for k in range(K)], axis=0)
            out = jnp.dot(w_ref[...], taps, preferred_element_type=F32) + b_ref[...]
            return jnp.maximum(out, 0.0) if relu else out

        # ---- TCN residual blocks (dropout = identity at inference) ----
        wi = 0
        for blk in blocks:
            K, d = blk['ksize'], blk['dilation']
            if blk['has_conv3']:
                w1, b1, w2, b2, w3, b3 = wrefs[wi:wi + 6]
                wi += 6
            else:
                w1, b1, w2, b2 = wrefs[wi:wi + 4]
                wi += 4
                w3 = b3 = None
            res = h
            a = conv(h, w1, b1, K, d, relu=True)
            a = conv(a, w2, b2, K, d, relu=not blk['is_last'])
            if w3 is not None:
                res = conv(res, w3, b3, 1, 1, relu=False)
            h = a + res                                    # (cout_pad, n_lanes)

        # ---- KAN (transposed: features on sublanes, (batch, enc_in) positions on lanes) ----
        h = _kan_apply(h, wrefs[wi][...])                  # (out1_pad, n_lanes)
        h = _kan_apply(h, wrefs[wi + 1][...])              # (out2_pad, n_lanes)
        if h.shape[0] != pred_len:
            h = h[:pred_len, :]

        # ---- RevIN 'denorm' ----  (already in (pred_len, n_lanes) layout)
        y = (h - rb) / (rw + EPS * EPS)
        y = y * std + mean
        o_ref[...] = y.astype(o_ref.dtype)

    return kernel


def _pick_batch_tile(B, C, max_lanes=2048):
    """Largest batch tile bt such that bt | B and the lane block (bt*C) is either the whole
    lane axis or a multiple of 128 (so the BlockSpec tiling constraint always holds)."""
    cands = [bt for bt in range(1, B + 1)
             if B % bt == 0 and (bt == B or (bt * C) % 128 == 0) and bt * C <= max_lanes]
    return max(cands) if cands else B


def model_forward(prep, x_in, x_mark=None, y_true=None, y_mark=None):
    B, L, C = x_in.shape
    P = prep['pred_len']
    bt = _pick_batch_tile(B, C)
    n_lanes = bt * C

    # Host-side layout plumbing (tiny XLA ops): pack (batch, feature) along lanes.
    x_t = jnp.transpose(x_in, (1, 0, 2)).reshape(L, B * C)          # (seq_len, B*enc_in)
    rw = jnp.tile(prep['rev_w'], (1, bt))                            # (1, n_lanes)
    rb = jnp.tile(prep['rev_b'], (1, bt))
    pos = jnp.tile(jnp.arange(C, dtype=jnp.int32)[None, :], (1, bt))  # within-batch lane pos

    kernel = _make_fused_kernel(prep['blocks'], P, C)
    const2d = lambda g: (0, 0)
    in_specs = [
        pl.BlockSpec((L, n_lanes), lambda g: (0, g)),
        pl.BlockSpec((1, n_lanes), const2d),
        pl.BlockSpec((1, n_lanes), const2d),
        pl.BlockSpec((1, n_lanes), const2d),
    ] + [pl.BlockSpec(w.shape, const2d) for w in prep['weights']]

    out = pl.pallas_call(
        kernel,
        grid=(B // bt,),
        in_specs=in_specs,
        out_specs=pl.BlockSpec((P, n_lanes), lambda g: (0, g)),
        out_shape=jax.ShapeDtypeStruct((P, B * C), x_in.dtype),
        compiler_params=pltpu.CompilerParams(dimension_semantics=("parallel",)),
    )(x_t, rw, rb, pos, *prep['weights'])

    return jnp.transpose(out.reshape(P, B, C), (1, 0, 2))            # (B, pred_len, enc_in)


# --------------------------- pure-JAX reference ------------------------------

def _ref_conv(v, w, b, d):
    # v: (B, Cin, L) ; w: (Cout, Cin, K) ; causal dilated conv (left pad d*(K-1)).
    Cout, Cin, K = w.shape
    L = v.shape[-1]
    out = jnp.zeros((v.shape[0], Cout, L), F32)
    for k in range(K):
        s = (K - 1 - k) * d
        if s == 0:
            tap = v
        elif s >= L:
            tap = jnp.zeros_like(v)
        else:
            tap = jnp.pad(v, ((0, 0), (0, 0), (s, 0)))[:, :, :L]
        out = out + jnp.einsum('bcl,oc->bol', tap, w[:, :, k])
    return out + b[None, :, None]


def _ref_kan_layer(z, p):
    knots = jnp.asarray(KNOTS, F32)
    base = jax.nn.silu(z) @ jnp.asarray(p['base_weight']).T
    zb = z[..., None]
    bases = ((zb >= knots[:-1]) & (zb < knots[1:])).astype(F32)
    for k in range(1, SPLINE_ORDER + 1):
        left = (zb - knots[:-(k + 1)]) / (knots[k:-1] - knots[:-(k + 1)]) * bases[..., :-1]
        right = (knots[k + 1:] - zb) / (knots[k + 1:] - knots[1:-k]) * bases[..., 1:]
        bases = left + right
    sw = jnp.asarray(p['spline_weight']) * jnp.asarray(p['spline_scaler'])[..., None]
    return base + jnp.einsum('...ic,oic->...o', bases, sw)


def reference_forward(params, x_in, seq_len, pred_len, enc_in):
    blocks, _, _ = tcn_structure(seq_len, pred_len)
    mean = jnp.mean(x_in, axis=1, keepdims=True)
    var = jnp.mean((x_in - mean) ** 2, axis=1, keepdims=True)
    std = jnp.sqrt(var + EPS)
    h = (x_in - mean) / std * params['rev_w'] + params['rev_b']       # (B, seq_len, enc_in)
    for blk, p in zip(blocks, params['blocks']):                      # Conv1d: dim1=channels
        res = h
        a = jax.nn.relu(_ref_conv(h, p['w1'], p['b1'], blk['dilation']))
        a = _ref_conv(a, p['w2'], p['b2'], blk['dilation'])
        if not blk['is_last']:
            a = jax.nn.relu(a)
        if blk['has_conv3']:
            res = _ref_conv(res, p['w3'], p['b3'], 1)
        h = a + res
    z = jnp.transpose(h, (0, 2, 1))                                    # (B, enc_in, target)
    for kp in params['kan']:
        z = _ref_kan_layer(z, kp)
    y = jnp.transpose(z, (0, 2, 1))                                    # (B, pred_len, enc_in)
    y = (y - params['rev_b']) / (params['rev_w'] + EPS * EPS)
    return y * std + mean


if __name__ == "__main__":
    B, seq_len, pred_len, enc_in = 2, 16, 16, 8
    key = jax.random.PRNGKey(0)
    kx, kp = jax.random.split(key)

    x_in = jax.random.normal(kx, (B, seq_len, enc_in), dtype=F32)
    x_mark = jnp.zeros((B, seq_len, 4), F32)   # unused by the torch forward
    y_true = jnp.zeros((B, pred_len, enc_in), F32)
    y_mark = jnp.zeros((B, pred_len, 4), F32)

    params = init_params(kp, seq_len, pred_len, enc_in)
    prep = prepare_params(params, seq_len, pred_len, enc_in)   # one-time weight packing

    out = model_forward(prep, x_in, x_mark, y_true, y_mark)
    out = jax.block_until_ready(out)
    assert out.shape == (B, pred_len, enc_in), out.shape
    assert bool(jnp.all(jnp.isfinite(out)))

    ref = jax.block_until_ready(reference_forward(params, x_in, seq_len, pred_len, enc_in))
    err = float(jnp.max(jnp.abs(out - ref)))
    assert err < 1e-2, f"mismatch vs pure-JAX reference: max abs err {err}"

    print("KERNEL_OK")
</pallas_src>

<mosaic_0001>
module attributes {stable_mosaic.version = 11 : i64} {
  func.func @kernel(%arg0: i32, %arg1: memref<16x16xf32, #tpu.memory_space<vmem>>, %arg2: memref<1x16xf32, #tpu.memory_space<vmem>>, %arg3: memref<1x16xf32, #tpu.memory_space<vmem>>, %arg4: memref<1x16xi32, #tpu.memory_space<vmem>>, %arg5: memref<8x48xf32, #tpu.memory_space<vmem>>, %arg6: memref<8x1xf32, #tpu.memory_space<vmem>>, %arg7: memref<8x24xf32, #tpu.memory_space<vmem>>, %arg8: memref<8x1xf32, #tpu.memory_space<vmem>>, %arg9: memref<8x16xf32, #tpu.memory_space<vmem>>, %arg10: memref<8x1xf32, #tpu.memory_space<vmem>>, %arg11: memref<8x24xf32, #tpu.memory_space<vmem>>, %arg12: memref<8x1xf32, #tpu.memory_space<vmem>>, %arg13: memref<8x24xf32, #tpu.memory_space<vmem>>, %arg14: memref<8x1xf32, #tpu.memory_space<vmem>>, %arg15: memref<8x24xf32, #tpu.memory_space<vmem>>, %arg16: memref<8x1xf32, #tpu.memory_space<vmem>>, %arg17: memref<8x24xf32, #tpu.memory_space<vmem>>, %arg18: memref<8x1xf32, #tpu.memory_space<vmem>>, %arg19: memref<8x8xf32, #tpu.memory_space<vmem>>, %arg20: memref<8x1xf32, #tpu.memory_space<vmem>>, %arg21: memref<16x72xf32, #tpu.memory_space<vmem>>, %arg22: memref<16x144xf32, #tpu.memory_space<vmem>>, %arg23: memref<16x16xf32, #tpu.memory_space<vmem>>) attributes {dimension_semantics = [#tpu.dimension_semantics<parallel>], iteration_bounds = array<i64: 1>, scalar_prefetch = 0 : i64, scratch_operands = 0 : i64, tpu.core_type = #tpu.core_type<tc>, window_params = [{transform_indices = @transform_0, window_bounds = array<i64: 16, 16>}, {pipeline_mode = #tpu.pipeline_mode<synchronous>, transform_indices = @transform_1, window_bounds = array<i64: 1, 16>}, {pipeline_mode = #tpu.pipeline_mode<synchronous>, transform_indices = @transform_2, window_bounds = array<i64: 1, 16>}, {pipeline_mode = #tpu.pipeline_mode<synchronous>, transform_indices = @transform_3, window_bounds = array<i64: 1, 16>}, {pipeline_mode = #tpu.pipeline_mode<synchronous>, transform_indices = @transform_4, window_bounds = array<i64: 8, 48>}, {pipeline_mode = #tpu.pipeline_mode<synchronous>, transform_indices = @transform_5, window_bounds = array<i64: 8, 1>}, {pipeline_mode = #tpu.pipeline_mode<synchronous>, transform_indices = @transform_6, window_bounds = array<i64: 8, 24>}, {pipeline_mode = #tpu.pipeline_mode<synchronous>, transform_indices = @transform_7, window_bounds = array<i64: 8, 1>}, {pipeline_mode = #tpu.pipeline_mode<synchronous>, transform_indices = @transform_8, window_bounds = array<i64: 8, 16>}, {pipeline_mode = #tpu.pipeline_mode<synchronous>, transform_indices = @transform_9, window_bounds = array<i64: 8, 1>}, {pipeline_mode = #tpu.pipeline_mode<synchronous>, transform_indices = @transform_10, window_bounds = array<i64: 8, 24>}, {pipeline_mode = #tpu.pipeline_mode<synchronous>, transform_indices = @transform_11, window_bounds = array<i64: 8, 1>}, {pipeline_mode = #tpu.pipeline_mode<synchronous>, transform_indices = @transform_12, window_bounds = array<i64: 8, 24>}, {pipeline_mode = #tpu.pipeline_mode<synchronous>, transform_indices = @transform_13, window_bounds = array<i64: 8, 1>}, {pipeline_mode = #tpu.pipeline_mode<synchronous>, transform_indices = @transform_14, window_bounds = array<i64: 8, 24>}, {pipeline_mode = #tpu.pipeline_mode<synchronous>, transform_indices = @transform_15, window_bounds = array<i64: 8, 1>}, {pipeline_mode = #tpu.pipeline_mode<synchronous>, transform_indices = @transform_16, window_bounds = array<i64: 8, 24>}, {pipeline_mode = #tpu.pipeline_mode<synchronous>, transform_indices = @transform_17, window_bounds = array<i64: 8, 1>}, {pipeline_mode = #tpu.pipeline_mode<synchronous>, transform_indices = @transform_18, window_bounds = array<i64: 8, 8>}, {pipeline_mode = #tpu.pipeline_mode<synchronous>, transform_indices = @transform_19, window_bounds = array<i64: 8, 1>}, {pipeline_mode = #tpu.pipeline_mode<synchronous>, transform_indices = @transform_20, window_bounds = array<i64: 16, 72>}, {pipeline_mode = #tpu.pipeline_mode<synchronous>, transform_indices = @transform_21, window_bounds = array<i64: 16, 144>}, {transform_indices = @transform_22, window_bounds = array<i64: 16, 16>}]} {
    %c0 = arith.constant 0 : index
    %c0_0 = arith.constant 0 : index
    %0 = vector.load %arg1[%c0, %c0_0] : memref<16x16xf32, #tpu.memory_space<vmem>>, vector<16x16xf32>
    %cst = arith.constant dense<0.000000e+00> : vector<16xf32>
    %1 = vector.multi_reduction <add>, %0, %cst [0] : vector<16x16xf32> to vector<16xf32>
    %2 = vector.shape_cast %1 : vector<16xf32> to vector<1x16xf32>
    %cst_1 = arith.constant 1.600000e+01 : f32
    %3 = vector.broadcast %cst_1 : f32 to vector<1x16xf32>
    %4 = arith.divf %2, %3 : vector<1x16xf32>
    %5 = vector.broadcast %4 : vector<1x16xf32> to vector<16x16xf32>
    %6 = arith.subf %0, %5 : vector<16x16xf32>
    %7 = arith.mulf %6, %6 : vector<16x16xf32>
    %cst_2 = arith.constant dense<0.000000e+00> : vector<16xf32>
    %8 = vector.multi_reduction <add>, %7, %cst_2 [0] : vector<16x16xf32> to vector<16xf32>
    %9 = vector.shape_cast %8 : vector<16xf32> to vector<1x16xf32>
    %cst_3 = arith.constant 1.600000e+01 : f32
    %10 = vector.broadcast %cst_3 : f32 to vector<1x16xf32>
    %11 = arith.divf %9, %10 : vector<1x16xf32>
    %cst_4 = arith.constant 9.99999974E-6 : f32
    %12 = vector.broadcast %cst_4 : f32 to vector<1x16xf32>
    %13 = arith.addf %11, %12 : vector<1x16xf32>
    %14 = math.sqrt %13 : vector<1x16xf32>
    %c0_5 = arith.constant 0 : index
    %c0_6 = arith.constant 0 : index
    %15 = vector.load %arg2[%c0_5, %c0_6] : memref<1x16xf32, #tpu.memory_space<vmem>>, vector<1x16xf32>
    %c0_7 = arith.constant 0 : index
    %c0_8 = arith.constant 0 : index
    %16 = vector.load %arg3[%c0_7, %c0_8] : memref<1x16xf32, #tpu.memory_space<vmem>>, vector<1x16xf32>
    %17 = vector.broadcast %4 : vector<1x16xf32> to vector<16x16xf32>
    %18 = arith.subf %0, %17 : vector<16x16xf32>
    %19 = vector.broadcast %14 : vector<1x16xf32> to vector<16x16xf32>
    %20 = arith.divf %18, %19 : vector<16x16xf32>
    %21 = vector.broadcast %15 : vector<1x16xf32> to vector<16x16xf32>
    %22 = arith.mulf %20, %21 : vector<16x16xf32>
    %23 = vector.broadcast %16 : vector<1x16xf32> to vector<16x16xf32>
    %24 = arith.addf %22, %23 : vector<16x16xf32>
    %c0_9 = arith.constant 0 : index
    %c0_10 = arith.constant 0 : index
    %25 = vector.load %arg4[%c0_9, %c0_10] : memref<1x16xi32, #tpu.memory_space<vmem>>, vector<1x16xi32>
    %c2_i32 = arith.constant 2 : i32
    %26 = tpu.dynamic_rotate %24 by %c2_i32 dim 1 : vector<16x16xf32>, i32 -> vector<16x16xf32>
    %c2_i32_11 = arith.constant 2 : i32
    %27 = vector.broadcast %c2_i32_11 : i32 to vector<1x16xi32>
    %28 = arith.cmpi sge, %25, %27 : vector<1x16xi32>
    %29 = arith.extui %28 : vector<1x16xi1> to vector<1x16xi32>
    %30 = arith.sitofp %29 : vector<1x16xi32> to vector<1x16xf32>
    %31 = vector.broadcast %30 : vector<1x16xf32> to vector<16x16xf32>
    %32 = arith.mulf %26, %31 : vector<16x16xf32>
    %c1_i32 = arith.constant 1 : i32
    %33 = tpu.dynamic_rotate %24 by %c1_i32 dim 1 : vector<16x16xf32>, i32 -> vector<16x16xf32>
    %c1_i32_12 = arith.constant 1 : i32
    %34 = vector.broadcast %c1_i32_12 : i32 to vector<1x16xi32>
    %35 = arith.cmpi sge, %25, %34 : vector<1x16xi32>
    %36 = arith.extui %35 : vector<1x16xi1> to vector<1x16xi32>
    %37 = arith.sitofp %36 : vector<1x16xi32> to vector<1x16xf32>
    %38 = vector.broadcast %37 : vector<1x16xf32> to vector<16x16xf32>
    %39 = arith.mulf %33, %38 : vector<16x16xf32>
    %40 = tpu.concatenate %32, %39, %24 in 0 : vector<16x16xf32>, vector<16x16xf32>, vector<16x16xf32> -> vector<48x16xf32>
    %c0_13 = arith.constant 0 : index
    %c0_14 = arith.constant 0 : index
    %41 = vector.load %arg5[%c0_13, %c0_14] : memref<8x48xf32, #tpu.memory_space<vmem>>, vector<8x48xf32>
    %cst_15 = arith.constant dense<0.000000e+00> : vector<8x16xf32>
    %42 = tpu.matmul %41, %40, %cst_15 {dimension_numbers = #tpu.dot_dimension_numbers<[1], [0], [0], [1], [0, 0, 1, 1], [], []>} : vector<8x48xf32>, vector<48x16xf32>, vector<8x16xf32> -> vector<8x16xf32>
    %c0_16 = arith.constant 0 : index
    %c0_17 = arith.constant 0 : index
    %43 = vector.load %arg6[%c0_16, %c0_17] : memref<8x1xf32, #tpu.memory_space<vmem>>, vector<8x1xf32>
    %44 = vector.broadcast %43 : vector<8x1xf32> to vector<8x16xf32>
    %45 = arith.addf %42, %44 : vector<8x16xf32>
    %cst_18 = arith.constant 0.000000e+00 : f32
    %46 = vector.broadcast %cst_18 : f32 to vector<8x16xf32>
    %47 = arith.maximumf %45, %46 : vector<8x16xf32>
    %c2_i32_19 = arith.constant 2 : i32
    %48 = tpu.dynamic_rotate %47 by %c2_i32_19 dim 1 : vector<8x16xf32>, i32 -> vector<8x16xf32>
    %49 = vector.broadcast %30 : vector<1x16xf32> to vector<8x16xf32>
    %50 = arith.mulf %48, %49 : vector<8x16xf32>
    %c1_i32_20 = arith.constant 1 : i32
    %51 = tpu.dynamic_rotate %47 by %c1_i32_20 dim 1 : vector<8x16xf32>, i32 -> vector<8x16xf32>
    %52 = vector.broadcast %37 : vector<1x16xf32> to vector<8x16xf32>
    %53 = arith.mulf %51, %52 : vector<8x16xf32>
    %54 = tpu.concatenate %50, %53, %47 in 0 : vector<8x16xf32>, vector<8x16xf32>, vector<8x16xf32> -> vector<24x16xf32>
    %c0_21 = arith.constant 0 : index
    %c0_22 = arith.constant 0 : index
    %55 = vector.load %arg7[%c0_21, %c0_22] : memref<8x24xf32, #tpu.memory_space<vmem>>, vector<8x24xf32>
    %cst_23 = arith.constant dense<0.000000e+00> : vector<8x16xf32>
    %56 = tpu.matmul %55, %54, %cst_23 {dimension_numbers = #tpu.dot_dimension_numbers<[1], [0], [0], [1], [0, 0, 1, 1], [], []>} : vector<8x24xf32>, vector<24x16xf32>, vector<8x16xf32> -> vector<8x16xf32>
    %c0_24 = arith.constant 0 : index
    %c0_25 = arith.constant 0 : index
    %57 = vector.load %arg8[%c0_24, %c0_25] : memref<8x1xf32, #tpu.memory_space<vmem>>, vector<8x1xf32>
    %58 = vector.broadcast %57 : vector<8x1xf32> to vector<8x16xf32>
    %59 = arith.addf %56, %58 : vector<8x16xf32>
    %cst_26 = arith.constant 0.000000e+00 : f32
    %60 = vector.broadcast %cst_26 : f32 to vector<8x16xf32>
    %61 = arith.maximumf %59, %60 : vector<8x16xf32>
    %c0_27 = arith.constant 0 : index
    %c0_28 = arith.constant 0 : index
    %62 = vector.load %arg9[%c0_27, %c0_28] : memref<8x16xf32, #tpu.memory_space<vmem>>, vector<8x16xf32>
    %cst_29 = arith.constant dense<0.000000e+00> : vector<8x16xf32>
    %63 = tpu.matmul %62, %24, %cst_29 {dimension_numbers = #tpu.dot_dimension_numbers<[1], [0], [0], [1], [0, 0, 1, 1], [], []>} : vector<8x16xf32>, vector<16x16xf32>, vector<8x16xf32> -> vector<8x16xf32>
    %c0_30 = arith.constant 0 : index
    %c0_31 = arith.constant 0 : index
    %64 = vector.load %arg10[%c0_30, %c0_31] : memref<8x1xf32, #tpu.memory_space<vmem>>, vector<8x1xf32>
    %65 = vector.broadcast %64 : vector<8x1xf32> to vector<8x16xf32>
    %66 = arith.addf %63, %65 : vector<8x16xf32>
    %67 = arith.addf %61, %66 : vector<8x16xf32>
    %c4_i32 = arith.constant 4 : i32
    %68 = tpu.dynamic_rotate %67 by %c4_i32 dim 1 : vector<8x16xf32>, i32 -> vector<8x16xf32>
    %c4_i32_32 = arith.constant 4 : i32
    %69 = vector.broadcast %c4_i32_32 : i32 to vector<1x16xi32>
    %70 = arith.cmpi sge, %25, %69 : vector<1x16xi32>
    %71 = arith.extui %70 : vector<1x16xi1> to vector<1x16xi32>
    %72 = arith.sitofp %71 : vector<1x16xi32> to vector<1x16xf32>
    %73 = vector.broadcast %72 : vector<1x16xf32> to vector<8x16xf32>
    %74 = arith.mulf %68, %73 : vector<8x16xf32>
    %c2_i32_33 = arith.constant 2 : i32
    %75 = tpu.dynamic_rotate %67 by %c2_i32_33 dim 1 : vector<8x16xf32>, i32 -> vector<8x16xf32>
    %76 = vector.broadcast %30 : vector<1x16xf32> to vector<8x16xf32>
    %77 = arith.mulf %75, %76 : vector<8x16xf32>
    %78 = tpu.concatenate %74, %77, %67 in 0 : vector<8x16xf32>, vector<8x16xf32>, vector<8x16xf32> -> vector<24x16xf32>
    %c0_34 = arith.constant 0 : index
    %c0_35 = arith.constant 0 : index
    %79 = vector.load %arg11[%c0_34, %c0_35] : memref<8x24xf32, #tpu.memory_space<vmem>>, vector<8x24xf32>
    %cst_36 = arith.constant dense<0.000000e+00> : vector<8x16xf32>
    %80 = tpu.matmul %79, %78, %cst_36 {dimension_numbers = #tpu.dot_dimension_numbers<[1], [0], [0], [1], [0, 0, 1, 1], [], []>} : vector<8x24xf32>, vector<24x16xf32>, vector<8x16xf32> -> vector<8x16xf32>
    %c0_37 = arith.constant 0 : index
    %c0_38 = arith.constant 0 : index
    %81 = vector.load %arg12[%c0_37, %c0_38] : memref<8x1xf32, #tpu.memory_space<vmem>>, vector<8x1xf32>
    %82 = vector.broadcast %81 : vector<8x1xf32> to vector<8x16xf32>
    %83 = arith.addf %80, %82 : vector<8x16xf32>
    %cst_39 = arith.constant 0.000000e+00 : f32
    %84 = vector.broadcast %cst_39 : f32 to vector<8x16xf32>
    %85 = arith.maximumf %83, %84 : vector<8x16xf32>
    %c4_i32_40 = arith.constant 4 : i32
    %86 = tpu.dynamic_rotate %85 by %c4_i32_40 dim 1 : vector<8x16xf32>, i32 -> vector<8x16xf32>
    %87 = vector.broadcast %72 : vector<1x16xf32> to vector<8x16xf32>
    %88 = arith.mulf %86, %87 : vector<8x16xf32>
    %c2_i32_41 = arith.constant 2 : i32
    %89 = tpu.dynamic_rotate %85 by %c2_i32_41 dim 1 : vector<8x16xf32>, i32 -> vector<8x16xf32>
    %90 = vector.broadcast %30 : vector<1x16xf32> to vector<8x16xf32>
    %91 = arith.mulf %89, %90 : vector<8x16xf32>
    %92 = tpu.concatenate %88, %91, %85 in 0 : vector<8x16xf32>, vector<8x16xf32>, vector<8x16xf32> -> vector<24x16xf32>
    %c0_42 = arith.constant 0 : index
    %c0_43 = arith.constant 0 : index
    %93 = vector.load %arg13[%c0_42, %c0_43] : memref<8x24xf32, #tpu.memory_space<vmem>>, vector<8x24xf32>
    %cst_44 = arith.constant dense<0.000000e+00> : vector<8x16xf32>
    %94 = tpu.matmul %93, %92, %cst_44 {dimension_numbers = #tpu.dot_dimension_numbers<[1], [0], [0], [1], [0, 0, 1, 1], [], []>} : vector<8x24xf32>, vector<24x16xf32>, vector<8x16xf32> -> vector<8x16xf32>
    %c0_45 = arith.constant 0 : index
    %c0_46 = arith.constant 0 : index
    %95 = vector.load %arg14[%c0_45, %c0_46] : memref<8x1xf32, #tpu.memory_space<vmem>>, vector<8x1xf32>
    %96 = vector.broadcast %95 : vector<8x1xf32> to vector<8x16xf32>
    %97 = arith.addf %94, %96 : vector<8x16xf32>
    %cst_47 = arith.constant 0.000000e+00 : f32
    %98 = vector.broadcast %cst_47 : f32 to vector<8x16xf32>
    %99 = arith.maximumf %97, %98 : vector<8x16xf32>
    %100 = arith.addf %99, %67 : vector<8x16xf32>
    %cst_48 = arith.constant 0.000000e+00 : f32
    %101 = vector.broadcast %cst_48 : f32 to vector<8x16xf32>
    %c4_i32_49 = arith.constant 4 : i32
    %102 = tpu.dynamic_rotate %100 by %c4_i32_49 dim 1 : vector<8x16xf32>, i32 -> vector<8x16xf32>
    %103 = vector.broadcast %72 : vector<1x16xf32> to vector<8x16xf32>
    %104 = arith.mulf %102, %103 : vector<8x16xf32>
    %105 = tpu.concatenate %101, %104, %100 in 0 : vector<8x16xf32>, vector<8x16xf32>, vector<8x16xf32> -> vector<24x16xf32>
    %c0_50 = arith.constant 0 : index
    %c0_51 = arith.constant 0 : index
    %106 = vector.load %arg15[%c0_50, %c0_51] : memref<8x24xf32, #tpu.memory_space<vmem>>, vector<8x24xf32>
    %cst_52 = arith.constant dense<0.000000e+00> : vector<8x16xf32>
    %107 = tpu.matmul %106, %105, %cst_52 {dimension_numbers = #tpu.dot_dimension_numbers<[1], [0], [0], [1], [0, 0, 1, 1], [], []>} : vector<8x24xf32>, vector<24x16xf32>, vector<8x16xf32> -> vector<8x16xf32>
    %c0_53 = arith.constant 0 : index
    %c0_54 = arith.constant 0 : index
    %108 = vector.load %arg16[%c0_53, %c0_54] : memref<8x1xf32, #tpu.memory_space<vmem>>, vector<8x1xf32>
    %109 = vector.broadcast %108 : vector<8x1xf32> to vector<8x16xf32>
    %110 = arith.addf %107, %109 : vector<8x16xf32>
    %cst_55 = arith.constant 0.000000e+00 : f32
    %111 = vector.broadcast %cst_55 : f32 to vector<8x16xf32>
    %112 = arith.maximumf %110, %111 : vector<8x16xf32>
    %cst_56 = arith.constant 0.000000e+00 : f32
    %113 = vector.broadcast %cst_56 : f32 to vector<8x16xf32>
    %c4_i32_57 = arith.constant 4 : i32
    %114 = tpu.dynamic_rotate %112 by %c4_i32_57 dim 1 : vector<8x16xf32>, i32 -> vector<8x16xf32>
    %115 = vector.broadcast %72 : vector<1x16xf32> to vector<8x16xf32>
    %116 = arith.mulf %114, %115 : vector<8x16xf32>
    %117 = tpu.concatenate %113, %116, %112 in 0 : vector<8x16xf32>, vector<8x16xf32>, vector<8x16xf32> -> vector<24x16xf32>
    %c0_58 = arith.constant 0 : index
    %c0_59 = arith.constant 0 : index
    %118 = vector.load %arg17[%c0_58, %c0_59] : memref<8x24xf32, #tpu.memory_space<vmem>>, vector<8x24xf32>
    %cst_60 = arith.constant dense<0.000000e+00> : vector<8x16xf32>
    %119 = tpu.matmul %118, %117, %cst_60 {dimension_numbers = #tpu.dot_dimension_numbers<[1], [0], [0], [1], [0, 0, 1, 1], [], []>} : vector<8x24xf32>, vector<24x16xf32>, vector<8x16xf32> -> vector<8x16xf32>
    %c0_61 = arith.constant 0 : index
    %c0_62 = arith.constant 0 : index
    %120 = vector.load %arg18[%c0_61, %c0_62] : memref<8x1xf32, #tpu.memory_space<vmem>>, vector<8x1xf32>
    %121 = vector.broadcast %120 : vector<8x1xf32> to vector<8x16xf32>
    %122 = arith.addf %119, %121 : vector<8x16xf32>
    %c0_63 = arith.constant 0 : index
    %c0_64 = arith.constant 0 : index
    %123 = vector.load %arg19[%c0_63, %c0_64] : memref<8x8xf32, #tpu.memory_space<vmem>>, vector<8x8xf32>
    %cst_65 = arith.constant dense<0.000000e+00> : vector<8x16xf32>
    %124 = tpu.matmul %123, %100, %cst_65 {dimension_numbers = #tpu.dot_dimension_numbers<[1], [0], [0], [1], [0, 0, 1, 1], [], []>} : vector<8x8xf32>, vector<8x16xf32>, vector<8x16xf32> -> vector<8x16xf32>
    %c0_66 = arith.constant 0 : index
    %c0_67 = arith.constant 0 : index
    %125 = vector.load %arg20[%c0_66, %c0_67] : memref<8x1xf32, #tpu.memory_space<vmem>>, vector<8x1xf32>
    %126 = vector.broadcast %125 : vector<8x1xf32> to vector<8x16xf32>
    %127 = arith.addf %124, %126 : vector<8x16xf32>
    %128 = arith.addf %122, %127 : vector<8x16xf32>
    %c0_68 = arith.constant 0 : index
    %c0_69 = arith.constant 0 : index
    %129 = vector.load %arg21[%c0_68, %c0_69] : memref<16x72xf32, #tpu.memory_space<vmem>>, vector<16x72xf32>
    %130 = arith.negf %128 : vector<8x16xf32>
    %131 = math.exp %130 : vector<8x16xf32>
    %cst_70 = arith.constant 1.000000e+00 : f32
    %132 = vector.broadcast %cst_70 : f32 to vector<8x16xf32>
    %133 = arith.addf %132, %131 : vector<8x16xf32>
    %134 = arith.divf %132, %133 : vector<8x16xf32>
    %135 = arith.mulf %128, %134 : vector<8x16xf32>
    %cst_71 = arith.constant -2.200000e+00 : f32
    %136 = vector.broadcast %cst_71 : f32 to vector<8x16xf32>
    %137 = arith.cmpf oge, %128, %136 : vector<8x16xf32>
    %cst_72 = arith.constant -1.800000e+00 : f32
    %138 = vector.broadcast %cst_72 : f32 to vector<8x16xf32>
    %139 = arith.cmpf olt, %128, %138 : vector<8x16xf32>
    %140 = arith.andi %137, %139 : vector<8x16xi1>
    %cst_73 = arith.constant 1.000000e+00 : f32
    %cst_74 = arith.constant 0.000000e+00 : f32
    %141 = vector.broadcast %cst_73 : f32 to vector<8x16xf32>
    %142 = vector.broadcast %cst_74 : f32 to vector<8x16xf32>
    %143 = arith.select %140, %141, %142 : vector<8x16xi1>, vector<8x16xf32>
    %cst_75 = arith.constant -1.800000e+00 : f32
    %144 = vector.broadcast %cst_75 : f32 to vector<8x16xf32>
    %145 = arith.cmpf oge, %128, %144 : vector<8x16xf32>
    %cst_76 = arith.constant -1.400000e+00 : f32
    %146 = vector.broadcast %cst_76 : f32 to vector<8x16xf32>
    %147 = arith.cmpf olt, %128, %146 : vector<8x16xf32>
    %148 = arith.andi %145, %147 : vector<8x16xi1>
    %cst_77 = arith.constant 1.000000e+00 : f32
    %cst_78 = arith.constant 0.000000e+00 : f32
    %149 = vector.broadcast %cst_77 : f32 to vector<8x16xf32>
    %150 = vector.broadcast %cst_78 : f32 to vector<8x16xf32>
    %151 = arith.select %148, %149, %150 : vector<8x16xi1>, vector<8x16xf32>
    %cst_79 = arith.constant -1.400000e+00 : f32
    %152 = vector.broadcast %cst_79 : f32 to vector<8x16xf32>
    %153 = arith.cmpf oge, %128, %152 : vector<8x16xf32>
    %cst_80 = arith.constant -1.000000e+00 : f32
    %154 = vector.broadcast %cst_80 : f32 to vector<8x16xf32>
    %155 = arith.cmpf olt, %128, %154 : vector<8x16xf32>
    %156 = arith.andi %153, %155 : vector<8x16xi1>
    %cst_81 = arith.constant 1.000000e+00 : f32
    %cst_82 = arith.constant 0.000000e+00 : f32
    %157 = vector.broadcast %cst_81 : f32 to vector<8x16xf32>
    %158 = vector.broadcast %cst_82 : f32 to vector<8x16xf32>
    %159 = arith.select %156, %157, %158 : vector<8x16xi1>, vector<8x16xf32>
    %cst_83 = arith.constant -1.000000e+00 : f32
    %160 = vector.broadcast %cst_83 : f32 to vector<8x16xf32>
    %161 = arith.cmpf oge, %128, %160 : vector<8x16xf32>
    %cst_84 = arith.constant -6.000000e-01 : f32
    %162 = vector.broadcast %cst_84 : f32 to vector<8x16xf32>
    %163 = arith.cmpf olt, %128, %162 : vector<8x16xf32>
    %164 = arith.andi %161, %163 : vector<8x16xi1>
    %cst_85 = arith.constant 1.000000e+00 : f32
    %cst_86 = arith.constant 0.000000e+00 : f32
    %165 = vector.broadcast %cst_85 : f32 to vector<8x16xf32>
    %166 = vector.broadcast %cst_86 : f32 to vector<8x16xf32>
    %167 = arith.select %164, %165, %166 : vector<8x16xi1>, vector<8x16xf32>
    %cst_87 = arith.constant -6.000000e-01 : f32
    %168 = vector.broadcast %cst_87 : f32 to vector<8x16xf32>
    %169 = arith.cmpf oge, %128, %168 : vector<8x16xf32>
    %cst_88 = arith.constant -2.000000e-01 : f32
    %170 = vector.broadcast %cst_88 : f32 to vector<8x16xf32>
    %171 = arith.cmpf olt, %128, %170 : vector<8x16xf32>
    %172 = arith.andi %169, %171 : vector<8x16xi1>
    %cst_89 = arith.constant 1.000000e+00 : f32
    %cst_90 = arith.constant 0.000000e+00 : f32
    %173 = vector.broadcast %cst_89 : f32 to vector<8x16xf32>
    %174 = vector.broadcast %cst_90 : f32 to vector<8x16xf32>
    %175 = arith.select %172, %173, %174 : vector<8x16xi1>, vector<8x16xf32>
    %cst_91 = arith.constant -2.000000e-01 : f32
    %176 = vector.broadcast %cst_91 : f32 to vector<8x16xf32>
    %177 = arith.cmpf oge, %128, %176 : vector<8x16xf32>
    %cst_92 = arith.constant 2.000000e-01 : f32
    %178 = vector.broadcast %cst_92 : f32 to vector<8x16xf32>
    %179 = arith.cmpf olt, %128, %178 : vector<8x16xf32>
    %180 = arith.andi %177, %179 : vector<8x16xi1>
    %cst_93 = arith.constant 1.000000e+00 : f32
    %cst_94 = arith.constant 0.000000e+00 : f32
    %181 = vector.broadcast %cst_93 : f32 to vector<8x16xf32>
    %182 = vector.broadcast %cst_94 : f32 to vector<8x16xf32>
    %183 = arith.select %180, %181, %182 : vector<8x16xi1>, vector<8x16xf32>
    %cst_95 = arith.constant 2.000000e-01 : f32
    %184 = vector.broadcast %cst_95 : f32 to vector<8x16xf32>
    %185 = arith.cmpf oge, %128, %184 : vector<8x16xf32>
    %cst_96 = arith.constant 6.000000e-01 : f32
    %186 = vector.broadcast %cst_96 : f32 to vector<8x16xf32>
    %187 = arith.cmpf olt, %128, %186 : vector<8x16xf32>
    %188 = arith.andi %185, %187 : vector<8x16xi1>
    %cst_97 = arith.constant 1.000000e+00 : f32
    %cst_98 = arith.constant 0.000000e+00 : f32
    %189 = vector.broadcast %cst_97 : f32 to vector<8x16xf32>
    %190 = vector.broadcast %cst_98 : f32 to vector<8x16xf32>
    %191 = arith.select %188, %189, %190 : vector<8x16xi1>, vector<8x16xf32>
    %cst_99 = arith.constant 6.000000e-01 : f32
    %192 = vector.broadcast %cst_99 : f32 to vector<8x16xf32>
    %193 = arith.cmpf oge, %128, %192 : vector<8x16xf32>
    %cst_100 = arith.constant 1.000000e+00 : f32
    %194 = vector.broadcast %cst_100 : f32 to vector<8x16xf32>
    %195 = arith.cmpf olt, %128, %194 : vector<8x16xf32>
    %196 = arith.andi %193, %195 : vector<8x16xi1>
    %cst_101 = arith.constant 1.000000e+00 : f32
    %cst_102 = arith.constant 0.000000e+00 : f32
    %197 = vector.broadcast %cst_101 : f32 to vector<8x16xf32>
    %198 = vector.broadcast %cst_102 : f32 to vector<8x16xf32>
    %199 = arith.select %196, %197, %198 : vector<8x16xi1>, vector<8x16xf32>
    %cst_103 = arith.constant 1.000000e+00 : f32
    %200 = vector.broadcast %cst_103 : f32 to vector<8x16xf32>
    %201 = arith.cmpf oge, %128, %200 : vector<8x16xf32>
    %cst_104 = arith.constant 1.400000e+00 : f32
    %202 = vector.broadcast %cst_104 : f32 to vector<8x16xf32>
    %203 = arith.cmpf olt, %128, %202 : vector<8x16xf32>
    %204 = arith.andi %201, %203 : vector<8x16xi1>
    %cst_105 = arith.constant 1.000000e+00 : f32
    %cst_106 = arith.constant 0.000000e+00 : f32
    %205 = vector.broadcast %cst_105 : f32 to vector<8x16xf32>
    %206 = vector.broadcast %cst_106 : f32 to vector<8x16xf32>
    %207 = arith.select %204, %205, %206 : vector<8x16xi1>, vector<8x16xf32>
    %cst_107 = arith.constant 1.400000e+00 : f32
    %208 = vector.broadcast %cst_107 : f32 to vector<8x16xf32>
    %209 = arith.cmpf oge, %128, %208 : vector<8x16xf32>
    %cst_108 = arith.constant 1.800000e+00 : f32
    %210 = vector.broadcast %cst_108 : f32 to vector<8x16xf32>
    %211 = arith.cmpf olt, %128, %210 : vector<8x16xf32>
    %212 = arith.andi %209, %211 : vector<8x16xi1>
    %cst_109 = arith.constant 1.000000e+00 : f32
    %cst_110 = arith.constant 0.000000e+00 : f32
    %213 = vector.broadcast %cst_109 : f32 to vector<8x16xf32>
    %214 = vector.broadcast %cst_110 : f32 to vector<8x16xf32>
    %215 = arith.select %212, %213, %214 : vector<8x16xi1>, vector<8x16xf32>
    %cst_111 = arith.constant 1.800000e+00 : f32
    %216 = vector.broadcast %cst_111 : f32 to vector<8x16xf32>
    %217 = arith.cmpf oge, %128, %216 : vector<8x16xf32>
    %cst_112 = arith.constant 2.200000e+00 : f32
    %218 = vector.broadcast %cst_112 : f32 to vector<8x16xf32>
    %219 = arith.cmpf olt, %128, %218 : vector<8x16xf32>
    %220 = arith.andi %217, %219 : vector<8x16xi1>
    %cst_113 = arith.constant 1.000000e+00 : f32
    %cst_114 = arith.constant 0.000000e+00 : f32
    %221 = vector.broadcast %cst_113 : f32 to vector<8x16xf32>
    %222 = vector.broadcast %cst_114 : f32 to vector<8x16xf32>
    %223 = arith.select %220, %221, %222 : vector<8x16xi1>, vector<8x16xf32>
    %cst_115 = arith.constant -2.200000e+00 : f32
    %224 = vector.broadcast %cst_115 : f32 to vector<8x16xf32>
    %225 = arith.subf %128, %224 : vector<8x16xf32>
    %cst_116 = arith.constant 4.000000e-01 : f32
    %226 = vector.broadcast %cst_116 : f32 to vector<8x16xf32>
    %227 = arith.divf %225, %226 : vector<8x16xf32>
    %228 = arith.mulf %227, %143 : vector<8x16xf32>
    %cst_117 = arith.constant -1.400000e+00 : f32
    %229 = vector.broadcast %cst_117 : f32 to vector<8x16xf32>
    %230 = arith.subf %229, %128 : vector<8x16xf32>
    %cst_118 = arith.constant 4.000000e-01 : f32
    %231 = vector.broadcast %cst_118 : f32 to vector<8x16xf32>
    %232 = arith.divf %230, %231 : vector<8x16xf32>
    %233 = arith.mulf %232, %151 : vector<8x16xf32>
    %234 = arith.addf %228, %233 : vector<8x16xf32>
    %cst_119 = arith.constant -1.800000e+00 : f32
    %235 = vector.broadcast %cst_119 : f32 to vector<8x16xf32>
    %236 = arith.subf %128, %235 : vector<8x16xf32>
    %cst_120 = arith.constant 4.000000e-01 : f32
    %237 = vector.broadcast %cst_120 : f32 to vector<8x16xf32>
    %238 = arith.divf %236, %237 : vector<8x16xf32>
    %239 = arith.mulf %238, %151 : vector<8x16xf32>
    %cst_121 = arith.constant -1.000000e+00 : f32
    %240 = vector.broadcast %cst_121 : f32 to vector<8x16xf32>
    %241 = arith.subf %240, %128 : vector<8x16xf32>
    %cst_122 = arith.constant 4.000000e-01 : f32
    %242 = vector.broadcast %cst_122 : f32 to vector<8x16xf32>
    %243 = arith.divf %241, %242 : vector<8x16xf32>
    %244 = arith.mulf %243, %159 : vector<8x16xf32>
    %245 = arith.addf %239, %244 : vector<8x16xf32>
    %cst_123 = arith.constant -1.400000e+00 : f32
    %246 = vector.broadcast %cst_123 : f32 to vector<8x16xf32>
    %247 = arith.subf %128, %246 : vector<8x16xf32>
    %cst_124 = arith.constant 4.000000e-01 : f32
    %248 = vector.broadcast %cst_124 : f32 to vector<8x16xf32>
    %249 = arith.divf %247, %248 : vector<8x16xf32>
    %250 = arith.mulf %249, %159 : vector<8x16xf32>
    %cst_125 = arith.constant -6.000000e-01 : f32
    %251 = vector.broadcast %cst_125 : f32 to vector<8x16xf32>
    %252 = arith.subf %251, %128 : vector<8x16xf32>
    %cst_126 = arith.constant 4.000000e-01 : f32
    %253 = vector.broadcast %cst_126 : f32 to vector<8x16xf32>
    %254 = arith.divf %252, %253 : vector<8x16xf32>
    %255 = arith.mulf %254, %167 : vector<8x16xf32>
    %256 = arith.addf %250, %255 : vector<8x16xf32>
    %cst_127 = arith.constant -1.000000e+00 : f32
    %257 = vector.broadcast %cst_127 : f32 to vector<8x16xf32>
    %258 = arith.subf %128, %257 : vector<8x16xf32>
    %cst_128 = arith.constant 4.000000e-01 : f32
    %259 = vector.broadcast %cst_128 : f32 to vector<8x16xf32>
    %260 = arith.divf %258, %259 : vector<8x16xf32>
    %261 = arith.mulf %260, %167 : vector<8x16xf32>
    %cst_129 = arith.constant -2.000000e-01 : f32
    %262 = vector.broadcast %cst_129 : f32 to vector<8x16xf32>
    %263 = arith.subf %262, %128 : vector<8x16xf32>
    %cst_130 = arith.constant 4.000000e-01 : f32
    %264 = vector.broadcast %cst_130 : f32 to vector<8x16xf32>
    %265 = arith.divf %263, %264 : vector<8x16xf32>
    %266 = arith.mulf %265, %175 : vector<8x16xf32>
    %267 = arith.addf %261, %266 : vector<8x16xf32>
    %cst_131 = arith.constant -6.000000e-01 : f32
    %268 = vector.broadcast %cst_131 : f32 to vector<8x16xf32>
    %269 = arith.subf %128, %268 : vector<8x16xf32>
    %cst_132 = arith.constant 4.000000e-01 : f32
    %270 = vector.broadcast %cst_132 : f32 to vector<8x16xf32>
    %271 = arith.divf %269, %270 : vector<8x16xf32>
    %272 = arith.mulf %271, %175 : vector<8x16xf32>
    %cst_133 = arith.constant 2.000000e-01 : f32
    %273 = vector.broadcast %cst_133 : f32 to vector<8x16xf32>
    %274 = arith.subf %273, %128 : vector<8x16xf32>
    %cst_134 = arith.constant 4.000000e-01 : f32
    %275 = vector.broadcast %cst_134 : f32 to vector<8x16xf32>
    %276 = arith.divf %274, %275 : vector<8x16xf32>
    %277 = arith.mulf %276, %183 : vector<8x16xf32>
    %278 = arith.addf %272, %277 : vector<8x16xf32>
    %cst_135 = arith.constant -2.000000e-01 : f32
    %279 = vector.broadcast %cst_135 : f32 to vector<8x16xf32>
    %280 = arith.subf %128, %279 : vector<8x16xf32>
    %cst_136 = arith.constant 4.000000e-01 : f32
    %281 = vector.broadcast %cst_136 : f32 to vector<8x16xf32>
    %282 = arith.divf %280, %281 : vector<8x16xf32>
    %283 = arith.mulf %282, %183 : vector<8x16xf32>
    %cst_137 = arith.constant 6.000000e-01 : f32
    %284 = vector.broadcast %cst_137 : f32 to vector<8x16xf32>
    %285 = arith.subf %284, %128 : vector<8x16xf32>
    %cst_138 = arith.constant 4.000000e-01 : f32
    %286 = vector.broadcast %cst_138 : f32 to vector<8x16xf32>
    %287 = arith.divf %285, %286 : vector<8x16xf32>
    %288 = arith.mulf %287, %191 : vector<8x16xf32>
    %289 = arith.addf %283, %288 : vector<8x16xf32>
    %cst_139 = arith.constant 2.000000e-01 : f32
    %290 = vector.broadcast %cst_139 : f32 to vector<8x16xf32>
    %291 = arith.subf %128, %290 : vector<8x16xf32>
    %cst_140 = arith.constant 4.000000e-01 : f32
    %292 = vector.broadcast %cst_140 : f32 to vector<8x16xf32>
    %293 = arith.divf %291, %292 : vector<8x16xf32>
    %294 = arith.mulf %293, %191 : vector<8x16xf32>
    %cst_141 = arith.constant 1.000000e+00 : f32
    %295 = vector.broadcast %cst_141 : f32 to vector<8x16xf32>
    %296 = arith.subf %295, %128 : vector<8x16xf32>
    %cst_142 = arith.constant 4.000000e-01 : f32
    %297 = vector.broadcast %cst_142 : f32 to vector<8x16xf32>
    %298 = arith.divf %296, %297 : vector<8x16xf32>
    %299 = arith.mulf %298, %199 : vector<8x16xf32>
    %300 = arith.addf %294, %299 : vector<8x16xf32>
    %cst_143 = arith.constant 6.000000e-01 : f32
    %301 = vector.broadcast %cst_143 : f32 to vector<8x16xf32>
    %302 = arith.subf %128, %301 : vector<8x16xf32>
    %cst_144 = arith.constant 4.000000e-01 : f32
    %303 = vector.broadcast %cst_144 : f32 to vector<8x16xf32>
    %304 = arith.divf %302, %303 : vector<8x16xf32>
    %305 = arith.mulf %304, %199 : vector<8x16xf32>
    %cst_145 = arith.constant 1.400000e+00 : f32
    %306 = vector.broadcast %cst_145 : f32 to vector<8x16xf32>
    %307 = arith.subf %306, %128 : vector<8x16xf32>
    %cst_146 = arith.constant 4.000000e-01 : f32
    %308 = vector.broadcast %cst_146 : f32 to vector<8x16xf32>
    %309 = arith.divf %307, %308 : vector<8x16xf32>
    %310 = arith.mulf %309, %207 : vector<8x16xf32>
    %311 = arith.addf %305, %310 : vector<8x16xf32>
    %cst_147 = arith.constant 1.000000e+00 : f32
    %312 = vector.broadcast %cst_147 : f32 to vector<8x16xf32>
    %313 = arith.subf %128, %312 : vector<8x16xf32>
    %cst_148 = arith.constant 4.000000e-01 : f32
    %314 = vector.broadcast %cst_148 : f32 to vector<8x16xf32>
    %315 = arith.divf %313, %314 : vector<8x16xf32>
    %316 = arith.mulf %315, %207 : vector<8x16xf32>
    %cst_149 = arith.constant 1.800000e+00 : f32
    %317 = vector.broadcast %cst_149 : f32 to vector<8x16xf32>
    %318 = arith.subf %317, %128 : vector<8x16xf32>
    %cst_150 = arith.constant 4.000000e-01 : f32
    %319 = vector.broadcast %cst_150 : f32 to vector<8x16xf32>
    %320 = arith.divf %318, %319 : vector<8x16xf32>
    %321 = arith.mulf %320, %215 : vector<8x16xf32>
    %322 = arith.addf %316, %321 : vector<8x16xf32>
    %cst_151 = arith.constant 1.400000e+00 : f32
    %323 = vector.broadcast %cst_151 : f32 to vector<8x16xf32>
    %324 = arith.subf %128, %323 : vector<8x16xf32>
    %cst_152 = arith.constant 4.000000e-01 : f32
    %325 = vector.broadcast %cst_152 : f32 to vector<8x16xf32>
    %326 = arith.divf %324, %325 : vector<8x16xf32>
    %327 = arith.mulf %326, %215 : vector<8x16xf32>
    %cst_153 = arith.constant 2.200000e+00 : f32
    %328 = vector.broadcast %cst_153 : f32 to vector<8x16xf32>
    %329 = arith.subf %328, %128 : vector<8x16xf32>
    %cst_154 = arith.constant 4.000000e-01 : f32
    %330 = vector.broadcast %cst_154 : f32 to vector<8x16xf32>
    %331 = arith.divf %329, %330 : vector<8x16xf32>
    %332 = arith.mulf %331, %223 : vector<8x16xf32>
    %333 = arith.addf %327, %332 : vector<8x16xf32>
    %cst_155 = arith.constant -2.200000e+00 : f32
    %334 = vector.broadcast %cst_155 : f32 to vector<8x16xf32>
    %335 = arith.subf %128, %334 : vector<8x16xf32>
    %cst_156 = arith.constant 8.000000e-01 : f32
    %336 = vector.broadcast %cst_156 : f32 to vector<8x16xf32>
    %337 = arith.divf %335, %336 : vector<8x16xf32>
    %338 = arith.mulf %337, %234 : vector<8x16xf32>
    %cst_157 = arith.constant -1.000000e+00 : f32
    %339 = vector.broadcast %cst_157 : f32 to vector<8x16xf32>
    %340 = arith.subf %339, %128 : vector<8x16xf32>
    %cst_158 = arith.constant 8.000000e-01 : f32
    %341 = vector.broadcast %cst_158 : f32 to vector<8x16xf32>
    %342 = arith.divf %340, %341 : vector<8x16xf32>
    %343 = arith.mulf %342, %245 : vector<8x16xf32>
    %344 = arith.addf %338, %343 : vector<8x16xf32>
    %cst_159 = arith.constant -1.800000e+00 : f32
    %345 = vector.broadcast %cst_159 : f32 to vector<8x16xf32>
    %346 = arith.subf %128, %345 : vector<8x16xf32>
    %cst_160 = arith.constant 8.000000e-01 : f32
    %347 = vector.broadcast %cst_160 : f32 to vector<8x16xf32>
    %348 = arith.divf %346, %347 : vector<8x16xf32>
    %349 = arith.mulf %348, %245 : vector<8x16xf32>
    %cst_161 = arith.constant -6.000000e-01 : f32
    %350 = vector.broadcast %cst_161 : f32 to vector<8x16xf32>
    %351 = arith.subf %350, %128 : vector<8x16xf32>
    %cst_162 = arith.constant 8.000000e-01 : f32
    %352 = vector.broadcast %cst_162 : f32 to vector<8x16xf32>
    %353 = arith.divf %351, %352 : vector<8x16xf32>
    %354 = arith.mulf %353, %256 : vector<8x16xf32>
    %355 = arith.addf %349, %354 : vector<8x16xf32>
    %cst_163 = arith.constant -1.400000e+00 : f32
    %356 = vector.broadcast %cst_163 : f32 to vector<8x16xf32>
    %357 = arith.subf %128, %356 : vector<8x16xf32>
    %cst_164 = arith.constant 8.000000e-01 : f32
    %358 = vector.broadcast %cst_164 : f32 to vector<8x16xf32>
    %359 = arith.divf %357, %358 : vector<8x16xf32>
    %360 = arith.mulf %359, %256 : vector<8x16xf32>
    %cst_165 = arith.constant -2.000000e-01 : f32
    %361 = vector.broadcast %cst_165 : f32 to vector<8x16xf32>
    %362 = arith.subf %361, %128 : vector<8x16xf32>
    %cst_166 = arith.constant 8.000000e-01 : f32
    %363 = vector.broadcast %cst_166 : f32 to vector<8x16xf32>
    %364 = arith.divf %362, %363 : vector<8x16xf32>
    %365 = arith.mulf %364, %267 : vector<8x16xf32>
    %366 = arith.addf %360, %365 : vector<8x16xf32>
    %cst_167 = arith.constant -1.000000e+00 : f32
    %367 = vector.broadcast %cst_167 : f32 to vector<8x16xf32>
    %368 = arith.subf %128, %367 : vector<8x16xf32>
    %cst_168 = arith.constant 8.000000e-01 : f32
    %369 = vector.broadcast %cst_168 : f32 to vector<8x16xf32>
    %370 = arith.divf %368, %369 : vector<8x16xf32>
    %371 = arith.mulf %370, %267 : vector<8x16xf32>
    %cst_169 = arith.constant 2.000000e-01 : f32
    %372 = vector.broadcast %cst_169 : f32 to vector<8x16xf32>
    %373 = arith.subf %372, %128 : vector<8x16xf32>
    %cst_170 = arith.constant 8.000000e-01 : f32
    %374 = vector.broadcast %cst_170 : f32 to vector<8x16xf32>
    %375 = arith.divf %373, %374 : vector<8x16xf32>
    %376 = arith.mulf %375, %278 : vector<8x16xf32>
    %377 = arith.addf %371, %376 : vector<8x16xf32>
    %cst_171 = arith.constant -6.000000e-01 : f32
    %378 = vector.broadcast %cst_171 : f32 to vector<8x16xf32>
    %379 = arith.subf %128, %378 : vector<8x16xf32>
    %cst_172 = arith.constant 8.000000e-01 : f32
    %380 = vector.broadcast %cst_172 : f32 to vector<8x16xf32>
    %381 = arith.divf %379, %380 : vector<8x16xf32>
    %382 = arith.mulf %381, %278 : vector<8x16xf32>
    %cst_173 = arith.constant 6.000000e-01 : f32
    %383 = vector.broadcast %cst_173 : f32 to vector<8x16xf32>
    %384 = arith.subf %383, %128 : vector<8x16xf32>
    %cst_174 = arith.constant 8.000000e-01 : f32
    %385 = vector.broadcast %cst_174 : f32 to vector<8x16xf32>
    %386 = arith.divf %384, %385 : vector<8x16xf32>
    %387 = arith.mulf %386, %289 : vector<8x16xf32>
    %388 = arith.addf %382, %387 : vector<8x16xf32>
    %cst_175 = arith.constant -2.000000e-01 : f32
    %389 = vector.broadcast %cst_175 : f32 to vector<8x16xf32>
    %390 = arith.subf %128, %389 : vector<8x16xf32>
    %cst_176 = arith.constant 8.000000e-01 : f32
    %391 = vector.broadcast %cst_176 : f32 to vector<8x16xf32>
    %392 = arith.divf %390, %391 : vector<8x16xf32>
    %393 = arith.mulf %392, %289 : vector<8x16xf32>
    %cst_177 = arith.constant 1.000000e+00 : f32
    %394 = vector.broadcast %cst_177 : f32 to vector<8x16xf32>
    %395 = arith.subf %394, %128 : vector<8x16xf32>
    %cst_178 = arith.constant 8.000000e-01 : f32
    %396 = vector.broadcast %cst_178 : f32 to vector<8x16xf32>
    %397 = arith.divf %395, %396 : vector<8x16xf32>
    %398 = arith.mulf %397, %300 : vector<8x16xf32>
    %399 = arith.addf %393, %398 : vector<8x16xf32>
    %cst_179 = arith.constant 2.000000e-01 : f32
    %400 = vector.broadcast %cst_179 : f32 to vector<8x16xf32>
    %401 = arith.subf %128, %400 : vector<8x16xf32>
    %cst_180 = arith.constant 8.000000e-01 : f32
    %402 = vector.broadcast %cst_180 : f32 to vector<8x16xf32>
    %403 = arith.divf %401, %402 : vector<8x16xf32>
    %404 = arith.mulf %403, %300 : vector<8x16xf32>
    %cst_181 = arith.constant 1.400000e+00 : f32
    %405 = vector.broadcast %cst_181 : f32 to vector<8x16xf32>
    %406 = arith.subf %405, %128 : vector<8x16xf32>
    %cst_182 = arith.constant 8.000000e-01 : f32
    %407 = vector.broadcast %cst_182 : f32 to vector<8x16xf32>
    %408 = arith.divf %406, %407 : vector<8x16xf32>
    %409 = arith.mulf %408, %311 : vector<8x16xf32>
    %410 = arith.addf %404, %409 : vector<8x16xf32>
    %cst_183 = arith.constant 6.000000e-01 : f32
    %411 = vector.broadcast %cst_183 : f32 to vector<8x16xf32>
    %412 = arith.subf %128, %411 : vector<8x16xf32>
    %cst_184 = arith.constant 8.000000e-01 : f32
    %413 = vector.broadcast %cst_184 : f32 to vector<8x16xf32>
    %414 = arith.divf %412, %413 : vector<8x16xf32>
    %415 = arith.mulf %414, %311 : vector<8x16xf32>
    %cst_185 = arith.constant 1.800000e+00 : f32
    %416 = vector.broadcast %cst_185 : f32 to vector<8x16xf32>
    %417 = arith.subf %416, %128 : vector<8x16xf32>
    %cst_186 = arith.constant 8.000000e-01 : f32
    %418 = vector.broadcast %cst_186 : f32 to vector<8x16xf32>
    %419 = arith.divf %417, %418 : vector<8x16xf32>
    %420 = arith.mulf %419, %322 : vector<8x16xf32>
    %421 = arith.addf %415, %420 : vector<8x16xf32>
    %cst_187 = arith.constant 1.000000e+00 : f32
    %422 = vector.broadcast %cst_187 : f32 to vector<8x16xf32>
    %423 = arith.subf %128, %422 : vector<8x16xf32>
    %cst_188 = arith.constant 8.000000e-01 : f32
    %424 = vector.broadcast %cst_188 : f32 to vector<8x16xf32>
    %425 = arith.divf %423, %424 : vector<8x16xf32>
    %426 = arith.mulf %425, %322 : vector<8x16xf32>
    %cst_189 = arith.constant 2.200000e+00 : f32
    %427 = vector.broadcast %cst_189 : f32 to vector<8x16xf32>
    %428 = arith.subf %427, %128 : vector<8x16xf32>
    %cst_190 = arith.constant 8.000000e-01 : f32
    %429 = vector.broadcast %cst_190 : f32 to vector<8x16xf32>
    %430 = arith.divf %428, %429 : vector<8x16xf32>
    %431 = arith.mulf %430, %333 : vector<8x16xf32>
    %432 = arith.addf %426, %431 : vector<8x16xf32>
    %cst_191 = arith.constant -2.200000e+00 : f32
    %433 = vector.broadcast %cst_191 : f32 to vector<8x16xf32>
    %434 = arith.subf %128, %433 : vector<8x16xf32>
    %cst_192 = arith.constant 1.200000e+00 : f32
    %435 = vector.broadcast %cst_192 : f32 to vector<8x16xf32>
    %436 = arith.divf %434, %435 : vector<8x16xf32>
    %437 = arith.mulf %436, %344 : vector<8x16xf32>
    %cst_193 = arith.constant -6.000000e-01 : f32
    %438 = vector.broadcast %cst_193 : f32 to vector<8x16xf32>
    %439 = arith.subf %438, %128 : vector<8x16xf32>
    %cst_194 = arith.constant 1.200000e+00 : f32
    %440 = vector.broadcast %cst_194 : f32 to vector<8x16xf32>
    %441 = arith.divf %439, %440 : vector<8x16xf32>
    %442 = arith.mulf %441, %355 : vector<8x16xf32>
    %443 = arith.addf %437, %442 : vector<8x16xf32>
    %cst_195 = arith.constant -1.800000e+00 : f32
    %444 = vector.broadcast %cst_195 : f32 to vector<8x16xf32>
    %445 = arith.subf %128, %444 : vector<8x16xf32>
    %cst_196 = arith.constant 1.200000e+00 : f32
    %446 = vector.broadcast %cst_196 : f32 to vector<8x16xf32>
    %447 = arith.divf %445, %446 : vector<8x16xf32>
    %448 = arith.mulf %447, %355 : vector<8x16xf32>
    %cst_197 = arith.constant -2.000000e-01 : f32
    %449 = vector.broadcast %cst_197 : f32 to vector<8x16xf32>
    %450 = arith.subf %449, %128 : vector<8x16xf32>
    %cst_198 = arith.constant 1.200000e+00 : f32
    %451 = vector.broadcast %cst_198 : f32 to vector<8x16xf32>
    %452 = arith.divf %450, %451 : vector<8x16xf32>
    %453 = arith.mulf %452, %366 : vector<8x16xf32>
    %454 = arith.addf %448, %453 : vector<8x16xf32>
    %cst_199 = arith.constant -1.400000e+00 : f32
    %455 = vector.broadcast %cst_199 : f32 to vector<8x16xf32>
    %456 = arith.subf %128, %455 : vector<8x16xf32>
    %cst_200 = arith.constant 1.200000e+00 : f32
    %457 = vector.broadcast %cst_200 : f32 to vector<8x16xf32>
    %458 = arith.divf %456, %457 : vector<8x16xf32>
    %459 = arith.mulf %458, %366 : vector<8x16xf32>
    %cst_201 = arith.constant 2.000000e-01 : f32
    %460 = vector.broadcast %cst_201 : f32 to vector<8x16xf32>
    %461 = arith.subf %460, %128 : vector<8x16xf32>
    %cst_202 = arith.constant 1.200000e+00 : f32
    %462 = vector.broadcast %cst_202 : f32 to vector<8x16xf32>
    %463 = arith.divf %461, %462 : vector<8x16xf32>
    %464 = arith.mulf %463, %377 : vector<8x16xf32>
    %465 = arith.addf %459, %464 : vector<8x16xf32>
    %cst_203 = arith.constant -1.000000e+00 : f32
    %466 = vector.broadcast %cst_203 : f32 to vector<8x16xf32>
    %467 = arith.subf %128, %466 : vector<8x16xf32>
    %cst_204 = arith.constant 1.200000e+00 : f32
    %468 = vector.broadcast %cst_204 : f32 to vector<8x16xf32>
    %469 = arith.divf %467, %468 : vector<8x16xf32>
    %470 = arith.mulf %469, %377 : vector<8x16xf32>
    %cst_205 = arith.constant 6.000000e-01 : f32
    %471 = vector.broadcast %cst_205 : f32 to vector<8x16xf32>
    %472 = arith.subf %471, %128 : vector<8x16xf32>
    %cst_206 = arith.constant 1.200000e+00 : f32
    %473 = vector.broadcast %cst_206 : f32 to vector<8x16xf32>
    %474 = arith.divf %472, %473 : vector<8x16xf32>
    %475 = arith.mulf %474, %388 : vector<8x16xf32>
    %476 = arith.addf %470, %475 : vector<8x16xf32>
    %cst_207 = arith.constant -6.000000e-01 : f32
    %477 = vector.broadcast %cst_207 : f32 to vector<8x16xf32>
    %478 = arith.subf %128, %477 : vector<8x16xf32>
    %cst_208 = arith.constant 1.200000e+00 : f32
    %479 = vector.broadcast %cst_208 : f32 to vector<8x16xf32>
    %480 = arith.divf %478, %479 : vector<8x16xf32>
    %481 = arith.mulf %480, %388 : vector<8x16xf32>
    %cst_209 = arith.constant 1.000000e+00 : f32
    %482 = vector.broadcast %cst_209 : f32 to vector<8x16xf32>
    %483 = arith.subf %482, %128 : vector<8x16xf32>
    %cst_210 = arith.constant 1.200000e+00 : f32
    %484 = vector.broadcast %cst_210 : f32 to vector<8x16xf32>
    %485 = arith.divf %483, %484 : vector<8x16xf32>
    %486 = arith.mulf %485, %399 : vector<8x16xf32>
    %487 = arith.addf %481, %486 : vector<8x16xf32>
    %cst_211 = arith.constant -2.000000e-01 : f32
    %488 = vector.broadcast %cst_211 : f32 to vector<8x16xf32>
    %489 = arith.subf %128, %488 : vector<8x16xf32>
    %cst_212 = arith.constant 1.200000e+00 : f32
    %490 = vector.broadcast %cst_212 : f32 to vector<8x16xf32>
    %491 = arith.divf %489, %490 : vector<8x16xf32>
    %492 = arith.mulf %491, %399 : vector<8x16xf32>
    %cst_213 = arith.constant 1.400000e+00 : f32
    %493 = vector.broadcast %cst_213 : f32 to vector<8x16xf32>
    %494 = arith.subf %493, %128 : vector<8x16xf32>
    %cst_214 = arith.constant 1.200000e+00 : f32
    %495 = vector.broadcast %cst_214 : f32 to vector<8x16xf32>
    %496 = arith.divf %494, %495 : vector<8x16xf32>
    %497 = arith.mulf %496, %410 : vector<8x16xf32>
    %498 = arith.addf %492, %497 : vector<8x16xf32>
    %cst_215 = arith.constant 2.000000e-01 : f32
    %499 = vector.broadcast %cst_215 : f32 to vector<8x16xf32>
    %500 = arith.subf %128, %499 : vector<8x16xf32>
    %cst_216 = arith.constant 1.200000e+00 : f32
    %501 = vector.broadcast %cst_216 : f32 to vector<8x16xf32>
    %502 = arith.divf %500, %501 : vector<8x16xf32>
    %503 = arith.mulf %502, %410 : vector<8x16xf32>
    %cst_217 = arith.constant 1.800000e+00 : f32
    %504 = vector.broadcast %cst_217 : f32 to vector<8x16xf32>
    %505 = arith.subf %504, %128 : vector<8x16xf32>
    %cst_218 = arith.constant 1.200000e+00 : f32
    %506 = vector.broadcast %cst_218 : f32 to vector<8x16xf32>
    %507 = arith.divf %505, %506 : vector<8x16xf32>
    %508 = arith.mulf %507, %421 : vector<8x16xf32>
    %509 = arith.addf %503, %508 : vector<8x16xf32>
    %cst_219 = arith.constant 6.000000e-01 : f32
    %510 = vector.broadcast %cst_219 : f32 to vector<8x16xf32>
    %511 = arith.subf %128, %510 : vector<8x16xf32>
    %cst_220 = arith.constant 1.200000e+00 : f32
    %512 = vector.broadcast %cst_220 : f32 to vector<8x16xf32>
    %513 = arith.divf %511, %512 : vector<8x16xf32>
    %514 = arith.mulf %513, %421 : vector<8x16xf32>
    %cst_221 = arith.constant 2.200000e+00 : f32
    %515 = vector.broadcast %cst_221 : f32 to vector<8x16xf32>
    %516 = arith.subf %515, %128 : vector<8x16xf32>
    %cst_222 = arith.constant 1.200000e+00 : f32
    %517 = vector.broadcast %cst_222 : f32 to vector<8x16xf32>
    %518 = arith.divf %516, %517 : vector<8x16xf32>
    %519 = arith.mulf %518, %432 : vector<8x16xf32>
    %520 = arith.addf %514, %519 : vector<8x16xf32>
    %521 = tpu.concatenate %135, %443, %454, %465, %476, %487, %498, %509, %520 in 0 : vector<8x16xf32>, vector<8x16xf32>, vector<8x16xf32>, vector<8x16xf32>, vector<8x16xf32>, vector<8x16xf32>, vector<8x16xf32>, vector<8x16xf32>, vector<8x16xf32> -> vector<72x16xf32>
    %cst_223 = arith.constant dense<0.000000e+00> : vector<16x16xf32>
    %522 = tpu.matmul %129, %521, %cst_223 {dimension_numbers = #tpu.dot_dimension_numbers<[1], [0], [0], [1], [0, 0, 1, 1], [], []>} : vector<16x72xf32>, vector<72x16xf32>, vector<16x16xf32> -> vector<16x16xf32>
    %c0_224 = arith.constant 0 : index
    %c0_225 = arith.constant 0 : index
    %523 = vector.load %arg22[%c0_224, %c0_225] : memref<16x144xf32, #tpu.memory_space<vmem>>, vector<16x144xf32>
    %524 = arith.negf %522 : vector<16x16xf32>
    %525 = math.exp %524 : vector<16x16xf32>
    %cst_226 = arith.constant 1.000000e+00 : f32
    %526 = vector.broadcast %cst_226 : f32 to vector<16x16xf32>
    %527 = arith.addf %526, %525 : vector<16x16xf32>
    %528 = arith.divf %526, %527 : vector<16x16xf32>
    %529 = arith.mulf %522, %528 : vector<16x16xf32>
    %cst_227 = arith.constant -2.200000e+00 : f32
    %530 = vector.broadcast %cst_227 : f32 to vector<16x16xf32>
    %531 = arith.cmpf oge, %522, %530 : vector<16x16xf32>
    %cst_228 = arith.constant -1.800000e+00 : f32
    %532 = vector.broadcast %cst_228 : f32 to vector<16x16xf32>
    %533 = arith.cmpf olt, %522, %532 : vector<16x16xf32>
    %534 = arith.andi %531, %533 : vector<16x16xi1>
    %cst_229 = arith.constant 1.000000e+00 : f32
    %cst_230 = arith.constant 0.000000e+00 : f32
    %535 = vector.broadcast %cst_229 : f32 to vector<16x16xf32>
    %536 = vector.broadcast %cst_230 : f32 to vector<16x16xf32>
    %537 = arith.select %534, %535, %536 : vector<16x16xi1>, vector<16x16xf32>
    %cst_231 = arith.constant -1.800000e+00 : f32
    %538 = vector.broadcast %cst_231 : f32 to vector<16x16xf32>
    %539 = arith.cmpf oge, %522, %538 : vector<16x16xf32>
    %cst_232 = arith.constant -1.400000e+00 : f32
    %540 = vector.broadcast %cst_232 : f32 to vector<16x16xf32>
    %541 = arith.cmpf olt, %522, %540 : vector<16x16xf32>
    %542 = arith.andi %539, %541 : vector<16x16xi1>
    %cst_233 = arith.constant 1.000000e+00 : f32
    %cst_234 = arith.constant 0.000000e+00 : f32
    %543 = vector.broadcast %cst_233 : f32 to vector<16x16xf32>
    %544 = vector.broadcast %cst_234 : f32 to vector<16x16xf32>
    %545 = arith.select %542, %543, %544 : vector<16x16xi1>, vector<16x16xf32>
    %cst_235 = arith.constant -1.400000e+00 : f32
    %546 = vector.broadcast %cst_235 : f32 to vector<16x16xf32>
    %547 = arith.cmpf oge, %522, %546 : vector<16x16xf32>
    %cst_236 = arith.constant -1.000000e+00 : f32
    %548 = vector.broadcast %cst_236 : f32 to vector<16x16xf32>
    %549 = arith.cmpf olt, %522, %548 : vector<16x16xf32>
    %550 = arith.andi %547, %549 : vector<16x16xi1>
    %cst_237 = arith.constant 1.000000e+00 : f32
    %cst_238 = arith.constant 0.000000e+00 : f32
    %551 = vector.broadcast %cst_237 : f32 to vector<16x16xf32>
    %552 = vector.broadcast %cst_238 : f32 to vector<16x16xf32>
    %553 = arith.select %550, %551, %552 : vector<16x16xi1>, vector<16x16xf32>
    %cst_239 = arith.constant -1.000000e+00 : f32
    %554 = vector.broadcast %cst_239 : f32 to vector<16x16xf32>
    %555 = arith.cmpf oge, %522, %554 : vector<16x16xf32>
    %cst_240 = arith.constant -6.000000e-01 : f32
    %556 = vector.broadcast %cst_240 : f32 to vector<16x16xf32>
    %557 = arith.cmpf olt, %522, %556 : vector<16x16xf32>
    %558 = arith.andi %555, %557 : vector<16x16xi1>
    %cst_241 = arith.constant 1.000000e+00 : f32
    %cst_242 = arith.constant 0.000000e+00 : f32
    %559 = vector.broadcast %cst_241 : f32 to vector<16x16xf32>
    %560 = vector.broadcast %cst_242 : f32 to vector<16x16xf32>
    %561 = arith.select %558, %559, %560 : vector<16x16xi1>, vector<16x16xf32>
    %cst_243 = arith.constant -6.000000e-01 : f32
    %562 = vector.broadcast %cst_243 : f32 to vector<16x16xf32>
    %563 = arith.cmpf oge, %522, %562 : vector<16x16xf32>
    %cst_244 = arith.constant -2.000000e-01 : f32
    %564 = vector.broadcast %cst_244 : f32 to vector<16x16xf32>
    %565 = arith.cmpf olt, %522, %564 : vector<16x16xf32>
    %566 = arith.andi %563, %565 : vector<16x16xi1>
    %cst_245 = arith.constant 1.000000e+00 : f32
    %cst_246 = arith.constant 0.000000e+00 : f32
    %567 = vector.broadcast %cst_245 : f32 to vector<16x16xf32>
    %568 = vector.broadcast %cst_246 : f32 to vector<16x16xf32>
    %569 = arith.select %566, %567, %568 : vector<16x16xi1>, vector<16x16xf32>
    %cst_247 = arith.constant -2.000000e-01 : f32
    %570 = vector.broadcast %cst_247 : f32 to vector<16x16xf32>
    %571 = arith.cmpf oge, %522, %570 : vector<16x16xf32>
    %cst_248 = arith.constant 2.000000e-01 : f32
    %572 = vector.broadcast %cst_248 : f32 to vector<16x16xf32>
    %573 = arith.cmpf olt, %522, %572 : vector<16x16xf32>
    %574 = arith.andi %571, %573 : vector<16x16xi1>
    %cst_249 = arith.constant 1.000000e+00 : f32
    %cst_250 = arith.constant 0.000000e+00 : f32
    %575 = vector.broadcast %cst_249 : f32 to vector<16x16xf32>
    %576 = vector.broadcast %cst_250 : f32 to vector<16x16xf32>
    %577 = arith.select %574, %575, %576 : vector<16x16xi1>, vector<16x16xf32>
    %cst_251 = arith.constant 2.000000e-01 : f32
    %578 = vector.broadcast %cst_251 : f32 to vector<16x16xf32>
    %579 = arith.cmpf oge, %522, %578 : vector<16x16xf32>
    %cst_252 = arith.constant 6.000000e-01 : f32
    %580 = vector.broadcast %cst_252 : f32 to vector<16x16xf32>
    %581 = arith.cmpf olt, %522, %580 : vector<16x16xf32>
    %582 = arith.andi %579, %581 : vector<16x16xi1>
    %cst_253 = arith.constant 1.000000e+00 : f32
    %cst_254 = arith.constant 0.000000e+00 : f32
    %583 = vector.broadcast %cst_253 : f32 to vector<16x16xf32>
    %584 = vector.broadcast %cst_254 : f32 to vector<16x16xf32>
    %585 = arith.select %582, %583, %584 : vector<16x16xi1>, vector<16x16xf32>
    %cst_255 = arith.constant 6.000000e-01 : f32
    %586 = vector.broadcast %cst_255 : f32 to vector<16x16xf32>
    %587 = arith.cmpf oge, %522, %586 : vector<16x16xf32>
    %cst_256 = arith.constant 1.000000e+00 : f32
    %588 = vector.broadcast %cst_256 : f32 to vector<16x16xf32>
    %589 = arith.cmpf olt, %522, %588 : vector<16x16xf32>
    %590 = arith.andi %587, %589 : vector<16x16xi1>
    %cst_257 = arith.constant 1.000000e+00 : f32
    %cst_258 = arith.constant 0.000000e+00 : f32
    %591 = vector.broadcast %cst_257 : f32 to vector<16x16xf32>
    %592 = vector.broadcast %cst_258 : f32 to vector<16x16xf32>
    %593 = arith.select %590, %591, %592 : vector<16x16xi1>, vector<16x16xf32>
    %cst_259 = arith.constant 1.000000e+00 : f32
    %594 = vector.broadcast %cst_259 : f32 to vector<16x16xf32>
    %595 = arith.cmpf oge, %522, %594 : vector<16x16xf32>
    %cst_260 = arith.constant 1.400000e+00 : f32
    %596 = vector.broadcast %cst_260 : f32 to vector<16x16xf32>
    %597 = arith.cmpf olt, %522, %596 : vector<16x16xf32>
    %598 = arith.andi %595, %597 : vector<16x16xi1>
    %cst_261 = arith.constant 1.000000e+00 : f32
    %cst_262 = arith.constant 0.000000e+00 : f32
    %599 = vector.broadcast %cst_261 : f32 to vector<16x16xf32>
    %600 = vector.broadcast %cst_262 : f32 to vector<16x16xf32>
    %601 = arith.select %598, %599, %600 : vector<16x16xi1>, vector<16x16xf32>
    %cst_263 = arith.constant 1.400000e+00 : f32
    %602 = vector.broadcast %cst_263 : f32 to vector<16x16xf32>
    %603 = arith.cmpf oge, %522, %602 : vector<16x16xf32>
    %cst_264 = arith.constant 1.800000e+00 : f32
    %604 = vector.broadcast %cst_264 : f32 to vector<16x16xf32>
    %605 = arith.cmpf olt, %522, %604 : vector<16x16xf32>
    %606 = arith.andi %603, %605 : vector<16x16xi1>
    %cst_265 = arith.constant 1.000000e+00 : f32
    %cst_266 = arith.constant 0.000000e+00 : f32
    %607 = vector.broadcast %cst_265 : f32 to vector<16x16xf32>
    %608 = vector.broadcast %cst_266 : f32 to vector<16x16xf32>
    %609 = arith.select %606, %607, %608 : vector<16x16xi1>, vector<16x16xf32>
    %cst_267 = arith.constant 1.800000e+00 : f32
    %610 = vector.broadcast %cst_267 : f32 to vector<16x16xf32>
    %611 = arith.cmpf oge, %522, %610 : vector<16x16xf32>
    %cst_268 = arith.constant 2.200000e+00 : f32
    %612 = vector.broadcast %cst_268 : f32 to vector<16x16xf32>
    %613 = arith.cmpf olt, %522, %612 : vector<16x16xf32>
    %614 = arith.andi %611, %613 : vector<16x16xi1>
    %cst_269 = arith.constant 1.000000e+00 : f32
    %cst_270 = arith.constant 0.000000e+00 : f32
    %615 = vector.broadcast %cst_269 : f32 to vector<16x16xf32>
    %616 = vector.broadcast %cst_270 : f32 to vector<16x16xf32>
    %617 = arith.select %614, %615, %616 : vector<16x16xi1>, vector<16x16xf32>
    %cst_271 = arith.constant -2.200000e+00 : f32
    %618 = vector.broadcast %cst_271 : f32 to vector<16x16xf32>
    %619 = arith.subf %522, %618 : vector<16x16xf32>
    %cst_272 = arith.constant 4.000000e-01 : f32
    %620 = vector.broadcast %cst_272 : f32 to vector<16x16xf32>
    %621 = arith.divf %619, %620 : vector<16x16xf32>
    %622 = arith.mulf %621, %537 : vector<16x16xf32>
    %cst_273 = arith.constant -1.400000e+00 : f32
    %623 = vector.broadcast %cst_273 : f32 to vector<16x16xf32>
    %624 = arith.subf %623, %522 : vector<16x16xf32>
    %cst_274 = arith.constant 4.000000e-01 : f32
    %625 = vector.broadcast %cst_274 : f32 to vector<16x16xf32>
    %626 = arith.divf %624, %625 : vector<16x16xf32>
    %627 = arith.mulf %626, %545 : vector<16x16xf32>
    %628 = arith.addf %622, %627 : vector<16x16xf32>
    %cst_275 = arith.constant -1.800000e+00 : f32
    %629 = vector.broadcast %cst_275 : f32 to vector<16x16xf32>
    %630 = arith.subf %522, %629 : vector<16x16xf32>
    %cst_276 = arith.constant 4.000000e-01 : f32
    %631 = vector.broadcast %cst_276 : f32 to vector<16x16xf32>
    %632 = arith.divf %630, %631 : vector<16x16xf32>
    %633 = arith.mulf %632, %545 : vector<16x16xf32>
    %cst_277 = arith.constant -1.000000e+00 : f32
    %634 = vector.broadcast %cst_277 : f32 to vector<16x16xf32>
    %635 = arith.subf %634, %522 : vector<16x16xf32>
    %cst_278 = arith.constant 4.000000e-01 : f32
    %636 = vector.broadcast %cst_278 : f32 to vector<16x16xf32>
    %637 = arith.divf %635, %636 : vector<16x16xf32>
    %638 = arith.mulf %637, %553 : vector<16x16xf32>
    %639 = arith.addf %633, %638 : vector<16x16xf32>
    %cst_279 = arith.constant -1.400000e+00 : f32
    %640 = vector.broadcast %cst_279 : f32 to vector<16x16xf32>
    %641 = arith.subf %522, %640 : vector<16x16xf32>
    %cst_280 = arith.constant 4.000000e-01 : f32
    %642 = vector.broadcast %cst_280 : f32 to vector<16x16xf32>
    %643 = arith.divf %641, %642 : vector<16x16xf32>
    %644 = arith.mulf %643, %553 : vector<16x16xf32>
    %cst_281 = arith.constant -6.000000e-01 : f32
    %645 = vector.broadcast %cst_281 : f32 to vector<16x16xf32>
    %646 = arith.subf %645, %522 : vector<16x16xf32>
    %cst_282 = arith.constant 4.000000e-01 : f32
    %647 = vector.broadcast %cst_282 : f32 to vector<16x16xf32>
    %648 = arith.divf %646, %647 : vector<16x16xf32>
    %649 = arith.mulf %648, %561 : vector<16x16xf32>
    %650 = arith.addf %644, %649 : vector<16x16xf32>
    %cst_283 = arith.constant -1.000000e+00 : f32
    %651 = vector.broadcast %cst_283 : f32 to vector<16x16xf32>
    %652 = arith.subf %522, %651 : vector<16x16xf32>
    %cst_284 = arith.constant 4.000000e-01 : f32
    %653 = vector.broadcast %cst_284 : f32 to vector<16x16xf32>
    %654 = arith.divf %652, %653 : vector<16x16xf32>
    %655 = arith.mulf %654, %561 : vector<16x16xf32>
    %cst_285 = arith.constant -2.000000e-01 : f32
    %656 = vector.broadcast %cst_285 : f32 to vector<16x16xf32>
    %657 = arith.subf %656, %522 : vector<16x16xf32>
    %cst_286 = arith.constant 4.000000e-01 : f32
    %658 = vector.broadcast %cst_286 : f32 to vector<16x16xf32>
    %659 = arith.divf %657, %658 : vector<16x16xf32>
    %660 = arith.mulf %659, %569 : vector<16x16xf32>
    %661 = arith.addf %655, %660 : vector<16x16xf32>
    %cst_287 = arith.constant -6.000000e-01 : f32
    %662 = vector.broadcast %cst_287 : f32 to vector<16x16xf32>
    %663 = arith.subf %522, %662 : vector<16x16xf32>
    %cst_288 = arith.constant 4.000000e-01 : f32
    %664 = vector.broadcast %cst_288 : f32 to vector<16x16xf32>
    %665 = arith.divf %663, %664 : vector<16x16xf32>
    %666 = arith.mulf %665, %569 : vector<16x16xf32>
    %cst_289 = arith.constant 2.000000e-01 : f32
    %667 = vector.broadcast %cst_289 : f32 to vector<16x16xf32>
    %668 = arith.subf %667, %522 : vector<16x16xf32>
    %cst_290 = arith.constant 4.000000e-01 : f32
    %669 = vector.broadcast %cst_290 : f32 to vector<16x16xf32>
    %670 = arith.divf %668, %669 : vector<16x16xf32>
    %671 = arith.mulf %670, %577 : vector<16x16xf32>
    %672 = arith.addf %666, %671 : vector<16x16xf32>
    %cst_291 = arith.constant -2.000000e-01 : f32
    %673 = vector.broadcast %cst_291 : f32 to vector<16x16xf32>
    %674 = arith.subf %522, %673 : vector<16x16xf32>
    %cst_292 = arith.constant 4.000000e-01 : f32
    %675 = vector.broadcast %cst_292 : f32 to vector<16x16xf32>
    %676 = arith.divf %674, %675 : vector<16x16xf32>
    %677 = arith.mulf %676, %577 : vector<16x16xf32>
    %cst_293 = arith.constant 6.000000e-01 : f32
    %678 = vector.broadcast %cst_293 : f32 to vector<16x16xf32>
    %679 = arith.subf %678, %522 : vector<16x16xf32>
    %cst_294 = arith.constant 4.000000e-01 : f32
    %680 = vector.broadcast %cst_294 : f32 to vector<16x16xf32>
    %681 = arith.divf %679, %680 : vector<16x16xf32>
    %682 = arith.mulf %681, %585 : vector<16x16xf32>
    %683 = arith.addf %677, %682 : vector<16x16xf32>
    %cst_295 = arith.constant 2.000000e-01 : f32
    %684 = vector.broadcast %cst_295 : f32 to vector<16x16xf32>
    %685 = arith.subf %522, %684 : vector<16x16xf32>
    %cst_296 = arith.constant 4.000000e-01 : f32
    %686 = vector.broadcast %cst_296 : f32 to vector<16x16xf32>
    %687 = arith.divf %685, %686 : vector<16x16xf32>
    %688 = arith.mulf %687, %585 : vector<16x16xf32>
    %cst_297 = arith.constant 1.000000e+00 : f32
    %689 = vector.broadcast %cst_297 : f32 to vector<16x16xf32>
    %690 = arith.subf %689, %522 : vector<16x16xf32>
    %cst_298 = arith.constant 4.000000e-01 : f32
    %691 = vector.broadcast %cst_298 : f32 to vector<16x16xf32>
    %692 = arith.divf %690, %691 : vector<16x16xf32>
    %693 = arith.mulf %692, %593 : vector<16x16xf32>
    %694 = arith.addf %688, %693 : vector<16x16xf32>
    %cst_299 = arith.constant 6.000000e-01 : f32
    %695 = vector.broadcast %cst_299 : f32 to vector<16x16xf32>
    %696 = arith.subf %522, %695 : vector<16x16xf32>
    %cst_300 = arith.constant 4.000000e-01 : f32
    %697 = vector.broadcast %cst_300 : f32 to vector<16x16xf32>
    %698 = arith.divf %696, %697 : vector<16x16xf32>
    %699 = arith.mulf %698, %593 : vector<16x16xf32>
    %cst_301 = arith.constant 1.400000e+00 : f32
    %700 = vector.broadcast %cst_301 : f32 to vector<16x16xf32>
    %701 = arith.subf %700, %522 : vector<16x16xf32>
    %cst_302 = arith.constant 4.000000e-01 : f32
    %702 = vector.broadcast %cst_302 : f32 to vector<16x16xf32>
    %703 = arith.divf %701, %702 : vector<16x16xf32>
    %704 = arith.mulf %703, %601 : vector<16x16xf32>
    %705 = arith.addf %699, %704 : vector<16x16xf32>
    %cst_303 = arith.constant 1.000000e+00 : f32
    %706 = vector.broadcast %cst_303 : f32 to vector<16x16xf32>
    %707 = arith.subf %522, %706 : vector<16x16xf32>
    %cst_304 = arith.constant 4.000000e-01 : f32
    %708 = vector.broadcast %cst_304 : f32 to vector<16x16xf32>
    %709 = arith.divf %707, %708 : vector<16x16xf32>
    %710 = arith.mulf %709, %601 : vector<16x16xf32>
    %cst_305 = arith.constant 1.800000e+00 : f32
    %711 = vector.broadcast %cst_305 : f32 to vector<16x16xf32>
    %712 = arith.subf %711, %522 : vector<16x16xf32>
    %cst_306 = arith.constant 4.000000e-01 : f32
    %713 = vector.broadcast %cst_306 : f32 to vector<16x16xf32>
    %714 = arith.divf %712, %713 : vector<16x16xf32>
    %715 = arith.mulf %714, %609 : vector<16x16xf32>
    %716 = arith.addf %710, %715 : vector<16x16xf32>
    %cst_307 = arith.constant 1.400000e+00 : f32
    %717 = vector.broadcast %cst_307 : f32 to vector<16x16xf32>
    %718 = arith.subf %522, %717 : vector<16x16xf32>
    %cst_308 = arith.constant 4.000000e-01 : f32
    %719 = vector.broadcast %cst_308 : f32 to vector<16x16xf32>
    %720 = arith.divf %718, %719 : vector<16x16xf32>
    %721 = arith.mulf %720, %609 : vector<16x16xf32>
    %cst_309 = arith.constant 2.200000e+00 : f32
    %722 = vector.broadcast %cst_309 : f32 to vector<16x16xf32>
    %723 = arith.subf %722, %522 : vector<16x16xf32>
    %cst_310 = arith.constant 4.000000e-01 : f32
    %724 = vector.broadcast %cst_310 : f32 to vector<16x16xf32>
    %725 = arith.divf %723, %724 : vector<16x16xf32>
    %726 = arith.mulf %725, %617 : vector<16x16xf32>
    %727 = arith.addf %721, %726 : vector<16x16xf32>
    %cst_311 = arith.constant -2.200000e+00 : f32
    %728 = vector.broadcast %cst_311 : f32 to vector<16x16xf32>
    %729 = arith.subf %522, %728 : vector<16x16xf32>
    %cst_312 = arith.constant 8.000000e-01 : f32
    %730 = vector.broadcast %cst_312 : f32 to vector<16x16xf32>
    %731 = arith.divf %729, %730 : vector<16x16xf32>
    %732 = arith.mulf %731, %628 : vector<16x16xf32>
    %cst_313 = arith.constant -1.000000e+00 : f32
    %733 = vector.broadcast %cst_313 : f32 to vector<16x16xf32>
    %734 = arith.subf %733, %522 : vector<16x16xf32>
    %cst_314 = arith.constant 8.000000e-01 : f32
    %735 = vector.broadcast %cst_314 : f32 to vector<16x16xf32>
    %736 = arith.divf %734, %735 : vector<16x16xf32>
    %737 = arith.mulf %736, %639 : vector<16x16xf32>
    %738 = arith.addf %732, %737 : vector<16x16xf32>
    %cst_315 = arith.constant -1.800000e+00 : f32
    %739 = vector.broadcast %cst_315 : f32 to vector<16x16xf32>
    %740 = arith.subf %522, %739 : vector<16x16xf32>
    %cst_316 = arith.constant 8.000000e-01 : f32
    %741 = vector.broadcast %cst_316 : f32 to vector<16x16xf32>
    %742 = arith.divf %740, %741 : vector<16x16xf32>
    %743 = arith.mulf %742, %639 : vector<16x16xf32>
    %cst_317 = arith.constant -6.000000e-01 : f32
    %744 = vector.broadcast %cst_317 : f32 to vector<16x16xf32>
    %745 = arith.subf %744, %522 : vector<16x16xf32>
    %cst_318 = arith.constant 8.000000e-01 : f32
    %746 = vector.broadcast %cst_318 : f32 to vector<16x16xf32>
    %747 = arith.divf %745, %746 : vector<16x16xf32>
    %748 = arith.mulf %747, %650 : vector<16x16xf32>
    %749 = arith.addf %743, %748 : vector<16x16xf32>
    %cst_319 = arith.constant -1.400000e+00 : f32
    %750 = vector.broadcast %cst_319 : f32 to vector<16x16xf32>
    %751 = arith.subf %522, %750 : vector<16x16xf32>
    %cst_320 = arith.constant 8.000000e-01 : f32
    %752 = vector.broadcast %cst_320 : f32 to vector<16x16xf32>
    %753 = arith.divf %751, %752 : vector<16x16xf32>
    %754 = arith.mulf %753, %650 : vector<16x16xf32>
    %cst_321 = arith.constant -2.000000e-01 : f32
    %755 = vector.broadcast %cst_321 : f32 to vector<16x16xf32>
    %756 = arith.subf %755, %522 : vector<16x16xf32>
    %cst_322 = arith.constant 8.000000e-01 : f32
    %757 = vector.broadcast %cst_322 : f32 to vector<16x16xf32>
    %758 = arith.divf %756, %757 : vector<16x16xf32>
    %759 = arith.mulf %758, %661 : vector<16x16xf32>
    %760 = arith.addf %754, %759 : vector<16x16xf32>
    %cst_323 = arith.constant -1.000000e+00 : f32
    %761 = vector.broadcast %cst_323 : f32 to vector<16x16xf32>
    %762 = arith.subf %522, %761 : vector<16x16xf32>
    %cst_324 = arith.constant 8.000000e-01 : f32
    %763 = vector.broadcast %cst_324 : f32 to vector<16x16xf32>
    %764 = arith.divf %762, %763 : vector<16x16xf32>
    %765 = arith.mulf %764, %661 : vector<16x16xf32>
    %cst_325 = arith.constant 2.000000e-01 : f32
    %766 = vector.broadcast %cst_325 : f32 to vector<16x16xf32>
    %767 = arith.subf %766, %522 : vector<16x16xf32>
    %cst_326 = arith.constant 8.000000e-01 : f32
    %768 = vector.broadcast %cst_326 : f32 to vector<16x16xf32>
    %769 = arith.divf %767, %768 : vector<16x16xf32>
    %770 = arith.mulf %769, %672 : vector<16x16xf32>
    %771 = arith.addf %765, %770 : vector<16x16xf32>
    %cst_327 = arith.constant -6.000000e-01 : f32
    %772 = vector.broadcast %cst_327 : f32 to vector<16x16xf32>
    %773 = arith.subf %522, %772 : vector<16x16xf32>
    %cst_328 = arith.constant 8.000000e-01 : f32
    %774 = vector.broadcast %cst_328 : f32 to vector<16x16xf32>
    %775 = arith.divf %773, %774 : vector<16x16xf32>
    %776 = arith.mulf %775, %672 : vector<16x16xf32>
    %cst_329 = arith.constant 6.000000e-01 : f32
    %777 = vector.broadcast %cst_329 : f32 to vector<16x16xf32>
    %778 = arith.subf %777, %522 : vector<16x16xf32>
    %cst_330 = arith.constant 8.000000e-01 : f32
    %779 = vector.broadcast %cst_330 : f32 to vector<16x16xf32>
    %780 = arith.divf %778, %779 : vector<16x16xf32>
    %781 = arith.mulf %780, %683 : vector<16x16xf32>
    %782 = arith.addf %776, %781 : vector<16x16xf32>
    %cst_331 = arith.constant -2.000000e-01 : f32
    %783 = vector.broadcast %cst_331 : f32 to vector<16x16xf32>
    %784 = arith.subf %522, %783 : vector<16x16xf32>
    %cst_332 = arith.constant 8.000000e-01 : f32
    %785 = vector.broadcast %cst_332 : f32 to vector<16x16xf32>
    %786 = arith.divf %784, %785 : vector<16x16xf32>
    %787 = arith.mulf %786, %683 : vector<16x16xf32>
    %cst_333 = arith.constant 1.000000e+00 : f32
    %788 = vector.broadcast %cst_333 : f32 to vector<16x16xf32>
    %789 = arith.subf %788, %522 : vector<16x16xf32>
    %cst_334 = arith.constant 8.000000e-01 : f32
    %790 = vector.broadcast %cst_334 : f32 to vector<16x16xf32>
    %791 = arith.divf %789, %790 : vector<16x16xf32>
    %792 = arith.mulf %791, %694 : vector<16x16xf32>
    %793 = arith.addf %787, %792 : vector<16x16xf32>
    %cst_335 = arith.constant 2.000000e-01 : f32
    %794 = vector.broadcast %cst_335 : f32 to vector<16x16xf32>
    %795 = arith.subf %522, %794 : vector<16x16xf32>
    %cst_336 = arith.constant 8.000000e-01 : f32
    %796 = vector.broadcast %cst_336 : f32 to vector<16x16xf32>
    %797 = arith.divf %795, %796 : vector<16x16xf32>
    %798 = arith.mulf %797, %694 : vector<16x16xf32>
    %cst_337 = arith.constant 1.400000e+00 : f32
    %799 = vector.broadcast %cst_337 : f32 to vector<16x16xf32>
    %800 = arith.subf %799, %522 : vector<16x16xf32>
    %cst_338 = arith.constant 8.000000e-01 : f32
    %801 = vector.broadcast %cst_338 : f32 to vector<16x16xf32>
    %802 = arith.divf %800, %801 : vector<16x16xf32>
    %803 = arith.mulf %802, %705 : vector<16x16xf32>
    %804 = arith.addf %798, %803 : vector<16x16xf32>
    %cst_339 = arith.constant 6.000000e-01 : f32
    %805 = vector.broadcast %cst_339 : f32 to vector<16x16xf32>
    %806 = arith.subf %522, %805 : vector<16x16xf32>
    %cst_340 = arith.constant 8.000000e-01 : f32
    %807 = vector.broadcast %cst_340 : f32 to vector<16x16xf32>
    %808 = arith.divf %806, %807 : vector<16x16xf32>
    %809 = arith.mulf %808, %705 : vector<16x16xf32>
    %cst_341 = arith.constant 1.800000e+00 : f32
    %810 = vector.broadcast %cst_341 : f32 to vector<16x16xf32>
    %811 = arith.subf %810, %522 : vector<16x16xf32>
    %cst_342 = arith.constant 8.000000e-01 : f32
    %812 = vector.broadcast %cst_342 : f32 to vector<16x16xf32>
    %813 = arith.divf %811, %812 : vector<16x16xf32>
    %814 = arith.mulf %813, %716 : vector<16x16xf32>
    %815 = arith.addf %809, %814 : vector<16x16xf32>
    %cst_343 = arith.constant 1.000000e+00 : f32
    %816 = vector.broadcast %cst_343 : f32 to vector<16x16xf32>
    %817 = arith.subf %522, %816 : vector<16x16xf32>
    %cst_344 = arith.constant 8.000000e-01 : f32
    %818 = vector.broadcast %cst_344 : f32 to vector<16x16xf32>
    %819 = arith.divf %817, %818 : vector<16x16xf32>
    %820 = arith.mulf %819, %716 : vector<16x16xf32>
    %cst_345 = arith.constant 2.200000e+00 : f32
    %821 = vector.broadcast %cst_345 : f32 to vector<16x16xf32>
    %822 = arith.subf %821, %522 : vector<16x16xf32>
    %cst_346 = arith.constant 8.000000e-01 : f32
    %823 = vector.broadcast %cst_346 : f32 to vector<16x16xf32>
    %824 = arith.divf %822, %823 : vector<16x16xf32>
    %825 = arith.mulf %824, %727 : vector<16x16xf32>
    %826 = arith.addf %820, %825 : vector<16x16xf32>
    %cst_347 = arith.constant -2.200000e+00 : f32
    %827 = vector.broadcast %cst_347 : f32 to vector<16x16xf32>
    %828 = arith.subf %522, %827 : vector<16x16xf32>
    %cst_348 = arith.constant 1.200000e+00 : f32
    %829 = vector.broadcast %cst_348 : f32 to vector<16x16xf32>
    %830 = arith.divf %828, %829 : vector<16x16xf32>
    %831 = arith.mulf %830, %738 : vector<16x16xf32>
    %cst_349 = arith.constant -6.000000e-01 : f32
    %832 = vector.broadcast %cst_349 : f32 to vector<16x16xf32>
    %833 = arith.subf %832, %522 : vector<16x16xf32>
    %cst_350 = arith.constant 1.200000e+00 : f32
    %834 = vector.broadcast %cst_350 : f32 to vector<16x16xf32>
    %835 = arith.divf %833, %834 : vector<16x16xf32>
    %836 = arith.mulf %835, %749 : vector<16x16xf32>
    %837 = arith.addf %831, %836 : vector<16x16xf32>
    %cst_351 = arith.constant -1.800000e+00 : f32
    %838 = vector.broadcast %cst_351 : f32 to vector<16x16xf32>
    %839 = arith.subf %522, %838 : vector<16x16xf32>
    %cst_352 = arith.constant 1.200000e+00 : f32
    %840 = vector.broadcast %cst_352 : f32 to vector<16x16xf32>
    %841 = arith.divf %839, %840 : vector<16x16xf32>
    %842 = arith.mulf %841, %749 : vector<16x16xf32>
    %cst_353 = arith.constant -2.000000e-01 : f32
    %843 = vector.broadcast %cst_353 : f32 to vector<16x16xf32>
    %844 = arith.subf %843, %522 : vector<16x16xf32>
    %cst_354 = arith.constant 1.200000e+00 : f32
    %845 = vector.broadcast %cst_354 : f32 to vector<16x16xf32>
    %846 = arith.divf %844, %845 : vector<16x16xf32>
    %847 = arith.mulf %846, %760 : vector<16x16xf32>
    %848 = arith.addf %842, %847 : vector<16x16xf32>
    %cst_355 = arith.constant -1.400000e+00 : f32
    %849 = vector.broadcast %cst_355 : f32 to vector<16x16xf32>
    %850 = arith.subf %522, %849 : vector<16x16xf32>
    %cst_356 = arith.constant 1.200000e+00 : f32
    %851 = vector.broadcast %cst_356 : f32 to vector<16x16xf32>
    %852 = arith.divf %850, %851 : vector<16x16xf32>
    %853 = arith.mulf %852, %760 : vector<16x16xf32>
    %cst_357 = arith.constant 2.000000e-01 : f32
    %854 = vector.broadcast %cst_357 : f32 to vector<16x16xf32>
    %855 = arith.subf %854, %522 : vector<16x16xf32>
    %cst_358 = arith.constant 1.200000e+00 : f32
    %856 = vector.broadcast %cst_358 : f32 to vector<16x16xf32>
    %857 = arith.divf %855, %856 : vector<16x16xf32>
    %858 = arith.mulf %857, %771 : vector<16x16xf32>
    %859 = arith.addf %853, %858 : vector<16x16xf32>
    %cst_359 = arith.constant -1.000000e+00 : f32
    %860 = vector.broadcast %cst_359 : f32 to vector<16x16xf32>
    %861 = arith.subf %522, %860 : vector<16x16xf32>
    %cst_360 = arith.constant 1.200000e+00 : f32
    %862 = vector.broadcast %cst_360 : f32 to vector<16x16xf32>
    %863 = arith.divf %861, %862 : vector<16x16xf32>
    %864 = arith.mulf %863, %771 : vector<16x16xf32>
    %cst_361 = arith.constant 6.000000e-01 : f32
    %865 = vector.broadcast %cst_361 : f32 to vector<16x16xf32>
    %866 = arith.subf %865, %522 : vector<16x16xf32>
    %cst_362 = arith.constant 1.200000e+00 : f32
    %867 = vector.broadcast %cst_362 : f32 to vector<16x16xf32>
    %868 = arith.divf %866, %867 : vector<16x16xf32>
    %869 = arith.mulf %868, %782 : vector<16x16xf32>
    %870 = arith.addf %864, %869 : vector<16x16xf32>
    %cst_363 = arith.constant -6.000000e-01 : f32
    %871 = vector.broadcast %cst_363 : f32 to vector<16x16xf32>
    %872 = arith.subf %522, %871 : vector<16x16xf32>
    %cst_364 = arith.constant 1.200000e+00 : f32
    %873 = vector.broadcast %cst_364 : f32 to vector<16x16xf32>
    %874 = arith.divf %872, %873 : vector<16x16xf32>
    %875 = arith.mulf %874, %782 : vector<16x16xf32>
    %cst_365 = arith.constant 1.000000e+00 : f32
    %876 = vector.broadcast %cst_365 : f32 to vector<16x16xf32>
    %877 = arith.subf %876, %522 : vector<16x16xf32>
    %cst_366 = arith.constant 1.200000e+00 : f32
    %878 = vector.broadcast %cst_366 : f32 to vector<16x16xf32>
    %879 = arith.divf %877, %878 : vector<16x16xf32>
    %880 = arith.mulf %879, %793 : vector<16x16xf32>
    %881 = arith.addf %875, %880 : vector<16x16xf32>
    %cst_367 = arith.constant -2.000000e-01 : f32
    %882 = vector.broadcast %cst_367 : f32 to vector<16x16xf32>
    %883 = arith.subf %522, %882 : vector<16x16xf32>
    %cst_368 = arith.constant 1.200000e+00 : f32
    %884 = vector.broadcast %cst_368 : f32 to vector<16x16xf32>
    %885 = arith.divf %883, %884 : vector<16x16xf32>
    %886 = arith.mulf %885, %793 : vector<16x16xf32>
    %cst_369 = arith.constant 1.400000e+00 : f32
    %887 = vector.broadcast %cst_369 : f32 to vector<16x16xf32>
    %888 = arith.subf %887, %522 : vector<16x16xf32>
    %cst_370 = arith.constant 1.200000e+00 : f32
    %889 = vector.broadcast %cst_370 : f32 to vector<16x16xf32>
    %890 = arith.divf %888, %889 : vector<16x16xf32>
    %891 = arith.mulf %890, %804 : vector<16x16xf32>
    %892 = arith.addf %886, %891 : vector<16x16xf32>
    %cst_371 = arith.constant 2.000000e-01 : f32
    %893 = vector.broadcast %cst_371 : f32 to vector<16x16xf32>
    %894 = arith.subf %522, %893 : vector<16x16xf32>
    %cst_372 = arith.constant 1.200000e+00 : f32
    %895 = vector.broadcast %cst_372 : f32 to vector<16x16xf32>
    %896 = arith.divf %894, %895 : vector<16x16xf32>
    %897 = arith.mulf %896, %804 : vector<16x16xf32>
    %cst_373 = arith.constant 1.800000e+00 : f32
    %898 = vector.broadcast %cst_373 : f32 to vector<16x16xf32>
    %899 = arith.subf %898, %522 : vector<16x16xf32>
    %cst_374 = arith.constant 1.200000e+00 : f32
    %900 = vector.broadcast %cst_374 : f32 to vector<16x16xf32>
    %901 = arith.divf %899, %900 : vector<16x16xf32>
    %902 = arith.mulf %901, %815 : vector<16x16xf32>
    %903 = arith.addf %897, %902 : vector<16x16xf32>
    %cst_375 = arith.constant 6.000000e-01 : f32
    %904 = vector.broadcast %cst_375 : f32 to vector<16x16xf32>
    %905 = arith.subf %522, %904 : vector<16x16xf32>
    %cst_376 = arith.constant 1.200000e+00 : f32
    %906 = vector.broadcast %cst_376 : f32 to vector<16x16xf32>
    %907 = arith.divf %905, %906 : vector<16x16xf32>
    %908 = arith.mulf %907, %815 : vector<16x16xf32>
    %cst_377 = arith.constant 2.200000e+00 : f32
    %909 = vector.broadcast %cst_377 : f32 to vector<16x16xf32>
    %910 = arith.subf %909, %522 : vector<16x16xf32>
    %cst_378 = arith.constant 1.200000e+00 : f32
    %911 = vector.broadcast %cst_378 : f32 to vector<16x16xf32>
    %912 = arith.divf %910, %911 : vector<16x16xf32>
    %913 = arith.mulf %912, %826 : vector<16x16xf32>
    %914 = arith.addf %908, %913 : vector<16x16xf32>
    %915 = tpu.concatenate %529, %837, %848, %859, %870, %881, %892, %903, %914 in 0 : vector<16x16xf32>, vector<16x16xf32>, vector<16x16xf32>, vector<16x16xf32>, vector<16x16xf32>, vector<16x16xf32>, vector<16x16xf32>, vector<16x16xf32>, vector<16x16xf32> -> vector<144x16xf32>
    %cst_379 = arith.constant dense<0.000000e+00> : vector<16x16xf32>
    %916 = tpu.matmul %523, %915, %cst_379 {dimension_numbers = #tpu.dot_dimension_numbers<[1], [0], [0], [1], [0, 0, 1, 1], [], []>} : vector<16x144xf32>, vector<144x16xf32>, vector<16x16xf32> -> vector<16x16xf32>
    %917 = vector.broadcast %16 : vector<1x16xf32> to vector<16x16xf32>
    %918 = arith.subf %916, %917 : vector<16x16xf32>
    %cst_380 = arith.constant 1.000000e-10 : f32
    %919 = vector.broadcast %cst_380 : f32 to vector<1x16xf32>
    %920 = arith.addf %15, %919 : vector<1x16xf32>
    %921 = vector.broadcast %920 : vector<1x16xf32> to vector<16x16xf32>
    %922 = arith.divf %918, %921 : vector<16x16xf32>
    %923 = vector.broadcast %14 : vector<1x16xf32> to vector<16x16xf32>
    %924 = arith.mulf %922, %923 : vector<16x16xf32>
    %925 = vector.broadcast %4 : vector<1x16xf32> to vector<16x16xf32>
    %926 = arith.addf %924, %925 : vector<16x16xf32>
    %c0_381 = arith.constant 0 : index
    %c0_382 = arith.constant 0 : index
    %927 = vector.load %arg23[%c0_381, %c0_382] : memref<16x16xf32, #tpu.memory_space<vmem>>, vector<16x16xf32>
    tpu.vector_store %arg23[%c0_381, %c0_382], %926 {strides = array<i32>} : memref<16x16xf32, #tpu.memory_space<vmem>>, vector<16x16xf32>,
    return
  }
  func.func @transform_0(%arg0: i32) -> (i32, i32) {
    %c0_i32 = arith.constant 0 : i32
    %c0_i32_0 = arith.constant 0 : i32
    return %c0_i32, %arg0 : i32, i32
  }
  func.func @transform_1(%arg0: i32) -> (i32, i32) {
    %c0_i32 = arith.constant 0 : i32
    %c0_i32_0 = arith.constant 0 : i32
    %c0_i32_1 = arith.constant 0 : i32
    return %c0_i32, %c0_i32_0 : i32, i32
  }
  func.func @transform_2(%arg0: i32) -> (i32, i32) {
    %c0_i32 = arith.constant 0 : i32
    %c0_i32_0 = arith.constant 0 : i32
    %c0_i32_1 = arith.constant 0 : i32
    return %c0_i32, %c0_i32_0 : i32, i32
  }
  func.func @transform_3(%arg0: i32) -> (i32, i32) {
    %c0_i32 = arith.constant 0 : i32
    %c0_i32_0 = arith.constant 0 : i32
    %c0_i32_1 = arith.constant 0 : i32
    return %c0_i32, %c0_i32_0 : i32, i32
  }
  func.func @transform_4(%arg0: i32) -> (i32, i32) {
    %c0_i32 = arith.constant 0 : i32
    %c0_i32_0 = arith.constant 0 : i32
    %c0_i32_1 = arith.constant 0 : i32
    return %c0_i32, %c0_i32_0 : i32, i32
  }
  func.func @transform_5(%arg0: i32) -> (i32, i32) {
    %c0_i32 = arith.constant 0 : i32
    %c0_i32_0 = arith.constant 0 : i32
    %c0_i32_1 = arith.constant 0 : i32
    return %c0_i32, %c0_i32_0 : i32, i32
  }
  func.func @transform_6(%arg0: i32) -> (i32, i32) {
    %c0_i32 = arith.constant 0 : i32
    %c0_i32_0 = arith.constant 0 : i32
    %c0_i32_1 = arith.constant 0 : i32
    return %c0_i32, %c0_i32_0 : i32, i32
  }
  func.func @transform_7(%arg0: i32) -> (i32, i32) {
    %c0_i32 = arith.constant 0 : i32
    %c0_i32_0 = arith.constant 0 : i32
    %c0_i32_1 = arith.constant 0 : i32
    return %c0_i32, %c0_i32_0 : i32, i32
  }
  func.func @transform_8(%arg0: i32) -> (i32, i32) {
    %c0_i32 = arith.constant 0 : i32
    %c0_i32_0 = arith.constant 0 : i32
    %c0_i32_1 = arith.constant 0 : i32
    return %c0_i32, %c0_i32_0 : i32, i32
  }
  func.func @transform_9(%arg0: i32) -> (i32, i32) {
    %c0_i32 = arith.constant 0 : i32
    %c0_i32_0 = arith.constant 0 : i32
    %c0_i32_1 = arith.constant 0 : i32
    return %c0_i32, %c0_i32_0 : i32, i32
  }
  func.func @transform_10(%arg0: i32) -> (i32, i32) {
    %c0_i32 = arith.constant 0 : i32
    %c0_i32_0 = arith.constant 0 : i32
    %c0_i32_1 = arith.constant 0 : i32
    return %c0_i32, %c0_i32_0 : i32, i32
  }
  func.func @transform_11(%arg0: i32) -> (i32, i32) {
    %c0_i32 = arith.constant 0 : i32
    %c0_i32_0 = arith.constant 0 : i32
    %c0_i32_1 = arith.constant 0 : i32
    return %c0_i32, %c0_i32_0 : i32, i32
  }
  func.func @transform_12(%arg0: i32) -> (i32, i32) {
    %c0_i32 = arith.constant 0 : i32
    %c0_i32_0 = arith.constant 0 : i32
    %c0_i32_1 = arith.constant 0 : i32
    return %c0_i32, %c0_i32_0 : i32, i32
  }
  func.func @transform_13(%arg0: i32) -> (i32, i32) {
    %c0_i32 = arith.constant 0 : i32
    %c0_i32_0 = arith.constant 0 : i32
    %c0_i32_1 = arith.constant 0 : i32
    return %c0_i32, %c0_i32_0 : i32, i32
  }
  func.func @transform_14(%arg0: i32) -> (i32, i32) {
    %c0_i32 = arith.constant 0 : i32
    %c0_i32_0 = arith.constant 0 : i32
    %c0_i32_1 = arith.constant 0 : i32
    return %c0_i32, %c0_i32_0 : i32, i32
  }
  func.func @transform_15(%arg0: i32) -> (i32, i32) {
    %c0_i32 = arith.constant 0 : i32
    %c0_i32_0 = arith.constant 0 : i32
    %c0_i32_1 = arith.constant 0 : i32
    return %c0_i32, %c0_i32_0 : i32, i32
  }
  func.func @transform_16(%arg0: i32) -> (i32, i32) {
    %c0_i32 = arith.constant 0 : i32
    %c0_i32_0 = arith.constant 0 : i32
    %c0_i32_1 = arith.constant 0 : i32
    return %c0_i32, %c0_i32_0 : i32, i32
  }
  func.func @transform_17(%arg0: i32) -> (i32, i32) {
    %c0_i32 = arith.constant 0 : i32
    %c0_i32_0 = arith.constant 0 : i32
    %c0_i32_1 = arith.constant 0 : i32
    return %c0_i32, %c0_i32_0 : i32, i32
  }
  func.func @transform_18(%arg0: i32) -> (i32, i32) {
    %c0_i32 = arith.constant 0 : i32
    %c0_i32_0 = arith.constant 0 : i32
    %c0_i32_1 = arith.constant 0 : i32
    return %c0_i32, %c0_i32_0 : i32, i32
  }
  func.func @transform_19(%arg0: i32) -> (i32, i32) {
    %c0_i32 = arith.constant 0 : i32
    %c0_i32_0 = arith.constant 0 : i32
    %c0_i32_1 = arith.constant 0 : i32
    return %c0_i32, %c0_i32_0 : i32, i32
  }
  func.func @transform_20(%arg0: i32) -> (i32, i32) {
    %c0_i32 = arith.constant 0 : i32
    %c0_i32_0 = arith.constant 0 : i32
    %c0_i32_1 = arith.constant 0 : i32
    return %c0_i32, %c0_i32_0 : i32, i32
  }
  func.func @transform_21(%arg0: i32) -> (i32, i32) {
    %c0_i32 = arith.constant 0 : i32
    %c0_i32_0 = arith.constant 0 : i32
    %c0_i32_1 = arith.constant 0 : i32
    return %c0_i32, %c0_i32_0 : i32, i32
  }
  func.func @transform_22(%arg0: i32) -> (i32, i32) {
    %c0_i32 = arith.constant 0 : i32
    %c0_i32_0 = arith.constant 0 : i32
    return %c0_i32, %arg0 : i32, i32
  }
}

</mosaic_0001>

<llo_original>
// kernel: tpu_custom_call.1
$region0: #{tpu_custom_call.1}
  #allocation0 [shape = 'u32[]', space=smem, size = 0x4, offset = 0x4, fixed_abs, tag = 'smem constant byte address 0x4 - core index']
  #allocation1 [shape = 'u32[72,128]{1,0:T(1,128)}', space=vmem, size = 0x9000, scoped, tag = 'internal scratch']
  %s0 = inlined_call_operand.vmem [shape: f32[16,16], index: 0, kind: input, shape index: {}]
  %s1 = inlined_call_operand.vmem [shape: f32[1,16], index: 1, kind: input, shape index: {}]
  %s2 = inlined_call_operand.hbm [shape: f32[1,16], index: 2, kind: input, shape index: {}]
  %s3 = inlined_call_operand.hbm [shape: s32[1,16], index: 3, kind: input, shape index: {}]
  %s4 = inlined_call_operand.vmem [shape: f32[8,48], index: 4, kind: input, shape index: {}]
  %s5 = inlined_call_operand.vmem [shape: f32[8,1], index: 5, kind: input, shape index: {}]
  %s6 = inlined_call_operand.vmem [shape: f32[8,24], index: 6, kind: input, shape index: {}]
  %s7 = inlined_call_operand.vmem [shape: f32[8,1], index: 7, kind: input, shape index: {}]
  %s8 = inlined_call_operand.vmem [shape: f32[8,16], index: 8, kind: input, shape index: {}]
  %s9 = inlined_call_operand.vmem [shape: f32[8,1], index: 9, kind: input, shape index: {}]
  %s10 = inlined_call_operand.vmem [shape: f32[8,24], index: 10, kind: input, shape index: {}]
  %s11 = inlined_call_operand.vmem [shape: f32[8,1], index: 11, kind: input, shape index: {}]
  %s12 = inlined_call_operand.vmem [shape: f32[8,24], index: 12, kind: input, shape index: {}]
  %s13 = inlined_call_operand.vmem [shape: f32[8,1], index: 13, kind: input, shape index: {}]
  %s14 = inlined_call_operand.hbm [shape: f32[8,24], index: 14, kind: input, shape index: {}]
  %s15 = inlined_call_operand.vmem [shape: f32[8,1], index: 15, kind: input, shape index: {}]
  %s16 = inlined_call_operand.hbm [shape: f32[8,24], index: 16, kind: input, shape index: {}]
  %s17 = inlined_call_operand.vmem [shape: f32[8,1], index: 17, kind: input, shape index: {}]
  %s18 = inlined_call_operand.vmem [shape: f32[8,8], index: 18, kind: input, shape index: {}]
  %s19 = inlined_call_operand.vmem [shape: f32[8,1], index: 19, kind: input, shape index: {}]
  %s20 = inlined_call_operand.vmem [shape: f32[16,72], index: 20, kind: input, shape index: {}]
  %s21 = inlined_call_operand.hbm [shape: f32[16,144], index: 21, kind: input, shape index: {}]
  %s22 = inlined_call_operand.hbm [shape: f32[16,16], index: 22, kind: output, shape index: {}]
  %s23 = sld [smem:[#allocation0]]
  $region118: #{tpu_custom_call.1} parent=0
    _
  %s25 = ssub.s32 1, %s23
  %s26 = scalar_select 0, %s25, %s23
  $region1: #{tpu_custom_call.1} parent=0
    #allocation2 [shape = 'u8[512]{0}', space=vmem, size = 0x400, scoped, tag = 'input window, operand 2, single buffered']
    #allocation3 [shape = 's32[1]{0}', space=sflag, size = 0x4, scoped, tag = 'scoped memory for tpu_custom_call.1']
    #allocation4 [shape = 's32[1]{0}', space=sflag, size = 0x4, scoped, tag = 'scoped memory for tpu_custom_call.1']
    #allocation5 [shape = 'u8[512]{0}', space=vmem, size = 0x400, scoped, tag = 'input window, operand 3, single buffered']
    #allocation6 [shape = 's32[1]{0}', space=sflag, size = 0x4, scoped, tag = 'scoped memory for tpu_custom_call.1']
    #allocation7 [shape = 'u8[4096]{0}', space=vmem, size = 0x1000, scoped, tag = 'input window, operand 14, single buffered']
    #allocation8 [shape = 'u8[4096]{0}', space=vmem, size = 0x1000, scoped, tag = 'input window, operand 16, single buffered']
    #allocation9 [shape = 's32[1]{0}', space=sflag, size = 0x4, scoped, tag = 'scoped memory for tpu_custom_call.1']
    #allocation10 [shape = 'u8[16384]{0}', space=vmem, size = 0x4000, scoped, tag = 'input window, operand 21, single buffered']
    #allocation11 [shape = 'u8[8192]{0}', space=vmem, size = 0x2000, scoped, tag = 'output window, operand 0, single buffered']
    %27 = vsyncpa [#allocation3], 0
    %28 = vsyncpa [#allocation6], 0
    %29 = vsyncpa [#allocation9], 0
    %30 = vsyncpa [#allocation4], 0
    // Predicated region
    $region2: #{tpu_custom_call.1} parent=1 // pred_check
      _
    $region3: #{tpu_custom_call.1} parent=1 // pred_check_branch
      %32 = sbr.rel (0) target = $region5
    $region4: #{tpu_custom_call.1} parent=1 // pred_region
      _
    $region5: #{tpu_custom_call.1} parent=1 // pred_fallthru
      _
    // Predicated region
    $region6: #{tpu_custom_call.1} parent=1 // pred_check
      _
    $region7: #{tpu_custom_call.1} parent=1 // pred_check_branch
      %34 = sbr.rel (0) target = $region9
    $region8: #{tpu_custom_call.1} parent=1 // pred_region
      _
    $region9: #{tpu_custom_call.1} parent=1 // pred_fallthru
      _
    // Predicated region
    $region10: #{tpu_custom_call.1} parent=1 // pred_check
      _
    $region11: #{tpu_custom_call.1} parent=1 // pred_check_branch
      %36 = sbr.rel (0) target = $region13
    $region12: #{tpu_custom_call.1} parent=1 // pred_region
      %38 = vsyncadd [#allocation3], 0
      %s40 = sshll.u32 %s2, 4
      %s41 = int_to_ptr.hbm [resolvable:$true] %s40
      %s42 = sshll.u32 [#allocation2], 4
      %s43 = int_to_ptr.vmem [resolvable:$true] %s42
      %45 = dma.hbm_to_vmem [thread:$0]  %s41, 16, %s43, [#allocation3]
    $region13: #{tpu_custom_call.1} parent=1 // pred_fallthru
      _
    // Predicated region
    $region14: #{tpu_custom_call.1} parent=1 // pred_check
      _
    $region15: #{tpu_custom_call.1} parent=1 // pred_check_branch
      %47 = sbr.rel (0) target = $region17
    $region16: #{tpu_custom_call.1} parent=1 // pred_region
      %49 = vsyncadd [#allocation6], 0
      %s51 = sshll.u32 %s3, 4
      %s52 = int_to_ptr.hbm [resolvable:$true] %s51
      %s53 = sshll.u32 [#allocation5], 4
      %s54 = int_to_ptr.vmem [resolvable:$true] %s53
      %56 = dma.hbm_to_vmem [thread:$0]  %s52, 16, %s54, [#allocation6]
    $region17: #{tpu_custom_call.1} parent=1 // pred_fallthru
      _
    // Predicated region
    $region18: #{tpu_custom_call.1} parent=1 // pred_check
      _
    $region19: #{tpu_custom_call.1} parent=1 // pred_check_branch
      %58 = sbr.rel (0) target = $region21
    $region20: #{tpu_custom_call.1} parent=1 // pred_region
      _
    $region21: #{tpu_custom_call.1} parent=1 // pred_fallthru
      _
    // Predicated region
    $region22: #{tpu_custom_call.1} parent=1 // pred_check
      _
    $region23: #{tpu_custom_call.1} parent=1 // pred_check_branch
      %60 = sbr.rel (0) target = $region25
    $region24: #{tpu_custom_call.1} parent=1 // pred_region
      _
    $region25: #{tpu_custom_call.1} parent=1 // pred_fallthru
      _
    // Predicated region
    $region26: #{tpu_custom_call.1} parent=1 // pred_check
      _
    $region27: #{tpu_custom_call.1} parent=1 // pred_check_branch
      %62 = sbr.rel (0) target = $region29
    $region28: #{tpu_custom_call.1} parent=1 // pred_region
      _
    $region29: #{tpu_custom_call.1} parent=1 // pred_fallthru
      _
    // Predicated region
    $region30: #{tpu_custom_call.1} parent=1 // pred_check
      _
    $region31: #{tpu_custom_call.1} parent=1 // pred_check_branch
      %64 = sbr.rel (0) target = $region33
    $region32: #{tpu_custom_call.1} parent=1 // pred_region
      _
    $region33: #{tpu_custom_call.1} parent=1 // pred_fallthru
      _
    // Predicated region
    $region34: #{tpu_custom_call.1} parent=1 // pred_check
      _
    $region35: #{tpu_custom_call.1} parent=1 // pred_check_branch
      %66 = sbr.rel (0) target = $region37
    $region36: #{tpu_custom_call.1} parent=1 // pred_region
      _
    $region37: #{tpu_custom_call.1} parent=1 // pred_fallthru
      _
    // Predicated region
    $region38: #{tpu_custom_call.1} parent=1 // pred_check
      _
    $region39: #{tpu_custom_call.1} parent=1 // pred_check_branch
      %68 = sbr.rel (0) target = $region41
    $region40: #{tpu_custom_call.1} parent=1 // pred_region
      _
    $region41: #{tpu_custom_call.1} parent=1 // pred_fallthru
      _
    // Predicated region
    $region42: #{tpu_custom_call.1} parent=1 // pred_check
      _
    $region43: #{tpu_custom_call.1} parent=1 // pred_check_branch
      %70 = sbr.rel (0) target = $region45
    $region44: #{tpu_custom_call.1} parent=1 // pred_region
      _
    $region45: #{tpu_custom_call.1} parent=1 // pred_fallthru
      _
    // Predicated region
    $region46: #{tpu_custom_call.1} parent=1 // pred_check
      _
    $region47: #{tpu_custom_call.1} parent=1 // pred_check_branch
      %72 = sbr.rel (0) target = $region49
    $region48: #{tpu_custom_call.1} parent=1 // pred_region
      _
    $region49: #{tpu_custom_call.1} parent=1 // pred_fallthru
      _
    // Predicated region
    $region50: #{tpu_custom_call.1} parent=1 // pred_check
      _
    $region51: #{tpu_custom_call.1} parent=1 // pred_check_branch
      %74 = sbr.rel (0) target = $region53
    $region52: #{tpu_custom_call.1} parent=1 // pred_region
      _
    $region53: #{tpu_custom_call.1} parent=1 // pred_fallthru
      _
    // Predicated region
    $region54: #{tpu_custom_call.1} parent=1 // pred_check
      _
    $region55: #{tpu_custom_call.1} parent=1 // pred_check_branch
      %76 = sbr.rel (0) target = $region57
    $region56: #{tpu_custom_call.1} parent=1 // pred_region
      _
    $region57: #{tpu_custom_call.1} parent=1 // pred_fallthru
      _
    // Predicated region
    $region58: #{tpu_custom_call.1} parent=1 // pred_check
      _
    $region59: #{tpu_custom_call.1} parent=1 // pred_check_branch
      %78 = sbr.rel (0) target = $region61
    $region60: #{tpu_custom_call.1} parent=1 // pred_region
      %80 = vsyncadd [#allocation6], 0
      %s82 = sshll.u32 %s14, 4
      %s83 = int_to_ptr.hbm [resolvable:$true] %s82
      %s84 = sshll.u32 [#allocation7], 4
      %s85 = int_to_ptr.vmem [resolvable:$true] %s84
      %87 = dma.hbm_to_vmem [thread:$0]  %s83, 128, %s85, [#allocation6]
    $region61: #{tpu_custom_call.1} parent=1 // pred_fallthru
      _
    // Predicated region
    $region62: #{tpu_custom_call.1} parent=1 // pred_check
      _
    $region63: #{tpu_custom_call.1} parent=1 // pred_check_branch
      %89 = sbr.rel (0) target = $region65
    $region64: #{tpu_custom_call.1} parent=1 // pred_region
      _
    $region65: #{tpu_custom_call.1} parent=1 // pred_fallthru
      _
    // Predicated region
    $region66: #{tpu_custom_call.1} parent=1 // pred_check
      _
    $region67: #{tpu_custom_call.1} parent=1 // pred_check_branch
      %91 = sbr.rel (0) target = $region69
    $region68: #{tpu_custom_call.1} parent=1 // pred_region
      %93 = vsyncadd [#allocation9], 0
      %s95 = sshll.u32 %s16, 4
      %s96 = int_to_ptr.hbm [resolvable:$true] %s95
      %s97 = sshll.u32 [#allocation8], 4
      %s98 = int_to_ptr.vmem [resolvable:$true] %s97
      %100 = dma.hbm_to_vmem [thread:$0]  %s96, 128, %s98, [#allocation9]
    $region69: #{tpu_custom_call.1} parent=1 // pred_fallthru
      _
    // Predicated region
    $region70: #{tpu_custom_call.1} parent=1 // pred_check
      _
    $region71: #{tpu_custom_call.1} parent=1 // pred_check_branch
      %102 = sbr.rel (0) target = $region73
    $region72: #{tpu_custom_call.1} parent=1 // pred_region
      _
    $region73: #{tpu_custom_call.1} parent=1 // pred_fallthru
      _
    // Predicated region
    $region74: #{tpu_custom_call.1} parent=1 // pred_check
      _
    $region75: #{tpu_custom_call.1} parent=1 // pred_check_branch
      %104 = sbr.rel (0) target = $region77
    $region76: #{tpu_custom_call.1} parent=1 // pred_region
      _
    $region77: #{tpu_custom_call.1} parent=1 // pred_fallthru
      _
    // Predicated region
    $region78: #{tpu_custom_call.1} parent=1 // pred_check
      _
    $region79: #{tpu_custom_call.1} parent=1 // pred_check_branch
      %106 = sbr.rel (0) target = $region81
    $region80: #{tpu_custom_call.1} parent=1 // pred_region
      _
    $region81: #{tpu_custom_call.1} parent=1 // pred_fallthru
      _
    // Predicated region
    $region82: #{tpu_custom_call.1} parent=1 // pred_check
      _
    $region83: #{tpu_custom_call.1} parent=1 // pred_check_branch
      %108 = sbr.rel (0) target = $region85
    $region84: #{tpu_custom_call.1} parent=1 // pred_region
      _
    $region85: #{tpu_custom_call.1} parent=1 // pred_fallthru
      _
    // Predicated region
    $region86: #{tpu_custom_call.1} parent=1 // pred_check
      _
    $region87: #{tpu_custom_call.1} parent=1 // pred_check_branch
      %110 = sbr.rel (0) target = $region89
    $region88: #{tpu_custom_call.1} parent=1 // pred_region
      %112 = vsyncadd [#allocation9], 0
      %s113 = sshll.u32 %s21, 4
      %s114 = int_to_ptr.hbm [resolvable:$true] %s113
      %s115 = sshll.u32 [#allocation10], 4
      %s116 = int_to_ptr.vmem [resolvable:$true] %s115
      %121 = dma.hbm_to_vmem [thread:$0]  %s114, 512, %s116, [#allocation9], 256, 256, 16
    $region89: #{tpu_custom_call.1} parent=1 // pred_fallthru
      _
    // Predicated region
    $region90: #{tpu_custom_call.1} parent=1 // pred_check
      _
    $region91: #{tpu_custom_call.1} parent=1 // pred_check_branch
      %123 = sbr.rel (0) target = $region93
    $region92: #{tpu_custom_call.1} parent=1 // pred_region
      %125 = dma.done [#allocation3], 16
    $region93: #{tpu_custom_call.1} parent=1 // pred_fallthru
      _
    // Predicated region
    $region94: #{tpu_custom_call.1} parent=1 // pred_check
      _
    $region95: #{tpu_custom_call.1} parent=1 // pred_check_branch
      %127 = sbr.rel (0) target = $region97
    $region96: #{tpu_custom_call.1} parent=1 // pred_region
      %129 = dma.done [#allocation6], 16
    $region97: #{tpu_custom_call.1} parent=1 // pred_fallthru
      _
    // Predicated region
    $region98: #{tpu_custom_call.1} parent=1 // pred_check
      _
    $region99: #{tpu_custom_call.1} parent=1 // pred_check_branch
      %131 = sbr.rel (0) target = $region101
    $region100: #{tpu_custom_call.1} parent=1 // pred_region
      %133 = dma.done [#allocation6], 128
    $region101: #{tpu_custom_call.1} parent=1 // pred_fallthru
      _
    // Predicated region
    $region102: #{tpu_custom_call.1} parent=1 // pred_check
      _
    $region103: #{tpu_custom_call.1} parent=1 // pred_check_branch
      %135 = sbr.rel (0) target = $region105
    $region104: #{tpu_custom_call.1} parent=1 // pred_region
      %137 = dma.done [#allocation9], 128
    $region105: #{tpu_custom_call.1} parent=1 // pred_fallthru
      _
    // Predicated region
    $region106: #{tpu_custom_call.1} parent=1 // pred_check
      _
    $region107: #{tpu_custom_call.1} parent=1 // pred_check_branch
      %139 = sbr.rel (0) target = $region109
    $region108: #{tpu_custom_call.1} parent=1 // pred_region
      %141 = dma.done [#allocation9], 512
    $region109: #{tpu_custom_call.1} parent=1 // pred_fallthru
      _
    %v142 = vld [vmem:[%s0] sm:$0xff]
    %v143 = vld [vmem:[%s0 + $0x8] sm:$0xff]
    %vm144 = vcmask 130048
    %v145 = vsel %vm144, %v142, 0.0
    %v146 = vsel %vm144, %v143, 0.0
    %v147 = vadd.f32 %v145, %v146
    %v148 = vrot.slane %v147, 4
    %v149 = vadd.f32 %v147, %v148
    %v150 = vrot.slane %v149, 2
    %v151 = vadd.f32 %v149, %v150
    %v152 = vrot.slane %v151, 1
    %v153 = vadd.f32 %v151, %v152
    %v154 = vrcp.pop 16.0
    %v155 = vmul.f32 16.0, %v154
    %v156 = vsub.f32 1.0, %v155
    %v157 = vmul.f32 %v154, %v156
    %v158 = vadd.f32 %v154, %v157
    %vm159 = vweird.f32 %v154
    %v160 = vsel %vm159, %v154, %v158
    %v161 = vmul.f32 %v153, %v160
    %v162 = vsub.f32 %v142, %v161
    %v163 = vsub.f32 %v143, %v161
    %v164 = vmul.f32 %v162, %v162
    %v165 = vmul.f32 %v163, %v163
    %v166 = vsel %vm144, %v164, 0.0
    %v167 = vsel %vm144, %v165, 0.0
    %v168 = vadd.f32 %v166, %v167
    %v169 = vrot.slane %v168, 4
    %v170 = vadd.f32 %v168, %v169
    %v171 = vrot.slane %v170, 2
    %v172 = vadd.f32 %v170, %v171
    %v173 = vrot.slane %v172, 1
    %v174 = vadd.f32 %v172, %v173
    %v175 = vmul.f32 %v174, %v160
    %v176 = vadd.f32 %v175, 1e-05
    %v177 = vrsqrt.pop %v176
    %v178 = vmul.f32 %v177, %v176
    %v179 = vmul.f32 %v178, %v177
    %v180 = vmul.f32 0.5, %v179
    %v181 = vsub.f32 1.5, %v180
    %v182 = vmul.f32 %v177, %v181
    %v183 = vmul.f32 %v176, %v182
    %vm184 = vcmp.eq.f32.partialorder %v176, inf
    %v185 = vsel %vm184, %v176, %v183
    %vm186 = vcmp.eq.f32.partialorder %v176, 0.0
    %v187 = vand.u32 %v176, 2147483648
    %v188 = vsel %vm186, %v187, %v185
    %v189 = vld [vmem:[%s1] sm:$0x1]
    %v190 = vld [vmem:[#allocation2] sm:$0x1]
    %v191 = vrcp.pop %v188
    %v192 = vmul.f32 %v188, %v191
    %v193 = vsub.f32 1.0, %v192
    %v194 = vmul.f32 %v191, %v193
    %v195 = vadd.f32 %v191, %v194
    %vm196 = vweird.f32 %v188
    %vm197 = vweird.f32 %v191
    %vm198 = vmor %vm196, %vm197
    %v199 = vsel %vm198, %v191, %v195
    %v200 = vand.u32 2147483647, %v188
    %vm201 = vcmp.eq.f32.partialorder %v200, 8.507059e+37
    %v202 = vand.u32 %v188, 2147483648
    %v203 = vor.u32 1.1754944e-38, %v202
    %v204 = vsel %vm201, %v203, %v199
    %v205 = vmul.f32 %v162, %v204
    %v206 = vmul.f32 %v163, %v204
    %v208 = vperm.slane %v189, 0
    %v210 = vmul.f32 %v205, %v208
    %v211 = vmul.f32 %v206, %v208
    %v213 = vperm.slane %v190, 0
    %v215 = vadd.f32 %v210, %v213
    %v216 = vadd.f32 %v211, %v213
    %v217 = vld [vmem:[#allocation5] sm:$0x1]
    %vm218 = vcmask 1047680
    %219 = vrot.lane.b32.xlu0 %v215, 16
    %v220 = vpop.permute.xlu0 %219
    %v221 = vsel %vm218, %v220, %v215
    %222 = vrot.lane.b32.xlu0 %v216, 16
    %v223 = vpop.permute.xlu0 %222
    %v224 = vsel %vm218, %v223, %v216
    %225 = vrot.lane.b32.xlu0 %v221, 16
    %v226 = vpop.permute.xlu0 %225
    %227 = vrot.lane.b32.xlu0 %v224, 16
    %v228 = vpop.permute.xlu0 %227
    %v229 = vsel %vm218, %v226, %v215
    %v230 = vsel %vm218, %v228, %v216
    %vm231 = vcmp.ge.s32.totalorder %v217, 2
    %v232 = vsel %vm231, 1, 0
    %v233 = vcvt.s32.f32 %v232
    %v235 = vperm.slane %v233, 0
    %236 = vrot.lane.b32.xlu0 %v235, 14
    %v237 = vpop.permute.xlu0 %236
    %v239 = vmul.f32 %v229, %v237
    %v240 = vmul.f32 %v230, %v237
    %vm241 = vcmp.ge.s32.totalorder %v217, 1
    %v242 = vsel %vm241, 1, 0
    %v243 = vcvt.s32.f32 %v242
    %v245 = vperm.slane %v243, 0
    %246 = vrot.lane.b32.xlu0 %v245, 15
    %v247 = vpop.permute.xlu0 %246
    %v249 = vmul.f32 %v229, %v247
    %v250 = vmul.f32 %v230, %v247
    %253 = vrot.lane.b32.xlu0 %v249, 127
    %v254 = vpop.permute.xlu0 %253
    %255 = vrot.lane.b32.xlu0 %v250, 127
    %v256 = vpop.permute.xlu0 %255
    %259 = vrot.lane.b32.xlu0 %v215, 14
    %v260 = vpop.permute.xlu0 %259
    %261 = vrot.lane.b32.xlu0 %v216, 14
    %v262 = vpop.permute.xlu0 %261
    %v263 = vld [vmem:[%s4] sm:$0xff]
    %v264 = vld [vmem:[%s5] sm:$0xff]
    %266 = vset.pattern.permute.xlu0 0
    %267 = vperm.xlu0 %266, %v264
    %v268 = vpop.permute.xlu0 %267
    %272 = vrot.lane.b32.xlu0 %v239, 114
    %v273 = vpop.permute.xlu0 %272
    %274 = vrot.lane.b32.xlu0 %v240, 114
    %v275 = vpop.permute.xlu0 %274
    %276 = vrot.lane.b32.xlu0 %v254, 114
    %v277 = vpop.permute.xlu0 %276
    %278 = vrot.lane.b32.xlu0 %v256, 114
    %v279 = vpop.permute.xlu0 %278
    %280 = vrot.lane.b32.xlu0 %v260, 114
    %v281 = vpop.permute.xlu0 %280
    %282 = vrot.lane.b32.xlu0 %v262, 114
    %v283 = vpop.permute.xlu0 %282
    %vm290 = vcmask 392192
    %v292 = vsel %vm290, %v263, 0
    %294 = vmatpush.msra.mxu0 0.0
    %295 = vmatpush.msra.mxu0 0.0
    %296 = vmatpush.msra.mxu0 0.0
    %297 = vmatpush.msra.mxu0 0.0
    %298 = vmatpush.msra.mxu0 0.0
    %299 = vmatpush.msra.mxu0 0.0
    %300 = vmatpush.msra.mxu0 0.0
    %301 = vmatpush.msra.mxu0 0.0
    %302 = vmatpush.msra.mxu0 0.0
    %303 = vmatpush.msra.mxu0 0.0
    %304 = vmatpush.msra.mxu0 %v283
    %305 = vmatpush.msra.mxu0 %v281
    %306 = vmatpush.msra.mxu0 %v279
    %307 = vmatpush.msra.mxu0 %v277
    %308 = vmatpush.msra.mxu0 %v275
    %309 = vmatpush.msra.mxu0 %v273
    %310 = vmatmul.f32.gmra.mxu0 %v292
    %v311 = vpop.f32.mrf.mxu0
    %v312 = vadd.f32 %v268, %v311
    %313 = vdwg.mxu0
    %v314 = vmax.f32 %v312, 0.0
    %315 = vrot.lane.b32.xlu0 %v314, 16
    %v316 = vpop.permute.xlu0 %315
    %v317 = vsel %vm218, %v316, %v314
    %318 = vrot.lane.b32.xlu0 %v317, 16
    %v319 = vpop.permute.xlu0 %318
    %v320 = vsel %vm218, %v319, %v314
    %v321 = vmul.f32 %v320, %v237
    %v322 = vmul.f32 %v320, %v247
    %324 = vrot.lane.b32.xlu0 %v322, 127
    %v325 = vpop.permute.xlu0 %324
    %327 = vrot.lane.b32.xlu0 %v314, 14
    %v328 = vpop.permute.xlu0 %327
    %v329 = vld [vmem:[%s6] sm:$0xff]
    %v330 = vld [vmem:[%s7] sm:$0xff]
    %332 = vset.pattern.permute.xlu0 0
    %333 = vperm.xlu0 %332, %v330
    %v334 = vpop.permute.xlu0 %333
    %337 = vrot.lane.b32.xlu0 %v321, 114
    %v338 = vpop.permute.xlu0 %337
    %339 = vrot.lane.b32.xlu0 %v325, 114
    %v340 = vpop.permute.xlu0 %339
    %341 = vrot.lane.b32.xlu0 %v328, 114
    %v342 = vpop.permute.xlu0 %341
    %vm346 = vcmask 195584
    %v348 = vsel %vm346, %v329, 0
    %350 = vmatpush.msra.mxu0 0.0
    %351 = vmatpush.msra.mxu0 0.0
    %352 = vmatpush.msra.mxu0 0.0
    %353 = vmatpush.msra.mxu0 0.0
    %354 = vmatpush.msra.mxu0 0.0
    %355 = vmatpush.msra.mxu0 0.0
    %356 = vmatpush.msra.mxu0 0.0
    %357 = vmatpush.msra.mxu0 0.0
    %358 = vmatpush.msra.mxu0 0.0
    %359 = vmatpush.msra.mxu0 0.0
    %360 = vmatpush.msra.mxu0 0.0
    %361 = vmatpush.msra.mxu0 0.0
    %362 = vmatpush.msra.mxu0 0.0
    %363 = vmatpush.msra.mxu0 %v342
    %364 = vmatpush.msra.mxu0 %v340
    %365 = vmatpush.msra.mxu0 %v338
    %366 = vmatmul.f32.gmra.mxu0 %v348
    %v367 = vpop.f32.mrf.mxu0
    %v368 = vadd.f32 %v334, %v367
    %369 = vdwg.mxu0
    %v370 = vmax.f32 %v368, 0.0
    %v371 = vld [vmem:[%s8] sm:$0xff]
    %v372 = vld [vmem:[%s9] sm:$0xff]
    %374 = vset.pattern.permute.xlu0 0
    %375 = vperm.xlu0 %374, %v372
    %v376 = vpop.permute.xlu0 %375
    %v379 = vsel %vm144, %v371, 0
    %381 = vmatpush.msra.mxu0 0.0
    %382 = vmatpush.msra.mxu0 0.0
    %383 = vmatpush.msra.mxu0 0.0
    %384 = vmatpush.msra.mxu0 0.0
    %385 = vmatpush.msra.mxu0 0.0
    %386 = vmatpush.msra.mxu0 0.0
    %387 = vmatpush.msra.mxu0 0.0
    %388 = vmatpush.msra.mxu0 0.0
    %389 = vmatpush.msra.mxu0 0.0
    %390 = vmatpush.msra.mxu0 0.0
    %391 = vmatpush.msra.mxu0 0.0
    %392 = vmatpush.msra.mxu0 0.0
    %393 = vmatpush.msra.mxu0 0.0
    %394 = vmatpush.msra.mxu0 0.0
    %395 = vmatpush.msra.mxu0 %v216
    %396 = vmatpush.msra.mxu0 %v215
    %397 = vmatmul.f32.gmra.mxu0 %v379
    %v398 = vpop.f32.mrf.mxu0
    %v399 = vadd.f32 %v376, %v398
    %400 = vdwg.mxu0
    %v401 = vadd.f32 %v370, %v399
    %402 = vrot.lane.b32.xlu0 %v401, 16
    %v403 = vpop.permute.xlu0 %402
    %v404 = vsel %vm218, %v403, %v401
    %405 = vrot.lane.b32.xlu0 %v404, 16
    %v406 = vpop.permute.xlu0 %405
    %v407 = vsel %vm218, %v406, %v401
    %vm408 = vcmp.ge.s32.totalorder %v217, 4
    %v409 = vsel %vm408, 1, 0
    %v410 = vcvt.s32.f32 %v409
    %v412 = vperm.slane %v410, 0
    %413 = vrot.lane.b32.xlu0 %v412, 12
    %v414 = vpop.permute.xlu0 %413
    %v416 = vmul.f32 %v407, %v414
    %v417 = vmul.f32 %v407, %v237
    %419 = vrot.lane.b32.xlu0 %v417, 126
    %v420 = vpop.permute.xlu0 %419
    %422 = vrot.lane.b32.xlu0 %v401, 12
    %v423 = vpop.permute.xlu0 %422
    %v424 = vld [vmem:[%s10] sm:$0xff]
    %v425 = vld [vmem:[%s11] sm:$0xff]
    %427 = vset.pattern.permute.xlu0 0
    %428 = vperm.xlu0 %427, %v425
    %v429 = vpop.permute.xlu0 %428
    %432 = vrot.lane.b32.xlu0 %v416, 116
    %v433 = vpop.permute.xlu0 %432
    %434 = vrot.lane.b32.xlu0 %v420, 116
    %v435 = vpop.permute.xlu0 %434
    %436 = vrot.lane.b32.xlu0 %v423, 116
    %v437 = vpop.permute.xlu0 %436
    %v442 = vsel %vm346, %v424, 0
    %444 = vmatpush.msra.mxu0 0.0
    %445 = vmatpush.msra.mxu0 0.0
    %446 = vmatpush.msra.mxu0 0.0
    %447 = vmatpush.msra.mxu0 0.0
    %448 = vmatpush.msra.mxu0 0.0
    %449 = vmatpush.msra.mxu0 0.0
    %450 = vmatpush.msra.mxu0 0.0
    %451 = vmatpush.msra.mxu0 0.0
    %452 = vmatpush.msra.mxu0 0.0
    %453 = vmatpush.msra.mxu0 0.0
    %454 = vmatpush.msra.mxu0 0.0
    %455 = vmatpush.msra.mxu0 0.0
    %456 = vmatpush.msra.mxu0 0.0
    %457 = vmatpush.msra.mxu0 %v437
    %458 = vmatpush.msra.mxu0 %v435
    %459 = vmatpush.msra.mxu0 %v433
    %460 = vmatmul.f32.gmra.mxu0 %v442
    %v461 = vpop.f32.mrf.mxu0
    %v462 = vadd.f32 %v429, %v461
    %463 = vdwg.mxu0
    %v464 = vmax.f32 %v462, 0.0
    %465 = vrot.lane.b32.xlu0 %v464, 16
    %v466 = vpop.permute.xlu0 %465
    %v467 = vsel %vm218, %v466, %v464
    %468 = vrot.lane.b32.xlu0 %v467, 16
    %v469 = vpop.permute.xlu0 %468
    %v470 = vsel %vm218, %v469, %v464
    %v471 = vmul.f32 %v470, %v414
    %v472 = vmul.f32 %v470, %v237
    %474 = vrot.lane.b32.xlu0 %v472, 126
    %v475 = vpop.permute.xlu0 %474
    %477 = vrot.lane.b32.xlu0 %v464, 12
    %v478 = vpop.permute.xlu0 %477
    %v479 = vld [vmem:[%s12] sm:$0xff]
    %v480 = vld [vmem:[%s13] sm:$0xff]
    %482 = vset.pattern.permute.xlu0 0
    %483 = vperm.xlu0 %482, %v480
    %v484 = vpop.permute.xlu0 %483
    %487 = vrot.lane.b32.xlu0 %v471, 116
    %v488 = vpop.permute.xlu0 %487
    %489 = vrot.lane.b32.xlu0 %v475, 116
    %v490 = vpop.permute.xlu0 %489
    %491 = vrot.lane.b32.xlu0 %v478, 116
    %v492 = vpop.permute.xlu0 %491
    %v497 = vsel %vm346, %v479, 0
    %499 = vmatpush.msra.mxu0 0.0
    %500 = vmatpush.msra.mxu0 0.0
    %501 = vmatpush.msra.mxu0 0.0
    %502 = vmatpush.msra.mxu0 0.0
    %503 = vmatpush.msra.mxu0 0.0
    %504 = vmatpush.msra.mxu0 0.0
    %505 = vmatpush.msra.mxu0 0.0
    %506 = vmatpush.msra.mxu0 0.0
    %507 = vmatpush.msra.mxu0 0.0
    %508 = vmatpush.msra.mxu0 0.0
    %509 = vmatpush.msra.mxu0 0.0
    %510 = vmatpush.msra.mxu0 0.0
    %511 = vmatpush.msra.mxu0 0.0
    %512 = vmatpush.msra.mxu0 %v492
    %513 = vmatpush.msra.mxu0 %v490
    %514 = vmatpush.msra.mxu0 %v488
    %515 = vmatmul.f32.gmra.mxu0 %v497
    %v516 = vpop.f32.mrf.mxu0
    %v517 = vadd.f32 %v484, %v516
    %518 = vdwg.mxu0
    %v519 = vmax.f32 %v517, 0.0
    %v520 = vadd.f32 %v519, %v401
    %521 = vrot.lane.b32.xlu0 %v520, 16
    %v522 = vpop.permute.xlu0 %521
    %v523 = vsel %vm218, %v522, %v520
    %524 = vrot.lane.b32.xlu0 %v523, 16
    %v525 = vpop.permute.xlu0 %524
    %v526 = vsel %vm218, %v525, %v520
    %v527 = vmul.f32 %v526, %v414
    %529 = vrot.lane.b32.xlu0 %v527, 116
    %v530 = vpop.permute.xlu0 %529
    %v532 = vld [vmem:[#allocation7] sm:$0xff]
    %v533 = vld [vmem:[%s15] sm:$0xff]
    %535 = vset.pattern.permute.xlu0 0
    %536 = vperm.xlu0 %535, %v533
    %v537 = vpop.permute.xlu0 %536
    %v540 = vsel %vm346, %v532, 0
    %542 = vmatpush.msra.mxu0 0.0
    %543 = vmatpush.msra.mxu0 0.0
    %544 = vmatpush.msra.mxu0 0.0
    %545 = vmatpush.msra.mxu0 0.0
    %546 = vmatpush.msra.mxu0 0.0
    %547 = vmatpush.msra.mxu0 0.0
    %548 = vmatpush.msra.mxu0 0.0
    %549 = vmatpush.msra.mxu0 0.0
    %550 = vmatpush.msra.mxu0 0.0
    %551 = vmatpush.msra.mxu0 0.0
    %552 = vmatpush.msra.mxu0 0.0
    %553 = vmatpush.msra.mxu0 0.0
    %554 = vmatpush.msra.mxu0 0.0
    %555 = vmatpush.msra.mxu0 %v520
    %556 = vmatpush.msra.mxu0 %v530
    %557 = vmatpush.msra.mxu0 0.0
    %558 = vmatmul.f32.gmra.mxu0 %v540
    %v559 = vpop.f32.mrf.mxu0
    %v560 = vadd.f32 %v537, %v559
    %561 = vdwg.mxu0
    %v562 = vmax.f32 %v560, 0.0
    %563 = vrot.lane.b32.xlu0 %v562, 16
    %v564 = vpop.permute.xlu0 %563
    %v565 = vsel %vm218, %v564, %v562
    %566 = vrot.lane.b32.xlu0 %v565, 16
    %v567 = vpop.permute.xlu0 %566
    %v568 = vsel %vm218, %v567, %v562
    %v569 = vmul.f32 %v568, %v414
    %571 = vrot.lane.b32.xlu0 %v569, 116
    %v572 = vpop.permute.xlu0 %571
    %v574 = vld [vmem:[#allocation8] sm:$0xff]
    %v575 = vld [vmem:[%s17] sm:$0xff]
    %577 = vset.pattern.permute.xlu0 0
    %578 = vperm.xlu0 %577, %v575
    %v579 = vpop.permute.xlu0 %578
    %v582 = vsel %vm346, %v574, 0
    %584 = vmatpush.msra.mxu0 0.0
    %585 = vmatpush.msra.mxu0 0.0
    %586 = vmatpush.msra.mxu0 0.0
    %587 = vmatpush.msra.mxu0 0.0
    %588 = vmatpush.msra.mxu0 0.0
    %589 = vmatpush.msra.mxu0 0.0
    %590 = vmatpush.msra.mxu0 0.0
    %591 = vmatpush.msra.mxu0 0.0
    %592 = vmatpush.msra.mxu0 0.0
    %593 = vmatpush.msra.mxu0 0.0
    %594 = vmatpush.msra.mxu0 0.0
    %595 = vmatpush.msra.mxu0 0.0
    %596 = vmatpush.msra.mxu0 0.0
    %597 = vmatpush.msra.mxu0 %v562
    %598 = vmatpush.msra.mxu0 %v572
    %599 = vmatpush.msra.mxu0 0.0
    %600 = vmatmul.f32.gmra.mxu0 %v582
    %v601 = vpop.f32.mrf.mxu0
    %v602 = vadd.f32 %v579, %v601
    %603 = vdwg.mxu0
    %v604 = vld [vmem:[%s18] sm:$0xff]
    %v605 = vld [vmem:[%s19] sm:$0xff]
    %607 = vset.pattern.permute.xlu0 0
    %608 = vperm.xlu0 %607, %v605
    %v609 = vpop.permute.xlu0 %608
    %vm611 = vcmask 64512
    %v613 = vsel %vm611, %v604, 0
    %615 = vmatpush.msra.mxu0 0.0
    %616 = vmatpush.msra.mxu0 0.0
    %617 = vmatpush.msra.mxu0 0.0
    %618 = vmatpush.msra.mxu0 0.0
    %619 = vmatpush.msra.mxu0 0.0
    %620 = vmatpush.msra.mxu0 0.0
    %621 = vmatpush.msra.mxu0 0.0
    %622 = vmatpush.msra.mxu0 0.0
    %623 = vmatpush.msra.mxu0 0.0
    %624 = vmatpush.msra.mxu0 0.0
    %625 = vmatpush.msra.mxu0 0.0
    %626 = vmatpush.msra.mxu0 0.0
    %627 = vmatpush.msra.mxu0 0.0
    %628 = vmatpush.msra.mxu0 0.0
    %629 = vmatpush.msra.mxu0 0.0
    %630 = vmatpush.msra.mxu0 %v520
    %631 = vmatmul.f32.gmra.mxu0 %v613
    %v632 = vpop.f32.mrf.mxu0
    %v633 = vadd.f32 %v609, %v632
    %634 = vdwg.mxu0
    %v635 = vadd.f32 %v602, %v633
    %v636 = vld [vmem:[%s20] sm:$0xff]
    %v637 = vld [vmem:[%s20 + $0x8] sm:$0xff]
    %v638 = vxor.u32 %v635, 2147483648
    %v639 = vmul.f32 %v638, 1.442695
    %v640 = vpow.pop %v639
    %v641 = vadd.f32 %v640, 1.0
    %v642 = vrcp.pop %v641
    %v643 = vmul.f32 %v641, %v642
    %v644 = vsub.f32 1.0, %v643
    %v645 = vmul.f32 %v642, %v644
    %v646 = vadd.f32 %v642, %v645
    %vm647 = vweird.f32 %v641
    %vm648 = vweird.f32 %v642
    %vm649 = vmor %vm647, %vm648
    %v650 = vsel %vm649, %v642, %v646
    %v651 = vand.u32 2147483647, %v641
    %vm652 = vcmp.eq.f32.partialorder %v651, 8.507059e+37
    %v653 = vand.u32 %v641, 2147483648
    %v654 = vor.u32 1.1754944e-38, %v653
    %v655 = vsel %vm652, %v654, %v650
    %v656 = vmul.f32 1.0, %v655
    %v657 = vmul.f32 %v635, %v656
    %vm658 = vcmp.ge.f32.partialorder %v635, -2.2
    %vm659 = vcmp.lt.f32.partialorder %v635, -1.8
    %vm660 = vmand %vm658, %vm659
    %v661 = vsel %vm660, 1.0, 0.0
    %vm662 = vcmp.ge.f32.partialorder %v635, -1.8
    %vm663 = vcmp.lt.f32.partialorder %v635, -1.4
    %vm664 = vmand %vm662, %vm663
    %v665 = vsel %vm664, 1.0, 0.0
    %vm666 = vcmp.ge.f32.partialorder %v635, -1.4
    %vm667 = vcmp.lt.f32.partialorder %v635, -1.0
    %vm668 = vmand %vm666, %vm667
    %v669 = vsel %vm668, 1.0, 0.0
    %vm670 = vcmp.ge.f32.partialorder %v635, -1.0
    %vm671 = vcmp.lt.f32.partialorder %v635, -0.6
    %vm672 = vmand %vm670, %vm671
    %v673 = vsel %vm672, 1.0, 0.0
    %vm674 = vcmp.ge.f32.partialorder %v635, -0.6
    %vm675 = vcmp.lt.f32.partialorder %v635, -0.2
    %vm676 = vmand %vm674, %vm675
    %v677 = vsel %vm676, 1.0, 0.0
    %vm678 = vcmp.ge.f32.partialorder %v635, -0.2
    %vm679 = vcmp.lt.f32.partialorder %v635, 0.2
    %vm680 = vmand %vm678, %vm679
    %v681 = vsel %vm680, 1.0, 0.0
    %vm682 = vcmp.ge.f32.partialorder %v635, 0.2
    %vm683 = vcmp.lt.f32.partialorder %v635, 0.6
    %vm684 = vmand %vm682, %vm683
    %v685 = vsel %vm684, 1.0, 0.0
    %vm686 = vcmp.ge.f32.partialorder %v635, 0.6
    %vm687 = vcmp.lt.f32.partialorder %v635, 1.0
    %vm688 = vmand %vm686, %vm687
    %v689 = vsel %vm688, 1.0, 0.0
    %vm690 = vcmp.ge.f32.partialorder %v635, 1.0
    %vm691 = vcmp.lt.f32.partialorder %v635, 1.4
    %vm692 = vmand %vm690, %vm691
    %v693 = vsel %vm692, 1.0, 0.0
    %vm694 = vcmp.ge.f32.partialorder %v635, 1.4
    %vm695 = vcmp.lt.f32.partialorder %v635, 1.8
    %vm696 = vmand %vm694, %vm695
    %v697 = vsel %vm696, 1.0, 0.0
    %vm698 = vcmp.ge.f32.partialorder %v635, 1.8
    %vm699 = vcmp.lt.f32.partialorder %v635, 2.2
    %vm700 = vmand %vm698, %vm699
    %v701 = vsel %vm700, 1.0, 0.0
    %v702 = vsub.f32 %v635, -2.2
    %v703 = vrcp.pop 0.4
    %v704 = vmul.f32 0.4, %v703
    %v705 = vsub.f32 1.0, %v704
    %v706 = vmul.f32 %v703, %v705
    %v707 = vadd.f32 %v703, %v706
    %vm708 = vweird.f32 %v703
    %v709 = vsel %vm708, %v703, %v707
    %v710 = vmul.f32 %v702, %v709
    %v711 = vmul.f32 %v710, %v661
    %v712 = vsub.f32 -1.4, %v635
    %v713 = vmul.f32 %v712, %v709
    %v714 = vmul.f32 %v713, %v665
    %v715 = vadd.f32 %v711, %v714
    %v716 = vsub.f32 %v635, -1.8
    %v717 = vmul.f32 %v716, %v709
    %v718 = vmul.f32 %v717, %v665
    %v719 = vsub.f32 -1.0, %v635
    %v720 = vmul.f32 %v719, %v709
    %v721 = vmul.f32 %v720, %v669
    %v722 = vadd.f32 %v718, %v721
    %v723 = vsub.f32 %v635, -1.4
    %v724 = vmul.f32 %v723, %v709
    %v725 = vmul.f32 %v724, %v669
    %v726 = vsub.f32 -0.6, %v635
    %v727 = vmul.f32 %v726, %v709
    %v728 = vmul.f32 %v727, %v673
    %v729 = vadd.f32 %v725, %v728
    %v730 = vsub.f32 %v635, -1.0
    %v731 = vmul.f32 %v730, %v709
    %v732 = vmul.f32 %v731, %v673
    %v733 = vsub.f32 -0.2, %v635
    %v734 = vmul.f32 %v733, %v709
    %v735 = vmul.f32 %v734, %v677
    %v736 = vadd.f32 %v732, %v735
    %v737 = vsub.f32 %v635, -0.6
    %v738 = vmul.f32 %v737, %v709
    %v739 = vmul.f32 %v738, %v677
    %v740 = vsub.f32 0.2, %v635
    %v741 = vmul.f32 %v740, %v709
    %v742 = vmul.f32 %v741, %v681
    %v743 = vadd.f32 %v739, %v742
    %v744 = vsub.f32 %v635, -0.2
    %v745 = vmul.f32 %v744, %v709
    %v746 = vmul.f32 %v745, %v681
    %v747 = vsub.f32 0.6, %v635
    %v748 = vmul.f32 %v747, %v709
    %v749 = vmul.f32 %v748, %v685
    %v750 = vadd.f32 %v746, %v749
    %v751 = vsub.f32 %v635, 0.2
    %v752 = vmul.f32 %v751, %v709
    %v753 = vmul.f32 %v752, %v685
    %v754 = vsub.f32 1.0, %v635
    %v755 = vmul.f32 %v754, %v709
    %v756 = vmul.f32 %v755, %v689
    %v757 = vadd.f32 %v753, %v756
    %v758 = vsub.f32 %v635, 0.6
    %v759 = vmul.f32 %v758, %v709
    %v760 = vmul.f32 %v759, %v689
    %v761 = vsub.f32 1.4, %v635
    %v762 = vmul.f32 %v761, %v709
    %v763 = vmul.f32 %v762, %v693
    %v764 = vadd.f32 %v760, %v763
    %v765 = vsub.f32 %v635, 1.0
    %v766 = vmul.f32 %v765, %v709
    %v767 = vmul.f32 %v766, %v693
    %v768 = vsub.f32 1.8, %v635
    %v769 = vmul.f32 %v768, %v709
    %v770 = vmul.f32 %v769, %v697
    %v771 = vadd.f32 %v767, %v770
    %v772 = vsub.f32 %v635, 1.4
    %v773 = vmul.f32 %v772, %v709
    %v774 = vmul.f32 %v773, %v697
    %v775 = vsub.f32 2.2, %v635
    %v776 = vmul.f32 %v775, %v709
    %v777 = vmul.f32 %v776, %v701
    %v778 = vadd.f32 %v774, %v777
    %v779 = vrcp.pop 0.8
    %v780 = vmul.f32 0.8, %v779
    %v781 = vsub.f32 1.0, %v780
    %v782 = vmul.f32 %v779, %v781
    %v783 = vadd.f32 %v779, %v782
    %vm784 = vweird.f32 %v779
    %v785 = vsel %vm784, %v779, %v783
    %v786 = vmul.f32 %v702, %v785
    %v787 = vmul.f32 %v786, %v715
    %v788 = vmul.f32 %v719, %v785
    %v789 = vmul.f32 %v788, %v722
    %v790 = vadd.f32 %v787, %v789
    %v791 = vmul.f32 %v716, %v785
    %v792 = vmul.f32 %v791, %v722
    %v793 = vmul.f32 %v726, %v785
    %v794 = vmul.f32 %v793, %v729
    %v795 = vadd.f32 %v792, %v794
    %v796 = vmul.f32 %v723, %v785
    %v797 = vmul.f32 %v796, %v729
    %v798 = vmul.f32 %v733, %v785
    %v799 = vmul.f32 %v798, %v736
    %v800 = vadd.f32 %v797, %v799
    %v801 = vmul.f32 %v730, %v785
    %v802 = vmul.f32 %v801, %v736
    %v803 = vmul.f32 %v740, %v785
    %v804 = vmul.f32 %v803, %v743
    %v805 = vadd.f32 %v802, %v804
    %v806 = vmul.f32 %v737, %v785
    %v807 = vmul.f32 %v806, %v743
    %v808 = vmul.f32 %v747, %v785
    %v809 = vmul.f32 %v808, %v750
    %v810 = vadd.f32 %v807, %v809
    %v811 = vmul.f32 %v744, %v785
    %v812 = vmul.f32 %v811, %v750
    %v813 = vmul.f32 %v754, %v785
    %v814 = vmul.f32 %v813, %v757
    %v815 = vadd.f32 %v812, %v814
    %v816 = vmul.f32 %v751, %v785
    %v817 = vmul.f32 %v816, %v757
    %v818 = vmul.f32 %v761, %v785
    %v819 = vmul.f32 %v818, %v764
    %v820 = vadd.f32 %v817, %v819
    %v821 = vmul.f32 %v758, %v785
    %v822 = vmul.f32 %v821, %v764
    %v823 = vmul.f32 %v768, %v785
    %v824 = vmul.f32 %v823, %v771
    %v825 = vadd.f32 %v822, %v824
    %v826 = vmul.f32 %v765, %v785
    %v827 = vmul.f32 %v826, %v771
    %v828 = vmul.f32 %v775, %v785
    %v829 = vmul.f32 %v828, %v778
    %v830 = vadd.f32 %v827, %v829
    %v831 = vrcp.pop 1.2
    %v832 = vmul.f32 1.2, %v831
    %v833 = vsub.f32 1.0, %v832
    %v834 = vmul.f32 %v831, %v833
    %v835 = vadd.f32 %v831, %v834
    %vm836 = vweird.f32 %v831
    %v837 = vsel %vm836, %v831, %v835
    %v838 = vmul.f32 %v702, %v837
    %v839 = vmul.f32 %v838, %v790
    %v840 = vmul.f32 %v726, %v837
    %v841 = vmul.f32 %v840, %v795
    %v842 = vadd.f32 %v839, %v841
    %v843 = vmul.f32 %v716, %v837
    %v844 = vmul.f32 %v843, %v795
    %v845 = vmul.f32 %v733, %v837
    %v846 = vmul.f32 %v845, %v800
    %v847 = vadd.f32 %v844, %v846
    %v848 = vmul.f32 %v723, %v837
    %v849 = vmul.f32 %v848, %v800
    %v850 = vmul.f32 %v740, %v837
    %v851 = vmul.f32 %v850, %v805
    %v852 = vadd.f32 %v849, %v851
    %v853 = vmul.f32 %v730, %v837
    %v854 = vmul.f32 %v853, %v805
    %v855 = vmul.f32 %v747, %v837
    %v856 = vmul.f32 %v855, %v810
    %v857 = vadd.f32 %v854, %v856
    %v858 = vmul.f32 %v737, %v837
    %v859 = vmul.f32 %v858, %v810
    %v860 = vmul.f32 %v754, %v837
    %v861 = vmul.f32 %v860, %v815
    %v862 = vadd.f32 %v859, %v861
    %v863 = vmul.f32 %v744, %v837
    %v864 = vmul.f32 %v863, %v815
    %v865 = vmul.f32 %v761, %v837
    %v866 = vmul.f32 %v865, %v820
    %v867 = vadd.f32 %v864, %v866
    %v868 = vmul.f32 %v751, %v837
    %v869 = vmul.f32 %v868, %v820
    %v870 = vmul.f32 %v768, %v837
    %v871 = vmul.f32 %v870, %v825
    %v872 = vadd.f32 %v869, %v871
    %v873 = vmul.f32 %v758, %v837
    %v874 = vmul.f32 %v873, %v825
    %v875 = vmul.f32 %v775, %v837
    %v876 = vmul.f32 %v875, %v830
    %v877 = vadd.f32 %v874, %v876
    %vm878 = vcmask 588800
    %v880 = vsel %vm878, %v636, 0
    %v883 = vsel %vm878, %v637, 0
    %885 = vmatpush.msra.mxu0 0.0
    %886 = vmatpush.msra.mxu0 0.0
    %887 = vmatpush.msra.mxu0 0.0
    %888 = vmatpush.msra.mxu0 0.0
    %889 = vmatpush.msra.mxu0 0.0
    %890 = vmatpush.msra.mxu0 0.0
    %891 = vmatpush.msra.mxu0 0.0
    %892 = vmatpush.msra.mxu0 %v877
    %893 = vmatpush.msra.mxu0 %v872
    %894 = vmatpush.msra.mxu0 %v867
    %895 = vmatpush.msra.mxu0 %v862
    %896 = vmatpush.msra.mxu0 %v857
    %897 = vmatpush.msra.mxu0 %v852
    %898 = vmatpush.msra.mxu0 %v847
    %899 = vmatpush.msra.mxu0 %v842
    %900 = vmatpush.msra.mxu0 %v657
    %901 = vmatmul.f32.gmra.mxu0 %v880
    %v902 = vpop.f32.mrf.mxu0
    %v903 = vadd.f32 0.0, %v902
    %904 = vmatmul.f32.gmra.mxu0 %v883
    %v905 = vpop.f32.mrf.mxu0
    %v906 = vadd.f32 0.0, %v905
    %907 = vdwg.mxu0
    %v908 = vld [vmem:[#allocation10] sm:$0xff]
    %v909 = vld [vmem:[#allocation10 + $0x8] sm:$0xff]
    %v910 = vld [vmem:[#allocation10 + $0x10] sm:$0xff]
    %v911 = vld [vmem:[#allocation10 + $0x18] sm:$0xff]
    %v912 = vxor.u32 %v903, 2147483648
    %v913 = vxor.u32 %v906, 2147483648
    %v914 = vmul.f32 %v912, 1.442695
    %v915 = vpow.pop %v914
    %v916 = vmul.f32 %v913, 1.442695
    %v917 = vpow.pop %v916
    %v918 = vadd.f32 %v915, 1.0
    %v919 = vadd.f32 %v917, 1.0
    %v920 = vrcp.pop %v918
    %v921 = vmul.f32 %v918, %v920
    %v922 = vsub.f32 1.0, %v921
    %v923 = vmul.f32 %v920, %v922
    %v924 = vadd.f32 %v920, %v923
    %vm925 = vweird.f32 %v918
    %vm926 = vweird.f32 %v920
    %vm927 = vmor %vm925, %vm926
    %v928 = vsel %vm927, %v920, %v924
    %v929 = vand.u32 2147483647, %v918
    %vm930 = vcmp.eq.f32.partialorder %v929, 8.507059e+37
    %v931 = vand.u32 %v918, 2147483648
    %v932 = vor.u32 1.1754944e-38, %v931
    %v933 = vsel %vm930, %v932, %v928
    %v934 = vmul.f32 1.0, %v933
    %v935 = vrcp.pop %v919
    %v936 = vmul.f32 %v919, %v935
    %v937 = vsub.f32 1.0, %v936
    %v938 = vmul.f32 %v935, %v937
    %v939 = vadd.f32 %v935, %v938
    %vm940 = vweird.f32 %v919
    %vm941 = vweird.f32 %v935
    %vm942 = vmor %vm940, %vm941
    %v943 = vsel %vm942, %v935, %v939
    %v944 = vand.u32 2147483647, %v919
    %vm945 = vcmp.eq.f32.partialorder %v944, 8.507059e+37
    %v946 = vand.u32 %v919, 2147483648
    %v947 = vor.u32 1.1754944e-38, %v946
    %v948 = vsel %vm945, %v947, %v943
    %v949 = vmul.f32 1.0, %v948
    %v950 = vmul.f32 %v903, %v934
    %v951 = vmul.f32 %v906, %v949
    %vm952 = vcmp.ge.f32.partialorder %v903, -2.2
    %vm953 = vcmp.ge.f32.partialorder %v906, -2.2
    %vm954 = vcmp.lt.f32.partialorder %v903, -1.8
    %vm955 = vcmp.lt.f32.partialorder %v906, -1.8
    %vm956 = vmand %vm952, %vm954
    %vm957 = vmand %vm953, %vm955
    %v958 = vsel %vm956, 1.0, 0.0
    %v959 = vsel %vm957, 1.0, 0.0
    %vm960 = vcmp.ge.f32.partialorder %v903, -1.8
    %vm961 = vcmp.ge.f32.partialorder %v906, -1.8
    %vm962 = vcmp.lt.f32.partialorder %v903, -1.4
    %vm963 = vcmp.lt.f32.partialorder %v906, -1.4
    %vm964 = vmand %vm960, %vm962
    %vm965 = vmand %vm961, %vm963
    %v966 = vsel %vm964, 1.0, 0.0
    %v967 = vsel %vm965, 1.0, 0.0
    %vm968 = vcmp.ge.f32.partialorder %v903, -1.4
    %vm969 = vcmp.ge.f32.partialorder %v906, -1.4
    %vm970 = vcmp.lt.f32.partialorder %v903, -1.0
    %vm971 = vcmp.lt.f32.partialorder %v906, -1.0
    %vm972 = vmand %vm968, %vm970
    %vm973 = vmand %vm969, %vm971
    %v974 = vsel %vm972, 1.0, 0.0
    %v975 = vsel %vm973, 1.0, 0.0
    %vm976 = vcmp.ge.f32.partialorder %v903, -1.0
    %vm977 = vcmp.ge.f32.partialorder %v906, -1.0
    %vm978 = vcmp.lt.f32.partialorder %v903, -0.6
    %vm979 = vcmp.lt.f32.partialorder %v906, -0.6
    %vm980 = vmand %vm976, %vm978
    %vm981 = vmand %vm977, %vm979
    %v982 = vsel %vm980, 1.0, 0.0
    %v983 = vsel %vm981, 1.0, 0.0
    %vm984 = vcmp.ge.f32.partialorder %v903, -0.6
    %vm985 = vcmp.ge.f32.partialorder %v906, -0.6
    %vm986 = vcmp.lt.f32.partialorder %v903, -0.2
    %vm987 = vcmp.lt.f32.partialorder %v906, -0.2
    %vm988 = vmand %vm984, %vm986
    %vm989 = vmand %vm985, %vm987
    %v990 = vsel %vm988, 1.0, 0.0
    %v991 = vsel %vm989, 1.0, 0.0
    %vm992 = vcmp.ge.f32.partialorder %v903, -0.2
    %vm993 = vcmp.ge.f32.partialorder %v906, -0.2
    %vm994 = vcmp.lt.f32.partialorder %v903, 0.2
    %vm995 = vcmp.lt.f32.partialorder %v906, 0.2
    %vm996 = vmand %vm992, %vm994
    %vm997 = vmand %vm993, %vm995
    %v998 = vsel %vm996, 1.0, 0.0
    %v999 = vsel %vm997, 1.0, 0.0
    %vm1000 = vcmp.ge.f32.partialorder %v903, 0.2
    %vm1001 = vcmp.ge.f32.partialorder %v906, 0.2
    %vm1002 = vcmp.lt.f32.partialorder %v903, 0.6
    %vm1003 = vcmp.lt.f32.partialorder %v906, 0.6
    %vm1004 = vmand %vm1000, %vm1002
    %vm1005 = vmand %vm1001, %vm1003
    %v1006 = vsel %vm1004, 1.0, 0.0
    %v1007 = vsel %vm1005, 1.0, 0.0
    %vm1008 = vcmp.ge.f32.partialorder %v903, 0.6
    %vm1009 = vcmp.ge.f32.partialorder %v906, 0.6
    %vm1010 = vcmp.lt.f32.partialorder %v903, 1.0
    %vm1011 = vcmp.lt.f32.partialorder %v906, 1.0
    %vm1012 = vmand %vm1008, %vm1010
    %vm1013 = vmand %vm1009, %vm1011
    %v1014 = vsel %vm1012, 1.0, 0.0
    %v1015 = vsel %vm1013, 1.0, 0.0
    %vm1016 = vcmp.ge.f32.partialorder %v903, 1.0
    %vm1017 = vcmp.ge.f32.partialorder %v906, 1.0
    %vm1018 = vcmp.lt.f32.partialorder %v903, 1.4
    %vm1019 = vcmp.lt.f32.partialorder %v906, 1.4
    %vm1020 = vmand %vm1016, %vm1018
    %vm1021 = vmand %vm1017, %vm1019
    %v1022 = vsel %vm1020, 1.0, 0.0
    %v1023 = vsel %vm1021, 1.0, 0.0
    %vm1024 = vcmp.ge.f32.partialorder %v903, 1.4
    %vm1025 = vcmp.ge.f32.partialorder %v906, 1.4
    %vm1026 = vcmp.lt.f32.partialorder %v903, 1.8
    %vm1027 = vcmp.lt.f32.partialorder %v906, 1.8
    %vm1028 = vmand %vm1024, %vm1026
    %vm1029 = vmand %vm1025, %vm1027
    %v1030 = vsel %vm1028, 1.0, 0.0
    %v1031 = vsel %vm1029, 1.0, 0.0
    %vm1032 = vcmp.ge.f32.partialorder %v903, 1.8
    %vm1033 = vcmp.ge.f32.partialorder %v906, 1.8
    %vm1034 = vcmp.lt.f32.partialorder %v903, 2.2
    %vm1035 = vcmp.lt.f32.partialorder %v906, 2.2
    %vm1036 = vmand %vm1032, %vm1034
    %vm1037 = vmand %vm1033, %vm1035
    %v1038 = vsel %vm1036, 1.0, 0.0
    %v1039 = vsel %vm1037, 1.0, 0.0
    %v1040 = vsub.f32 %v903, -2.2
    %v1041 = vsub.f32 %v906, -2.2
    %v1042 = vmul.f32 %v1040, %v709
    %v1043 = vmul.f32 %v1041, %v709
    %v1044 = vmul.f32 %v1042, %v958
    %v1045 = vmul.f32 %v1043, %v959
    %v1046 = vsub.f32 -1.4, %v903
    %v1047 = vsub.f32 -1.4, %v906
    %v1048 = vmul.f32 %v1046, %v709
    %v1049 = vmul.f32 %v1047, %v709
    %v1050 = vmul.f32 %v1048, %v966
    %v1051 = vmul.f32 %v1049, %v967
    %v1052 = vadd.f32 %v1044, %v1050
    %v1053 = vadd.f32 %v1045, %v1051
    %v1054 = vsub.f32 %v903, -1.8
    %v1055 = vsub.f32 %v906, -1.8
    %v1056 = vmul.f32 %v1054, %v709
    %v1057 = vmul.f32 %v1055, %v709
    %v1058 = vmul.f32 %v1056, %v966
    %v1059 = vmul.f32 %v1057, %v967
    %v1060 = vsub.f32 -1.0, %v903
    %v1061 = vsub.f32 -1.0, %v906
    %v1062 = vmul.f32 %v1060, %v709
    %v1063 = vmul.f32 %v1061, %v709
    %v1064 = vmul.f32 %v1062, %v974
    %v1065 = vmul.f32 %v1063, %v975
    %v1066 = vadd.f32 %v1058, %v1064
    %v1067 = vadd.f32 %v1059, %v1065
    %v1068 = vsub.f32 %v903, -1.4
    %v1069 = vsub.f32 %v906, -1.4
    %v1070 = vmul.f32 %v1068, %v709
    %v1071 = vmul.f32 %v1069, %v709
    %v1072 = vmul.f32 %v1070, %v974
    %v1073 = vmul.f32 %v1071, %v975
    %v1074 = vsub.f32 -0.6, %v903
    %v1075 = vsub.f32 -0.6, %v906
    %v1076 = vmul.f32 %v1074, %v709
    %v1077 = vmul.f32 %v1075, %v709
    %v1078 = vmul.f32 %v1076, %v982
    %v1079 = vmul.f32 %v1077, %v983
    %v1080 = vadd.f32 %v1072, %v1078
    %v1081 = vadd.f32 %v1073, %v1079
    %v1082 = vsub.f32 %v903, -1.0
    %v1083 = vsub.f32 %v906, -1.0
    %v1084 = vmul.f32 %v1082, %v709
    %v1085 = vmul.f32 %v1083, %v709
    %v1086 = vmul.f32 %v1084, %v982
    %v1087 = vmul.f32 %v1085, %v983
    %v1088 = vsub.f32 -0.2, %v903
    %v1089 = vsub.f32 -0.2, %v906
    %v1090 = vmul.f32 %v1088, %v709
    %v1091 = vmul.f32 %v1089, %v709
    %v1092 = vmul.f32 %v1090, %v990
    %v1093 = vmul.f32 %v1091, %v991
    %v1094 = vadd.f32 %v1086, %v1092
    %v1095 = vadd.f32 %v1087, %v1093
    %v1096 = vsub.f32 %v903, -0.6
    %v1097 = vsub.f32 %v906, -0.6
    %v1098 = vmul.f32 %v1096, %v709
    %v1099 = vmul.f32 %v1097, %v709
    %v1100 = vmul.f32 %v1098, %v990
    %v1101 = vmul.f32 %v1099, %v991
    %v1102 = vsub.f32 0.2, %v903
    %v1103 = vsub.f32 0.2, %v906
    %v1104 = vmul.f32 %v1102, %v709
    %v1105 = vmul.f32 %v1103, %v709
    %v1106 = vmul.f32 %v1104, %v998
    %v1107 = vmul.f32 %v1105, %v999
    %v1108 = vadd.f32 %v1100, %v1106
    %v1109 = vadd.f32 %v1101, %v1107
    %v1110 = vsub.f32 %v903, -0.2
    %v1111 = vsub.f32 %v906, -0.2
    %v1112 = vmul.f32 %v1110, %v709
    %v1113 = vmul.f32 %v1111, %v709
    %v1114 = vmul.f32 %v1112, %v998
    %v1115 = vmul.f32 %v1113, %v999
    %v1116 = vsub.f32 0.6, %v903
    %v1117 = vsub.f32 0.6, %v906
    %v1118 = vmul.f32 %v1116, %v709
    %v1119 = vmul.f32 %v1117, %v709
    %v1120 = vmul.f32 %v1118, %v1006
    %v1121 = vmul.f32 %v1119, %v1007
    %v1122 = vadd.f32 %v1114, %v1120
    %v1123 = vadd.f32 %v1115, %v1121
    %v1124 = vsub.f32 %v903, 0.2
    %v1125 = vsub.f32 %v906, 0.2
    %v1126 = vmul.f32 %v1124, %v709
    %v1127 = vmul.f32 %v1125, %v709
    %v1128 = vmul.f32 %v1126, %v1006
    %v1129 = vmul.f32 %v1127, %v1007
    %v1130 = vsub.f32 1.0, %v903
    %v1131 = vsub.f32 1.0, %v906
    %v1132 = vmul.f32 %v1130, %v709
    %v1133 = vmul.f32 %v1131, %v709
    %v1134 = vmul.f32 %v1132, %v1014
    %v1135 = vmul.f32 %v1133, %v1015
    %v1136 = vadd.f32 %v1128, %v1134
    %v1137 = vadd.f32 %v1129, %v1135
    %v1138 = vsub.f32 %v903, 0.6
    %v1139 = vsub.f32 %v906, 0.6
    %v1140 = vmul.f32 %v1138, %v709
    %v1141 = vmul.f32 %v1139, %v709
    %v1142 = vmul.f32 %v1140, %v1014
    %v1143 = vmul.f32 %v1141, %v1015
    %v1144 = vsub.f32 1.4, %v903
    %v1145 = vsub.f32 1.4, %v906
    %v1146 = vmul.f32 %v1144, %v709
    %v1147 = vmul.f32 %v1145, %v709
    %v1148 = vmul.f32 %v1146, %v1022
    %v1149 = vmul.f32 %v1147, %v1023
    %v1150 = vadd.f32 %v1142, %v1148
    %v1151 = vadd.f32 %v1143, %v1149
    %v1152 = vsub.f32 %v903, 1.0
    %v1153 = vsub.f32 %v906, 1.0
    %v1154 = vmul.f32 %v1152, %v709
    %v1155 = vmul.f32 %v1153, %v709
    %v1156 = vmul.f32 %v1154, %v1022
    %v1157 = vmul.f32 %v1155, %v1023
    %v1158 = vsub.f32 1.8, %v903
    %v1159 = vsub.f32 1.8, %v906
    %v1160 = vmul.f32 %v1158, %v709
    %v1161 = vmul.f32 %v1159, %v709
    %v1162 = vmul.f32 %v1160, %v1030
    %v1163 = vmul.f32 %v1161, %v1031
    %v1164 = vadd.f32 %v1156, %v1162
    %v1165 = vadd.f32 %v1157, %v1163
    %v1166 = vsub.f32 %v903, 1.4
    %v1167 = vsub.f32 %v906, 1.4
    %v1168 = vmul.f32 %v1166, %v709
    %v1169 = vmul.f32 %v1167, %v709
    %v1170 = vmul.f32 %v1168, %v1030
    %v1171 = vmul.f32 %v1169, %v1031
    %v1172 = vsub.f32 2.2, %v903
    %v1173 = vsub.f32 2.2, %v906
    %v1174 = vmul.f32 %v1172, %v709
    %v1175 = vmul.f32 %v1173, %v709
    %v1176 = vmul.f32 %v1174, %v1038
    %v1177 = vmul.f32 %v1175, %v1039
    %v1178 = vadd.f32 %v1170, %v1176
    %v1179 = vadd.f32 %v1171, %v1177
    %v1180 = vmul.f32 %v1040, %v785
    %v1181 = vmul.f32 %v1041, %v785
    %v1182 = vmul.f32 %v1180, %v1052
    %v1183 = vmul.f32 %v1181, %v1053
    %v1184 = vmul.f32 %v1060, %v785
    %v1185 = vmul.f32 %v1061, %v785
    %v1186 = vmul.f32 %v1184, %v1066
    %v1187 = vmul.f32 %v1185, %v1067
    %v1188 = vadd.f32 %v1182, %v1186
    %v1189 = vadd.f32 %v1183, %v1187
    %v1190 = vmul.f32 %v1054, %v785
    %v1191 = vmul.f32 %v1055, %v785
    %v1192 = vmul.f32 %v1190, %v1066
    %v1193 = vmul.f32 %v1191, %v1067
    %v1194 = vmul.f32 %v1074, %v785
    %v1195 = vmul.f32 %v1075, %v785
    %v1196 = vmul.f32 %v1194, %v1080
    %v1197 = vmul.f32 %v1195, %v1081
    %v1198 = vadd.f32 %v1192, %v1196
    %v1199 = vadd.f32 %v1193, %v1197
    %v1200 = vmul.f32 %v1068, %v785
    %v1201 = vmul.f32 %v1069, %v785
    %v1202 = vmul.f32 %v1200, %v1080
    %v1203 = vmul.f32 %v1201, %v1081
    %v1204 = vmul.f32 %v1088, %v785
    %v1205 = vmul.f32 %v1089, %v785
    %v1206 = vmul.f32 %v1204, %v1094
    %v1207 = vmul.f32 %v1205, %v1095
    %v1208 = vadd.f32 %v1202, %v1206
    %v1209 = vadd.f32 %v1203, %v1207
    %v1210 = vmul.f32 %v1082, %v785
    %v1211 = vmul.f32 %v1083, %v785
    %v1212 = vmul.f32 %v1210, %v1094
    %v1213 = vmul.f32 %v1211, %v1095
    %v1214 = vmul.f32 %v1102, %v785
    %v1215 = vmul.f32 %v1103, %v785
    %v1216 = vmul.f32 %v1214, %v1108
    %v1217 = vmul.f32 %v1215, %v1109
    %v1218 = vadd.f32 %v1212, %v1216
    %v1219 = vadd.f32 %v1213, %v1217
    %v1220 = vmul.f32 %v1096, %v785
    %v1221 = vmul.f32 %v1097, %v785
    %v1222 = vmul.f32 %v1220, %v1108
    %v1223 = vmul.f32 %v1221, %v1109
    %v1224 = vmul.f32 %v1116, %v785
    %v1225 = vmul.f32 %v1117, %v785
    %v1226 = vmul.f32 %v1224, %v1122
    %v1227 = vmul.f32 %v1225, %v1123
    %v1228 = vadd.f32 %v1222, %v1226
    %v1229 = vadd.f32 %v1223, %v1227
    %v1230 = vmul.f32 %v1110, %v785
    %v1231 = vmul.f32 %v1111, %v785
    %v1232 = vmul.f32 %v1230, %v1122
    %v1233 = vmul.f32 %v1231, %v1123
    %v1234 = vmul.f32 %v1130, %v785
    %v1235 = vmul.f32 %v1131, %v785
    %v1236 = vmul.f32 %v1234, %v1136
    %v1237 = vmul.f32 %v1235, %v1137
    %v1238 = vadd.f32 %v1232, %v1236
    %v1239 = vadd.f32 %v1233, %v1237
    %v1240 = vmul.f32 %v1124, %v785
    %v1241 = vmul.f32 %v1125, %v785
    %v1242 = vmul.f32 %v1240, %v1136
    %v1243 = vmul.f32 %v1241, %v1137
    %v1244 = vmul.f32 %v1144, %v785
    %v1245 = vmul.f32 %v1145, %v785
    %v1246 = vmul.f32 %v1244, %v1150
    %v1247 = vmul.f32 %v1245, %v1151
    %v1248 = vadd.f32 %v1242, %v1246
    %v1249 = vadd.f32 %v1243, %v1247
    %v1250 = vmul.f32 %v1138, %v785
    %v1251 = vmul.f32 %v1139, %v785
    %v1252 = vmul.f32 %v1250, %v1150
    %v1253 = vmul.f32 %v1251, %v1151
    %v1254 = vmul.f32 %v1158, %v785
    %v1255 = vmul.f32 %v1159, %v785
    %v1256 = vmul.f32 %v1254, %v1164
    %v1257 = vmul.f32 %v1255, %v1165
    %v1258 = vadd.f32 %v1252, %v1256
    %v1259 = vadd.f32 %v1253, %v1257
    %v1260 = vmul.f32 %v1152, %v785
    %v1261 = vmul.f32 %v1153, %v785
    %v1262 = vmul.f32 %v1260, %v1164
    %v1263 = vmul.f32 %v1261, %v1165
    %v1264 = vmul.f32 %v1172, %v785
    %v1265 = vmul.f32 %v1173, %v785
    %v1266 = vmul.f32 %v1264, %v1178
    %v1267 = vmul.f32 %v1265, %v1179
    %v1268 = vadd.f32 %v1262, %v1266
    %v1269 = vadd.f32 %v1263, %v1267
    %v1270 = vmul.f32 %v1040, %v837
    %v1271 = vmul.f32 %v1041, %v837
    %v1272 = vmul.f32 %v1270, %v1188
    %v1273 = vmul.f32 %v1271, %v1189
    %v1274 = vmul.f32 %v1074, %v837
    %v1275 = vmul.f32 %v1075, %v837
    %v1276 = vmul.f32 %v1274, %v1198
    %v1277 = vmul.f32 %v1275, %v1199
    %v1278 = vadd.f32 %v1272, %v1276
    %v1279 = vadd.f32 %v1273, %v1277
    %v1280 = vmul.f32 %v1054, %v837
    %v1281 = vmul.f32 %v1055, %v837
    %v1282 = vmul.f32 %v1280, %v1198
    %v1283 = vmul.f32 %v1281, %v1199
    %v1284 = vmul.f32 %v1088, %v837
    %v1285 = vmul.f32 %v1089, %v837
    %v1286 = vmul.f32 %v1284, %v1208
    %v1287 = vmul.f32 %v1285, %v1209
    %v1288 = vadd.f32 %v1282, %v1286
    %v1289 = vadd.f32 %v1283, %v1287
    %v1290 = vmul.f32 %v1068, %v837
    %v1291 = vmul.f32 %v1069, %v837
    %v1292 = vmul.f32 %v1290, %v1208
    %v1293 = vmul.f32 %v1291, %v1209
    %v1294 = vmul.f32 %v1102, %v837
    %v1295 = vmul.f32 %v1103, %v837
    %v1296 = vmul.f32 %v1294, %v1218
    %v1297 = vmul.f32 %v1295, %v1219
    %v1298 = vadd.f32 %v1292, %v1296
    %v1299 = vadd.f32 %v1293, %v1297
    %v1300 = vmul.f32 %v1082, %v837
    %v1301 = vmul.f32 %v1083, %v837
    %v1302 = vmul.f32 %v1300, %v1218
    %v1303 = vmul.f32 %v1301, %v1219
    %v1304 = vmul.f32 %v1116, %v837
    %v1305 = vmul.f32 %v1117, %v837
    %v1306 = vmul.f32 %v1304, %v1228
    %v1307 = vmul.f32 %v1305, %v1229
    %v1308 = vadd.f32 %v1302, %v1306
    %v1309 = vadd.f32 %v1303, %v1307
    %v1310 = vmul.f32 %v1096, %v837
    %v1311 = vmul.f32 %v1097, %v837
    %v1312 = vmul.f32 %v1310, %v1228
    %v1313 = vmul.f32 %v1311, %v1229
    %v1314 = vmul.f32 %v1130, %v837
    %v1315 = vmul.f32 %v1131, %v837
    %v1316 = vmul.f32 %v1314, %v1238
    %v1317 = vmul.f32 %v1315, %v1239
    %v1318 = vadd.f32 %v1312, %v1316
    %v1319 = vadd.f32 %v1313, %v1317
    %v1320 = vmul.f32 %v1110, %v837
    %v1321 = vmul.f32 %v1111, %v837
    %v1322 = vmul.f32 %v1320, %v1238
    %v1323 = vmul.f32 %v1321, %v1239
    %v1324 = vmul.f32 %v1144, %v837
    %v1325 = vmul.f32 %v1145, %v837
    %v1326 = vmul.f32 %v1324, %v1248
    %v1327 = vmul.f32 %v1325, %v1249
    %v1328 = vadd.f32 %v1322, %v1326
    %v1329 = vadd.f32 %v1323, %v1327
    %v1330 = vmul.f32 %v1124, %v837
    %v1331 = vmul.f32 %v1125, %v837
    %v1332 = vmul.f32 %v1330, %v1248
    %v1333 = vmul.f32 %v1331, %v1249
    %v1334 = vmul.f32 %v1158, %v837
    %v1335 = vmul.f32 %v1159, %v837
    %v1336 = vmul.f32 %v1334, %v1258
    %v1337 = vmul.f32 %v1335, %v1259
    %v1338 = vadd.f32 %v1332, %v1336
    %v1339 = vadd.f32 %v1333, %v1337
    %v1340 = vmul.f32 %v1138, %v837
    %v1341 = vmul.f32 %v1139, %v837
    %v1342 = vmul.f32 %v1340, %v1258
    %v1343 = vmul.f32 %v1341, %v1259
    %v1344 = vmul.f32 %v1172, %v837
    %v1345 = vmul.f32 %v1173, %v837
    %v1346 = vmul.f32 %v1344, %v1268
    %v1347 = vmul.f32 %v1345, %v1269
    %v1348 = vadd.f32 %v1342, %v1346
    %v1349 = vadd.f32 %v1343, %v1347
    %v1351 = vsel %vm144, %v909, 0
    %v1354 = vsel %vm144, %v911, 0
    %1356 = vmatpush.msra.mxu0 %v1339
    %1357 = vmatpush.msra.mxu0 %v1338
    %1358 = vmatpush.msra.mxu0 %v1329
    %1359 = vmatpush.msra.mxu0 %v1328
    %1360 = vmatpush.msra.mxu0 %v1319
    %1361 = vmatpush.msra.mxu0 %v1318
    %1362 = vmatpush.msra.mxu0 %v1309
    %1363 = vmatpush.msra.mxu0 %v1308
    %1364 = vmatpush.msra.mxu0 %v1299
    %1365 = vmatpush.msra.mxu0 %v1298
    %1366 = vmatpush.msra.mxu0 %v1289
    %1367 = vmatpush.msra.mxu0 %v1288
    %1368 = vmatpush.msra.mxu0 %v1279
    %1369 = vmatpush.msra.mxu0 %v1278
    %1370 = vmatpush.msra.mxu0 %v951
    %1371 = vmatpush.msra.mxu0 %v950
    %1372 = vmatmul.f32.gmra.mxu0 %v908
    %v1373 = vpop.f32.mrf.mxu0
    %v1374 = vadd.f32 0.0, %v1373
    %1375 = vmatmul.f32.gmra.mxu0 %v910
    %v1376 = vpop.f32.mrf.mxu0
    %v1377 = vadd.f32 0.0, %v1376
    %1378 = vdwg.mxu0
    %1379 = vmatpush.msra.mxu0 0.0
    %1380 = vmatpush.msra.mxu0 0.0
    %1381 = vmatpush.msra.mxu0 0.0
    %1382 = vmatpush.msra.mxu0 0.0
    %1383 = vmatpush.msra.mxu0 0.0
    %1384 = vmatpush.msra.mxu0 0.0
    %1385 = vmatpush.msra.mxu0 0.0
    %1386 = vmatpush.msra.mxu0 0.0
    %1387 = vmatpush.msra.mxu0 0.0
    %1388 = vmatpush.msra.mxu0 0.0
    %1389 = vmatpush.msra.mxu0 0.0
    %1390 = vmatpush.msra.mxu0 0.0
    %1391 = vmatpush.msra.mxu0 0.0
    %1392 = vmatpush.msra.mxu0 0.0
    %1393 = vmatpush.msra.mxu0 %v1349
    %1394 = vmatpush.msra.mxu0 %v1348
    %1395 = vmatmul.f32.gmra.mxu0 %v1351
    %v1396 = vpop.f32.mrf.mxu0
    %v1397 = vadd.f32 %v1374, %v1396
    %1398 = vmatmul.f32.gmra.mxu0 %v1354
    %v1399 = vpop.f32.mrf.mxu0
    %v1400 = vadd.f32 %v1377, %v1399
    %1401 = vdwg.mxu0
    %v1402 = vsub.f32 %v1397, %v213
    %v1403 = vsub.f32 %v1400, %v213
    %v1404 = vadd.f32 %v189, 1e-10
    %v1406 = vperm.slane %v1404, 0
    %v1408 = vrcp.pop %v1406
    %v1409 = vmul.f32 %v1406, %v1408
    %v1410 = vsub.f32 1.0, %v1409
    %v1411 = vmul.f32 %v1408, %v1410
    %v1412 = vadd.f32 %v1408, %v1411
    %vm1413 = vweird.f32 %v1406
    %vm1414 = vweird.f32 %v1408
    %vm1415 = vmor %vm1413, %vm1414
    %v1416 = vsel %vm1415, %v1408, %v1412
    %v1417 = vand.u32 2147483647, %v1406
    %vm1418 = vcmp.eq.f32.partialorder %v1417, 8.507059e+37
    %v1419 = vand.u32 %v1406, 2147483648
    %v1420 = vor.u32 1.1754944e-38, %v1419
    %v1421 = vsel %vm1418, %v1420, %v1416
    %v1422 = vmul.f32 %v1402, %v1421
    %v1423 = vmul.f32 %v1403, %v1421
    %v1424 = vmul.f32 %v1422, %v188
    %v1425 = vmul.f32 %v1423, %v188
    %v1426 = vadd.f32 %v1424, %v161
    %v1427 = vadd.f32 %v1425, %v161
    %1428 = vst.msk [vmem:[#allocation11] sm:$0xff] %vm144, %v1426
    %1429 = vst.msk [vmem:[#allocation11 + $0x8] sm:$0xff] %vm144, %v1427
    // Predicated region
    $region110: #{tpu_custom_call.1} parent=1 // pred_check
      _
    $region111: #{tpu_custom_call.1} parent=1 // pred_check_branch
      %1431 = sbr.rel (0) target = $region113
    $region112: #{tpu_custom_call.1} parent=1 // pred_region
      %1433 = vsyncadd [#allocation4], 0
      %s1434 = sshll.u32 [#allocation11], 4
      %s1435 = int_to_ptr.vmem [resolvable:$true] %s1434
      %s1436 = sshll.u32 %s22, 4
      %s1437 = int_to_ptr.hbm [resolvable:$true] %s1436
      %1442 = dma.vmem_to_hbm [thread:$0]  %s1435, 256, %s1437, [#allocation4], 128, 128, 8
    $region113: #{tpu_custom_call.1} parent=1 // pred_fallthru
      _
    // Predicated region
    $region114: #{tpu_custom_call.1} parent=1 // pred_check
      _
    $region115: #{tpu_custom_call.1} parent=1 // pred_check_branch
      %1444 = sbr.rel (0) target = $region117
    $region116: #{tpu_custom_call.1} parent=1 // pred_region
      %1446 = dma.done [#allocation4], 256
    $region117: #{tpu_custom_call.1} parent=1 // pred_fallthru
      _
    %1447 = vsyncpa [#allocation3], 1
    %1448 = vsyncpa [#allocation6], 1
    %1449 = vsyncpa [#allocation9], 1
    %1450 = vsyncpa [#allocation4], 1

</llo_original>
